<compile_context>
chip_gen: v6e
topology: v6e:2x2x1
jax: 0.10.0
libtpu: 0.0.40
codegen_flags: <defaults>
</compile_context>

<pallas_src>
import functools

import jax
import jax.numpy as jnp
from jax.experimental import pallas as pl
from jax.experimental.pallas import tpu as pltpu


def _round_up(x, m):
    return ((x + m - 1) // m) * m


def _input_proj_kernel(x_ref, wih_ref, b_ref, zx_ref):
    """Z = X @ W_ih^T + (b_ih + b_hh): one big lane-dense MXU matmul."""
    zx_ref[...] = (
        jnp.dot(x_ref[...], wih_ref[...], preferred_element_type=jnp.float32)
        + b_ref[...]
    )


def _recurrence_kernel(zx_ref, whh_ref, out_ref, hn_ref, cn_ref, *,
                       seq_len, hidden_pad):
    """Sequential LSTM recurrence: one (Bp,Hp)@(Hp,4Hp) MXU matmul per step."""
    hp = hidden_pad
    bp = hn_ref.shape[0]

    h = jnp.zeros((bp, hp), jnp.float32)
    c = jnp.zeros((bp, hp), jnp.float32)

    # The timestep loop lives inside the kernel (fully unrolled; seq_len is a
    # small static constant so every slice below is static and lane-aligned).
    # For long sequences this would become a seq-chunk grid axis + fori_loop.
    for t in range(seq_len):
        z = zx_ref[:, t, :] + jnp.dot(
            h, whh_ref[...], preferred_element_type=jnp.float32)
        i_g = jax.nn.sigmoid(z[:, 0 * hp:1 * hp])   # 128-lane aligned slices
        f_g = jax.nn.sigmoid(z[:, 1 * hp:2 * hp])
        g_g = jnp.tanh(z[:, 2 * hp:3 * hp])
        o_g = jax.nn.sigmoid(z[:, 3 * hp:4 * hp])
        c = f_g * c + i_g * g_g
        h = o_g * jnp.tanh(c)
        out_ref[:, t, :] = h.astype(out_ref.dtype)

    hn_ref[...] = h.astype(hn_ref.dtype)
    cn_ref[...] = c.astype(cn_ref.dtype)


def lstm_encoder(x, w_ih, w_hh, b_ih, b_hh):
    """x: (batch, seq, input_dim) -> (outputs (B,S,H), (h_n, c_n))."""
    B, S, D = x.shape
    H = w_hh.shape[1]                      # w_hh: (4H, H)
    Hp = _round_up(H, 128)                 # lane-aligned gate width
    Bp = _round_up(B, 8)                   # sublane-aligned batch
    G = 4 * Hp
    f32 = jnp.float32

    # ---- one-time weight repacking (gate-padded, pre-transposed) -----------
    # wih_p[d, g*Hp + j] = w_ih[g*H + j, d]     (zeros for padded j)
    wih_p = jnp.transpose(w_ih.reshape(4, H, D), (2, 0, 1))            # (D,4,H)
    wih_p = jnp.pad(wih_p, ((0, 0), (0, 0), (0, Hp - H))).reshape(D, G)
    # whh_p[k, g*Hp + j] = w_hh[g*H + j, k]
    whh_p = jnp.transpose(w_hh.reshape(4, H, H), (2, 0, 1))            # (H,4,H)
    whh_p = jnp.pad(whh_p, ((0, Hp - H), (0, 0), (0, Hp - H))).reshape(Hp, G)
    bias_p = jnp.pad((b_ih + b_hh).reshape(4, H),
                     ((0, 0), (0, Hp - H))).reshape(1, G)

    # ---- inputs: keep batch-first; pad batch to a sublane multiple ----------
    x_p = jnp.pad(x.astype(f32), ((0, Bp - B), (0, 0), (0, 0)))        # (Bp,S,D)
    x2 = x_p.reshape(Bp * S, D)            # free row-major reshape (no transpose)

    # ---- kernel 1: hoisted input projection (all timesteps at once) --------
    zx2 = pl.pallas_call(
        _input_proj_kernel,
        out_shape=jax.ShapeDtypeStruct((Bp * S, G), f32),
        grid_spec=pltpu.PrefetchScalarGridSpec(
            num_scalar_prefetch=0,
            grid=(1,),
            in_specs=[
                pl.BlockSpec((Bp * S, D), lambda i: (0, 0)),
                pl.BlockSpec((D, G), lambda i: (0, 0)),
                pl.BlockSpec((1, G), lambda i: (0, 0)),
            ],
            out_specs=pl.BlockSpec((Bp * S, G), lambda i: (0, 0)),
        ),
        compiler_params=pltpu.CompilerParams(
            dimension_semantics=("arbitrary",)),
    )(x2, wih_p, bias_p)
    zx = zx2.reshape(Bp, S, G)             # free reshape back to batch-first

    # ---- kernel 2: the serial recurrence ------------------------------------
    kernel = functools.partial(_recurrence_kernel, seq_len=S, hidden_pad=Hp)
    out_p, hn_p, cn_p = pl.pallas_call(
        kernel,
        out_shape=(
            jax.ShapeDtypeStruct((Bp, S, Hp), f32),
            jax.ShapeDtypeStruct((Bp, Hp), f32),
            jax.ShapeDtypeStruct((Bp, Hp), f32),
        ),
        grid_spec=pltpu.PrefetchScalarGridSpec(
            num_scalar_prefetch=0,
            grid=(1,),
            in_specs=[
                pl.BlockSpec((Bp, S, G), lambda i: (0, 0, 0)),
                pl.BlockSpec((Hp, G), lambda i: (0, 0)),
            ],
            out_specs=[
                pl.BlockSpec((Bp, S, Hp), lambda i: (0, 0, 0)),
                pl.BlockSpec((Bp, Hp), lambda i: (0, 0)),
                pl.BlockSpec((Bp, Hp), lambda i: (0, 0)),
            ],
        ),
        compiler_params=pltpu.CompilerParams(
            dimension_semantics=("arbitrary",)),
    )(zx, whh_p)

    encoder_outputs = out_p[:B, :, :H]                     # (B, S, H)
    hidden = (hn_p[:B, :H][None], cn_p[:B, :H][None])      # (1, B, H) each
    return encoder_outputs, hidden


def _lstm_reference(x, w_ih, w_hh, b_ih, b_hh):
    """Pure-JAX reference matching torch.nn.LSTM (batch_first)."""
    B, S, D = x.shape
    H = w_hh.shape[1]
    bias = b_ih + b_hh

    def step(carry, x_t):
        h, c = carry
        z = x_t @ w_ih.T + h @ w_hh.T + bias
        i = jax.nn.sigmoid(z[:, 0 * H:1 * H])
        f = jax.nn.sigmoid(z[:, 1 * H:2 * H])
        g = jnp.tanh(z[:, 2 * H:3 * H])
        o = jax.nn.sigmoid(z[:, 3 * H:4 * H])
        c = f * c + i * g
        h = o * jnp.tanh(c)
        return (h, c), h

    (h_n, c_n), ys = jax.lax.scan(
        step, (jnp.zeros((B, H)), jnp.zeros((B, H))),
        jnp.transpose(x, (1, 0, 2)))
    return jnp.transpose(ys, (1, 0, 2)), (h_n[None], c_n[None])


if __name__ == "__main__":
    # Small shapes consistent with Encoder(input_dim=4, hidden_dim=32).
    B, S, D, H = 2, 8, 4, 32

    key = jax.random.PRNGKey(0)
    k_x, k_wih, k_whh, k_bih, k_bhh = jax.random.split(key, 5)

    bound = 1.0 / jnp.sqrt(jnp.float32(H))  # PyTorch LSTM init: U(-1/sqrt(H), 1/sqrt(H))
    x = jax.random.normal(k_x, (B, S, D), dtype=jnp.float32)
    w_ih = jax.random.uniform(k_wih, (4 * H, D), jnp.float32, -bound, bound)
    w_hh = jax.random.uniform(k_whh, (4 * H, H), jnp.float32, -bound, bound)
    b_ih = jax.random.uniform(k_bih, (4 * H,), jnp.float32, -bound, bound)
    b_hh = jax.random.uniform(k_bhh, (4 * H,), jnp.float32, -bound, bound)

    outs, (h_n, c_n) = jax.jit(lstm_encoder)(x, w_ih, w_hh, b_ih, b_hh)
    jax.block_until_ready((outs, h_n, c_n))

    ref_outs, (ref_h, ref_c) = _lstm_reference(x, w_ih, w_hh, b_ih, b_hh)
    assert outs.shape == (B, S, H)
    assert h_n.shape == (1, B, H) and c_n.shape == (1, B, H)
    assert jnp.allclose(outs, ref_outs, atol=1e-5)
    assert jnp.allclose(h_n, ref_h, atol=1e-5)
    assert jnp.allclose(c_n, ref_c, atol=1e-5)

    print("KERNEL_OK")
</pallas_src>

<mosaic_0001>
module attributes {stable_mosaic.version = 11 : i64} {
  func.func @_input_proj_kernel(%arg0: i32, %arg1: memref<64x4xf32, #tpu.memory_space<vmem>>, %arg2: memref<4x512xf32, #tpu.memory_space<vmem>>, %arg3: memref<1x512xf32, #tpu.memory_space<vmem>>, %arg4: memref<64x512xf32, #tpu.memory_space<vmem>>) attributes {dimension_semantics = [#tpu.dimension_semantics<arbitrary>], iteration_bounds = array<i64: 1>, scalar_prefetch = 0 : i64, scratch_operands = 0 : i64, tpu.core_type = #tpu.core_type<tc>, window_params = [{pipeline_mode = #tpu.pipeline_mode<synchronous>, transform_indices = @transform_0, window_bounds = array<i64: 64, 4>}, {pipeline_mode = #tpu.pipeline_mode<synchronous>, transform_indices = @transform_1, window_bounds = array<i64: 4, 512>}, {pipeline_mode = #tpu.pipeline_mode<synchronous>, transform_indices = @transform_2, window_bounds = array<i64: 1, 512>}, {pipeline_mode = #tpu.pipeline_mode<synchronous>, transform_indices = @transform_3, window_bounds = array<i64: 64, 512>}]} {
    %c0 = arith.constant 0 : index
    %c0_0 = arith.constant 0 : index
    %0 = vector.load %arg1[%c0, %c0_0] : memref<64x4xf32, #tpu.memory_space<vmem>>, vector<64x4xf32>
    %c0_1 = arith.constant 0 : index
    %c0_2 = arith.constant 0 : index
    %1 = vector.load %arg2[%c0_1, %c0_2] : memref<4x512xf32, #tpu.memory_space<vmem>>, vector<4x512xf32>
    %cst = arith.constant dense<0.000000e+00> : vector<64x512xf32>
    %2 = tpu.matmul %0, %1, %cst {dimension_numbers = #tpu.dot_dimension_numbers<[1], [0], [0], [1], [0, 0, 1, 1], [], []>} : vector<64x4xf32>, vector<4x512xf32>, vector<64x512xf32> -> vector<64x512xf32>
    %c0_3 = arith.constant 0 : index
    %c0_4 = arith.constant 0 : index
    %3 = vector.load %arg3[%c0_3, %c0_4] : memref<1x512xf32, #tpu.memory_space<vmem>>, vector<1x512xf32>
    %4 = vector.broadcast %3 : vector<1x512xf32> to vector<64x512xf32>
    %5 = arith.addf %2, %4 : vector<64x512xf32>
    %c0_5 = arith.constant 0 : index
    %c0_6 = arith.constant 0 : index
    %6 = vector.load %arg4[%c0_5, %c0_6] : memref<64x512xf32, #tpu.memory_space<vmem>>, vector<64x512xf32>
    tpu.vector_store %arg4[%c0_5, %c0_6], %5 {strides = array<i32>} : memref<64x512xf32, #tpu.memory_space<vmem>>, vector<64x512xf32>,
    return
  }
  func.func @transform_0(%arg0: i32) -> (i32, i32) {
    %c0_i32 = arith.constant 0 : i32
    %c0_i32_0 = arith.constant 0 : i32
    %c0_i32_1 = arith.constant 0 : i32
    return %c0_i32, %c0_i32_0 : i32, i32
  }
  func.func @transform_1(%arg0: i32) -> (i32, i32) {
    %c0_i32 = arith.constant 0 : i32
    %c0_i32_0 = arith.constant 0 : i32
    %c0_i32_1 = arith.constant 0 : i32
    return %c0_i32, %c0_i32_0 : i32, i32
  }
  func.func @transform_2(%arg0: i32) -> (i32, i32) {
    %c0_i32 = arith.constant 0 : i32
    %c0_i32_0 = arith.constant 0 : i32
    %c0_i32_1 = arith.constant 0 : i32
    return %c0_i32, %c0_i32_0 : i32, i32
  }
  func.func @transform_3(%arg0: i32) -> (i32, i32) {
    %c0_i32 = arith.constant 0 : i32
    %c0_i32_0 = arith.constant 0 : i32
    %c0_i32_1 = arith.constant 0 : i32
    return %c0_i32, %c0_i32_0 : i32, i32
  }
}

module attributes {stable_mosaic.version = 11 : i64} {
  func.func @_recurrence_kernel(%arg0: i32, %arg1: memref<8x8x512xf32, #tpu.memory_space<vmem>>, %arg2: memref<128x512xf32, #tpu.memory_space<vmem>>, %arg3: memref<8x8x128xf32, #tpu.memory_space<vmem>>, %arg4: memref<8x128xf32, #tpu.memory_space<vmem>>, %arg5: memref<8x128xf32, #tpu.memory_space<vmem>>) attributes {dimension_semantics = [#tpu.dimension_semantics<arbitrary>], iteration_bounds = array<i64: 1>, scalar_prefetch = 0 : i64, scratch_operands = 0 : i64, tpu.core_type = #tpu.core_type<tc>, window_params = [{pipeline_mode = #tpu.pipeline_mode<synchronous>, transform_indices = @transform_0, window_bounds = array<i64: 8, 8, 512>}, {pipeline_mode = #tpu.pipeline_mode<synchronous>, transform_indices = @transform_1, window_bounds = array<i64: 128, 512>}, {pipeline_mode = #tpu.pipeline_mode<synchronous>, transform_indices = @transform_2, window_bounds = array<i64: 8, 8, 128>}, {pipeline_mode = #tpu.pipeline_mode<synchronous>, transform_indices = @transform_3, window_bounds = array<i64: 8, 128>}, {pipeline_mode = #tpu.pipeline_mode<synchronous>, transform_indices = @transform_4, window_bounds = array<i64: 8, 128>}]} {
    %cst = arith.constant 0.000000e+00 : f32
    %0 = vector.broadcast %cst : f32 to vector<8x128xf32>
    %cst_0 = arith.constant 0.000000e+00 : f32
    %1 = vector.broadcast %cst_0 : f32 to vector<8x128xf32>
    %c0 = arith.constant 0 : index
    %c0_1 = arith.constant 0 : index
    %c0_2 = arith.constant 0 : index
    %2 = vector.load %arg1[%c0, %c0_1, %c0_2] : memref<8x8x512xf32, #tpu.memory_space<vmem>>, vector<8x1x512xf32>
    %3 = vector.shape_cast %2 : vector<8x1x512xf32> to vector<8x512xf32>
    %c0_3 = arith.constant 0 : index
    %c0_4 = arith.constant 0 : index
    %4 = vector.load %arg2[%c0_3, %c0_4] : memref<128x512xf32, #tpu.memory_space<vmem>>, vector<128x512xf32>
    %cst_5 = arith.constant dense<0.000000e+00> : vector<8x512xf32>
    %5 = tpu.matmul %0, %4, %cst_5 {dimension_numbers = #tpu.dot_dimension_numbers<[1], [0], [0], [1], [0, 0, 1, 1], [], []>} : vector<8x128xf32>, vector<128x512xf32>, vector<8x512xf32> -> vector<8x512xf32>
    %6 = arith.addf %3, %5 : vector<8x512xf32>
    %7 = vector.extract_strided_slice %6 {offsets = [0, 0], sizes = [8, 128], strides = [1, 1]} : vector<8x512xf32> to vector<8x128xf32>
    %8 = arith.negf %7 : vector<8x128xf32>
    %9 = math.exp %8 : vector<8x128xf32>
    %cst_6 = arith.constant 1.000000e+00 : f32
    %10 = vector.broadcast %cst_6 : f32 to vector<8x128xf32>
    %11 = arith.addf %10, %9 : vector<8x128xf32>
    %12 = arith.divf %10, %11 : vector<8x128xf32>
    %13 = vector.extract_strided_slice %6 {offsets = [0, 128], sizes = [8, 128], strides = [1, 1]} : vector<8x512xf32> to vector<8x128xf32>
    %14 = arith.negf %13 : vector<8x128xf32>
    %15 = math.exp %14 : vector<8x128xf32>
    %cst_7 = arith.constant 1.000000e+00 : f32
    %16 = vector.broadcast %cst_7 : f32 to vector<8x128xf32>
    %17 = arith.addf %16, %15 : vector<8x128xf32>
    %18 = arith.divf %16, %17 : vector<8x128xf32>
    %19 = vector.extract_strided_slice %6 {offsets = [0, 256], sizes = [8, 128], strides = [1, 1]} : vector<8x512xf32> to vector<8x128xf32>
    %20 = math.tanh %19 : vector<8x128xf32>
    %21 = vector.extract_strided_slice %6 {offsets = [0, 384], sizes = [8, 128], strides = [1, 1]} : vector<8x512xf32> to vector<8x128xf32>
    %22 = arith.negf %21 : vector<8x128xf32>
    %23 = math.exp %22 : vector<8x128xf32>
    %cst_8 = arith.constant 1.000000e+00 : f32
    %24 = vector.broadcast %cst_8 : f32 to vector<8x128xf32>
    %25 = arith.addf %24, %23 : vector<8x128xf32>
    %26 = arith.divf %24, %25 : vector<8x128xf32>
    %27 = arith.mulf %18, %1 : vector<8x128xf32>
    %28 = arith.mulf %12, %20 : vector<8x128xf32>
    %29 = arith.addf %27, %28 : vector<8x128xf32>
    %30 = math.tanh %29 : vector<8x128xf32>
    %31 = arith.mulf %26, %30 : vector<8x128xf32>
    %c0_9 = arith.constant 0 : index
    %c0_10 = arith.constant 0 : index
    %c0_11 = arith.constant 0 : index
    %32 = vector.load %arg3[%c0_9, %c0_10, %c0_11] : memref<8x8x128xf32, #tpu.memory_space<vmem>>, vector<8x1x128xf32>
    %33 = vector.shape_cast %32 : vector<8x1x128xf32> to vector<8x128xf32>
    %34 = vector.shape_cast %31 : vector<8x128xf32> to vector<8x1x128xf32>
    tpu.vector_store %arg3[%c0_9, %c0_10, %c0_11], %34 {strides = array<i32>} : memref<8x8x128xf32, #tpu.memory_space<vmem>>, vector<8x1x128xf32>,
    %c0_12 = arith.constant 0 : index
    %c1 = arith.constant 1 : index
    %c0_13 = arith.constant 0 : index
    %35 = vector.load %arg1[%c0_12, %c1, %c0_13] : memref<8x8x512xf32, #tpu.memory_space<vmem>>, vector<8x1x512xf32>
    %36 = vector.shape_cast %35 : vector<8x1x512xf32> to vector<8x512xf32>
    %c0_14 = arith.constant 0 : index
    %c0_15 = arith.constant 0 : index
    %37 = vector.load %arg2[%c0_14, %c0_15] : memref<128x512xf32, #tpu.memory_space<vmem>>, vector<128x512xf32>
    %cst_16 = arith.constant dense<0.000000e+00> : vector<8x512xf32>
    %38 = tpu.matmul %31, %37, %cst_16 {dimension_numbers = #tpu.dot_dimension_numbers<[1], [0], [0], [1], [0, 0, 1, 1], [], []>} : vector<8x128xf32>, vector<128x512xf32>, vector<8x512xf32> -> vector<8x512xf32>
    %39 = arith.addf %36, %38 : vector<8x512xf32>
    %40 = vector.extract_strided_slice %39 {offsets = [0, 0], sizes = [8, 128], strides = [1, 1]} : vector<8x512xf32> to vector<8x128xf32>
    %41 = arith.negf %40 : vector<8x128xf32>
    %42 = math.exp %41 : vector<8x128xf32>
    %cst_17 = arith.constant 1.000000e+00 : f32
    %43 = vector.broadcast %cst_17 : f32 to vector<8x128xf32>
    %44 = arith.addf %43, %42 : vector<8x128xf32>
    %45 = arith.divf %43, %44 : vector<8x128xf32>
    %46 = vector.extract_strided_slice %39 {offsets = [0, 128], sizes = [8, 128], strides = [1, 1]} : vector<8x512xf32> to vector<8x128xf32>
    %47 = arith.negf %46 : vector<8x128xf32>
    %48 = math.exp %47 : vector<8x128xf32>
    %cst_18 = arith.constant 1.000000e+00 : f32
    %49 = vector.broadcast %cst_18 : f32 to vector<8x128xf32>
    %50 = arith.addf %49, %48 : vector<8x128xf32>
    %51 = arith.divf %49, %50 : vector<8x128xf32>
    %52 = vector.extract_strided_slice %39 {offsets = [0, 256], sizes = [8, 128], strides = [1, 1]} : vector<8x512xf32> to vector<8x128xf32>
    %53 = math.tanh %52 : vector<8x128xf32>
    %54 = vector.extract_strided_slice %39 {offsets = [0, 384], sizes = [8, 128], strides = [1, 1]} : vector<8x512xf32> to vector<8x128xf32>
    %55 = arith.negf %54 : vector<8x128xf32>
    %56 = math.exp %55 : vector<8x128xf32>
    %cst_19 = arith.constant 1.000000e+00 : f32
    %57 = vector.broadcast %cst_19 : f32 to vector<8x128xf32>
    %58 = arith.addf %57, %56 : vector<8x128xf32>
    %59 = arith.divf %57, %58 : vector<8x128xf32>
    %60 = arith.mulf %51, %29 : vector<8x128xf32>
    %61 = arith.mulf %45, %53 : vector<8x128xf32>
    %62 = arith.addf %60, %61 : vector<8x128xf32>
    %63 = math.tanh %62 : vector<8x128xf32>
    %64 = arith.mulf %59, %63 : vector<8x128xf32>
    %c0_20 = arith.constant 0 : index
    %c1_21 = arith.constant 1 : index
    %c0_22 = arith.constant 0 : index
    %65 = vector.load %arg3[%c0_20, %c1_21, %c0_22] : memref<8x8x128xf32, #tpu.memory_space<vmem>>, vector<8x1x128xf32>
    %66 = vector.shape_cast %65 : vector<8x1x128xf32> to vector<8x128xf32>
    %67 = vector.shape_cast %64 : vector<8x128xf32> to vector<8x1x128xf32>
    tpu.vector_store %arg3[%c0_20, %c1_21, %c0_22], %67 {strides = array<i32>} : memref<8x8x128xf32, #tpu.memory_space<vmem>>, vector<8x1x128xf32>,
    %c0_23 = arith.constant 0 : index
    %c2 = arith.constant 2 : index
    %c0_24 = arith.constant 0 : index
    %68 = vector.load %arg1[%c0_23, %c2, %c0_24] : memref<8x8x512xf32, #tpu.memory_space<vmem>>, vector<8x1x512xf32>
    %69 = vector.shape_cast %68 : vector<8x1x512xf32> to vector<8x512xf32>
    %c0_25 = arith.constant 0 : index
    %c0_26 = arith.constant 0 : index
    %70 = vector.load %arg2[%c0_25, %c0_26] : memref<128x512xf32, #tpu.memory_space<vmem>>, vector<128x512xf32>
    %cst_27 = arith.constant dense<0.000000e+00> : vector<8x512xf32>
    %71 = tpu.matmul %64, %70, %cst_27 {dimension_numbers = #tpu.dot_dimension_numbers<[1], [0], [0], [1], [0, 0, 1, 1], [], []>} : vector<8x128xf32>, vector<128x512xf32>, vector<8x512xf32> -> vector<8x512xf32>
    %72 = arith.addf %69, %71 : vector<8x512xf32>
    %73 = vector.extract_strided_slice %72 {offsets = [0, 0], sizes = [8, 128], strides = [1, 1]} : vector<8x512xf32> to vector<8x128xf32>
    %74 = arith.negf %73 : vector<8x128xf32>
    %75 = math.exp %74 : vector<8x128xf32>
    %cst_28 = arith.constant 1.000000e+00 : f32
    %76 = vector.broadcast %cst_28 : f32 to vector<8x128xf32>
    %77 = arith.addf %76, %75 : vector<8x128xf32>
    %78 = arith.divf %76, %77 : vector<8x128xf32>
    %79 = vector.extract_strided_slice %72 {offsets = [0, 128], sizes = [8, 128], strides = [1, 1]} : vector<8x512xf32> to vector<8x128xf32>
    %80 = arith.negf %79 : vector<8x128xf32>
    %81 = math.exp %80 : vector<8x128xf32>
    %cst_29 = arith.constant 1.000000e+00 : f32
    %82 = vector.broadcast %cst_29 : f32 to vector<8x128xf32>
    %83 = arith.addf %82, %81 : vector<8x128xf32>
    %84 = arith.divf %82, %83 : vector<8x128xf32>
    %85 = vector.extract_strided_slice %72 {offsets = [0, 256], sizes = [8, 128], strides = [1, 1]} : vector<8x512xf32> to vector<8x128xf32>
    %86 = math.tanh %85 : vector<8x128xf32>
    %87 = vector.extract_strided_slice %72 {offsets = [0, 384], sizes = [8, 128], strides = [1, 1]} : vector<8x512xf32> to vector<8x128xf32>
    %88 = arith.negf %87 : vector<8x128xf32>
    %89 = math.exp %88 : vector<8x128xf32>
    %cst_30 = arith.constant 1.000000e+00 : f32
    %90 = vector.broadcast %cst_30 : f32 to vector<8x128xf32>
    %91 = arith.addf %90, %89 : vector<8x128xf32>
    %92 = arith.divf %90, %91 : vector<8x128xf32>
    %93 = arith.mulf %84, %62 : vector<8x128xf32>
    %94 = arith.mulf %78, %86 : vector<8x128xf32>
    %95 = arith.addf %93, %94 : vector<8x128xf32>
    %96 = math.tanh %95 : vector<8x128xf32>
    %97 = arith.mulf %92, %96 : vector<8x128xf32>
    %c0_31 = arith.constant 0 : index
    %c2_32 = arith.constant 2 : index
    %c0_33 = arith.constant 0 : index
    %98 = vector.load %arg3[%c0_31, %c2_32, %c0_33] : memref<8x8x128xf32, #tpu.memory_space<vmem>>, vector<8x1x128xf32>
    %99 = vector.shape_cast %98 : vector<8x1x128xf32> to vector<8x128xf32>
    %100 = vector.shape_cast %97 : vector<8x128xf32> to vector<8x1x128xf32>
    tpu.vector_store %arg3[%c0_31, %c2_32, %c0_33], %100 {strides = array<i32>} : memref<8x8x128xf32, #tpu.memory_space<vmem>>, vector<8x1x128xf32>,
    %c0_34 = arith.constant 0 : index
    %c3 = arith.constant 3 : index
    %c0_35 = arith.constant 0 : index
    %101 = vector.load %arg1[%c0_34, %c3, %c0_35] : memref<8x8x512xf32, #tpu.memory_space<vmem>>, vector<8x1x512xf32>
    %102 = vector.shape_cast %101 : vector<8x1x512xf32> to vector<8x512xf32>
    %c0_36 = arith.constant 0 : index
    %c0_37 = arith.constant 0 : index
    %103 = vector.load %arg2[%c0_36, %c0_37] : memref<128x512xf32, #tpu.memory_space<vmem>>, vector<128x512xf32>
    %cst_38 = arith.constant dense<0.000000e+00> : vector<8x512xf32>
    %104 = tpu.matmul %97, %103, %cst_38 {dimension_numbers = #tpu.dot_dimension_numbers<[1], [0], [0], [1], [0, 0, 1, 1], [], []>} : vector<8x128xf32>, vector<128x512xf32>, vector<8x512xf32> -> vector<8x512xf32>
    %105 = arith.addf %102, %104 : vector<8x512xf32>
    %106 = vector.extract_strided_slice %105 {offsets = [0, 0], sizes = [8, 128], strides = [1, 1]} : vector<8x512xf32> to vector<8x128xf32>
    %107 = arith.negf %106 : vector<8x128xf32>
    %108 = math.exp %107 : vector<8x128xf32>
    %cst_39 = arith.constant 1.000000e+00 : f32
    %109 = vector.broadcast %cst_39 : f32 to vector<8x128xf32>
    %110 = arith.addf %109, %108 : vector<8x128xf32>
    %111 = arith.divf %109, %110 : vector<8x128xf32>
    %112 = vector.extract_strided_slice %105 {offsets = [0, 128], sizes = [8, 128], strides = [1, 1]} : vector<8x512xf32> to vector<8x128xf32>
    %113 = arith.negf %112 : vector<8x128xf32>
    %114 = math.exp %113 : vector<8x128xf32>
    %cst_40 = arith.constant 1.000000e+00 : f32
    %115 = vector.broadcast %cst_40 : f32 to vector<8x128xf32>
    %116 = arith.addf %115, %114 : vector<8x128xf32>
    %117 = arith.divf %115, %116 : vector<8x128xf32>
    %118 = vector.extract_strided_slice %105 {offsets = [0, 256], sizes = [8, 128], strides = [1, 1]} : vector<8x512xf32> to vector<8x128xf32>
    %119 = math.tanh %118 : vector<8x128xf32>
    %120 = vector.extract_strided_slice %105 {offsets = [0, 384], sizes = [8, 128], strides = [1, 1]} : vector<8x512xf32> to vector<8x128xf32>
    %121 = arith.negf %120 : vector<8x128xf32>
    %122 = math.exp %121 : vector<8x128xf32>
    %cst_41 = arith.constant 1.000000e+00 : f32
    %123 = vector.broadcast %cst_41 : f32 to vector<8x128xf32>
    %124 = arith.addf %123, %122 : vector<8x128xf32>
    %125 = arith.divf %123, %124 : vector<8x128xf32>
    %126 = arith.mulf %117, %95 : vector<8x128xf32>
    %127 = arith.mulf %111, %119 : vector<8x128xf32>
    %128 = arith.addf %126, %127 : vector<8x128xf32>
    %129 = math.tanh %128 : vector<8x128xf32>
    %130 = arith.mulf %125, %129 : vector<8x128xf32>
    %c0_42 = arith.constant 0 : index
    %c3_43 = arith.constant 3 : index
    %c0_44 = arith.constant 0 : index
    %131 = vector.load %arg3[%c0_42, %c3_43, %c0_44] : memref<8x8x128xf32, #tpu.memory_space<vmem>>, vector<8x1x128xf32>
    %132 = vector.shape_cast %131 : vector<8x1x128xf32> to vector<8x128xf32>
    %133 = vector.shape_cast %130 : vector<8x128xf32> to vector<8x1x128xf32>
    tpu.vector_store %arg3[%c0_42, %c3_43, %c0_44], %133 {strides = array<i32>} : memref<8x8x128xf32, #tpu.memory_space<vmem>>, vector<8x1x128xf32>,
    %c0_45 = arith.constant 0 : index
    %c4 = arith.constant 4 : index
    %c0_46 = arith.constant 0 : index
    %134 = vector.load %arg1[%c0_45, %c4, %c0_46] : memref<8x8x512xf32, #tpu.memory_space<vmem>>, vector<8x1x512xf32>
    %135 = vector.shape_cast %134 : vector<8x1x512xf32> to vector<8x512xf32>
    %c0_47 = arith.constant 0 : index
    %c0_48 = arith.constant 0 : index
    %136 = vector.load %arg2[%c0_47, %c0_48] : memref<128x512xf32, #tpu.memory_space<vmem>>, vector<128x512xf32>
    %cst_49 = arith.constant dense<0.000000e+00> : vector<8x512xf32>
    %137 = tpu.matmul %130, %136, %cst_49 {dimension_numbers = #tpu.dot_dimension_numbers<[1], [0], [0], [1], [0, 0, 1, 1], [], []>} : vector<8x128xf32>, vector<128x512xf32>, vector<8x512xf32> -> vector<8x512xf32>
    %138 = arith.addf %135, %137 : vector<8x512xf32>
    %139 = vector.extract_strided_slice %138 {offsets = [0, 0], sizes = [8, 128], strides = [1, 1]} : vector<8x512xf32> to vector<8x128xf32>
    %140 = arith.negf %139 : vector<8x128xf32>
    %141 = math.exp %140 : vector<8x128xf32>
    %cst_50 = arith.constant 1.000000e+00 : f32
    %142 = vector.broadcast %cst_50 : f32 to vector<8x128xf32>
    %143 = arith.addf %142, %141 : vector<8x128xf32>
    %144 = arith.divf %142, %143 : vector<8x128xf32>
    %145 = vector.extract_strided_slice %138 {offsets = [0, 128], sizes = [8, 128], strides = [1, 1]} : vector<8x512xf32> to vector<8x128xf32>
    %146 = arith.negf %145 : vector<8x128xf32>
    %147 = math.exp %146 : vector<8x128xf32>
    %cst_51 = arith.constant 1.000000e+00 : f32
    %148 = vector.broadcast %cst_51 : f32 to vector<8x128xf32>
    %149 = arith.addf %148, %147 : vector<8x128xf32>
    %150 = arith.divf %148, %149 : vector<8x128xf32>
    %151 = vector.extract_strided_slice %138 {offsets = [0, 256], sizes = [8, 128], strides = [1, 1]} : vector<8x512xf32> to vector<8x128xf32>
    %152 = math.tanh %151 : vector<8x128xf32>
    %153 = vector.extract_strided_slice %138 {offsets = [0, 384], sizes = [8, 128], strides = [1, 1]} : vector<8x512xf32> to vector<8x128xf32>
    %154 = arith.negf %153 : vector<8x128xf32>
    %155 = math.exp %154 : vector<8x128xf32>
    %cst_52 = arith.constant 1.000000e+00 : f32
    %156 = vector.broadcast %cst_52 : f32 to vector<8x128xf32>
    %157 = arith.addf %156, %155 : vector<8x128xf32>
    %158 = arith.divf %156, %157 : vector<8x128xf32>
    %159 = arith.mulf %150, %128 : vector<8x128xf32>
    %160 = arith.mulf %144, %152 : vector<8x128xf32>
    %161 = arith.addf %159, %160 : vector<8x128xf32>
    %162 = math.tanh %161 : vector<8x128xf32>
    %163 = arith.mulf %158, %162 : vector<8x128xf32>
    %c0_53 = arith.constant 0 : index
    %c4_54 = arith.constant 4 : index
    %c0_55 = arith.constant 0 : index
    %164 = vector.load %arg3[%c0_53, %c4_54, %c0_55] : memref<8x8x128xf32, #tpu.memory_space<vmem>>, vector<8x1x128xf32>
    %165 = vector.shape_cast %164 : vector<8x1x128xf32> to vector<8x128xf32>
    %166 = vector.shape_cast %163 : vector<8x128xf32> to vector<8x1x128xf32>
    tpu.vector_store %arg3[%c0_53, %c4_54, %c0_55], %166 {strides = array<i32>} : memref<8x8x128xf32, #tpu.memory_space<vmem>>, vector<8x1x128xf32>,
    %c0_56 = arith.constant 0 : index
    %c5 = arith.constant 5 : index
    %c0_57 = arith.constant 0 : index
    %167 = vector.load %arg1[%c0_56, %c5, %c0_57] : memref<8x8x512xf32, #tpu.memory_space<vmem>>, vector<8x1x512xf32>
    %168 = vector.shape_cast %167 : vector<8x1x512xf32> to vector<8x512xf32>
    %c0_58 = arith.constant 0 : index
    %c0_59 = arith.constant 0 : index
    %169 = vector.load %arg2[%c0_58, %c0_59] : memref<128x512xf32, #tpu.memory_space<vmem>>, vector<128x512xf32>
    %cst_60 = arith.constant dense<0.000000e+00> : vector<8x512xf32>
    %170 = tpu.matmul %163, %169, %cst_60 {dimension_numbers = #tpu.dot_dimension_numbers<[1], [0], [0], [1], [0, 0, 1, 1], [], []>} : vector<8x128xf32>, vector<128x512xf32>, vector<8x512xf32> -> vector<8x512xf32>
    %171 = arith.addf %168, %170 : vector<8x512xf32>
    %172 = vector.extract_strided_slice %171 {offsets = [0, 0], sizes = [8, 128], strides = [1, 1]} : vector<8x512xf32> to vector<8x128xf32>
    %173 = arith.negf %172 : vector<8x128xf32>
    %174 = math.exp %173 : vector<8x128xf32>
    %cst_61 = arith.constant 1.000000e+00 : f32
    %175 = vector.broadcast %cst_61 : f32 to vector<8x128xf32>
    %176 = arith.addf %175, %174 : vector<8x128xf32>
    %177 = arith.divf %175, %176 : vector<8x128xf32>
    %178 = vector.extract_strided_slice %171 {offsets = [0, 128], sizes = [8, 128], strides = [1, 1]} : vector<8x512xf32> to vector<8x128xf32>
    %179 = arith.negf %178 : vector<8x128xf32>
    %180 = math.exp %179 : vector<8x128xf32>
    %cst_62 = arith.constant 1.000000e+00 : f32
    %181 = vector.broadcast %cst_62 : f32 to vector<8x128xf32>
    %182 = arith.addf %181, %180 : vector<8x128xf32>
    %183 = arith.divf %181, %182 : vector<8x128xf32>
    %184 = vector.extract_strided_slice %171 {offsets = [0, 256], sizes = [8, 128], strides = [1, 1]} : vector<8x512xf32> to vector<8x128xf32>
    %185 = math.tanh %184 : vector<8x128xf32>
    %186 = vector.extract_strided_slice %171 {offsets = [0, 384], sizes = [8, 128], strides = [1, 1]} : vector<8x512xf32> to vector<8x128xf32>
    %187 = arith.negf %186 : vector<8x128xf32>
    %188 = math.exp %187 : vector<8x128xf32>
    %cst_63 = arith.constant 1.000000e+00 : f32
    %189 = vector.broadcast %cst_63 : f32 to vector<8x128xf32>
    %190 = arith.addf %189, %188 : vector<8x128xf32>
    %191 = arith.divf %189, %190 : vector<8x128xf32>
    %192 = arith.mulf %183, %161 : vector<8x128xf32>
    %193 = arith.mulf %177, %185 : vector<8x128xf32>
    %194 = arith.addf %192, %193 : vector<8x128xf32>
    %195 = math.tanh %194 : vector<8x128xf32>
    %196 = arith.mulf %191, %195 : vector<8x128xf32>
    %c0_64 = arith.constant 0 : index
    %c5_65 = arith.constant 5 : index
    %c0_66 = arith.constant 0 : index
    %197 = vector.load %arg3[%c0_64, %c5_65, %c0_66] : memref<8x8x128xf32, #tpu.memory_space<vmem>>, vector<8x1x128xf32>
    %198 = vector.shape_cast %197 : vector<8x1x128xf32> to vector<8x128xf32>
    %199 = vector.shape_cast %196 : vector<8x128xf32> to vector<8x1x128xf32>
    tpu.vector_store %arg3[%c0_64, %c5_65, %c0_66], %199 {strides = array<i32>} : memref<8x8x128xf32, #tpu.memory_space<vmem>>, vector<8x1x128xf32>,
    %c0_67 = arith.constant 0 : index
    %c6 = arith.constant 6 : index
    %c0_68 = arith.constant 0 : index
    %200 = vector.load %arg1[%c0_67, %c6, %c0_68] : memref<8x8x512xf32, #tpu.memory_space<vmem>>, vector<8x1x512xf32>
    %201 = vector.shape_cast %200 : vector<8x1x512xf32> to vector<8x512xf32>
    %c0_69 = arith.constant 0 : index
    %c0_70 = arith.constant 0 : index
    %202 = vector.load %arg2[%c0_69, %c0_70] : memref<128x512xf32, #tpu.memory_space<vmem>>, vector<128x512xf32>
    %cst_71 = arith.constant dense<0.000000e+00> : vector<8x512xf32>
    %203 = tpu.matmul %196, %202, %cst_71 {dimension_numbers = #tpu.dot_dimension_numbers<[1], [0], [0], [1], [0, 0, 1, 1], [], []>} : vector<8x128xf32>, vector<128x512xf32>, vector<8x512xf32> -> vector<8x512xf32>
    %204 = arith.addf %201, %203 : vector<8x512xf32>
    %205 = vector.extract_strided_slice %204 {offsets = [0, 0], sizes = [8, 128], strides = [1, 1]} : vector<8x512xf32> to vector<8x128xf32>
    %206 = arith.negf %205 : vector<8x128xf32>
    %207 = math.exp %206 : vector<8x128xf32>
    %cst_72 = arith.constant 1.000000e+00 : f32
    %208 = vector.broadcast %cst_72 : f32 to vector<8x128xf32>
    %209 = arith.addf %208, %207 : vector<8x128xf32>
    %210 = arith.divf %208, %209 : vector<8x128xf32>
    %211 = vector.extract_strided_slice %204 {offsets = [0, 128], sizes = [8, 128], strides = [1, 1]} : vector<8x512xf32> to vector<8x128xf32>
    %212 = arith.negf %211 : vector<8x128xf32>
    %213 = math.exp %212 : vector<8x128xf32>
    %cst_73 = arith.constant 1.000000e+00 : f32
    %214 = vector.broadcast %cst_73 : f32 to vector<8x128xf32>
    %215 = arith.addf %214, %213 : vector<8x128xf32>
    %216 = arith.divf %214, %215 : vector<8x128xf32>
    %217 = vector.extract_strided_slice %204 {offsets = [0, 256], sizes = [8, 128], strides = [1, 1]} : vector<8x512xf32> to vector<8x128xf32>
    %218 = math.tanh %217 : vector<8x128xf32>
    %219 = vector.extract_strided_slice %204 {offsets = [0, 384], sizes = [8, 128], strides = [1, 1]} : vector<8x512xf32> to vector<8x128xf32>
    %220 = arith.negf %219 : vector<8x128xf32>
    %221 = math.exp %220 : vector<8x128xf32>
    %cst_74 = arith.constant 1.000000e+00 : f32
    %222 = vector.broadcast %cst_74 : f32 to vector<8x128xf32>
    %223 = arith.addf %222, %221 : vector<8x128xf32>
    %224 = arith.divf %222, %223 : vector<8x128xf32>
    %225 = arith.mulf %216, %194 : vector<8x128xf32>
    %226 = arith.mulf %210, %218 : vector<8x128xf32>
    %227 = arith.addf %225, %226 : vector<8x128xf32>
    %228 = math.tanh %227 : vector<8x128xf32>
    %229 = arith.mulf %224, %228 : vector<8x128xf32>
    %c0_75 = arith.constant 0 : index
    %c6_76 = arith.constant 6 : index
    %c0_77 = arith.constant 0 : index
    %230 = vector.load %arg3[%c0_75, %c6_76, %c0_77] : memref<8x8x128xf32, #tpu.memory_space<vmem>>, vector<8x1x128xf32>
    %231 = vector.shape_cast %230 : vector<8x1x128xf32> to vector<8x128xf32>
    %232 = vector.shape_cast %229 : vector<8x128xf32> to vector<8x1x128xf32>
    tpu.vector_store %arg3[%c0_75, %c6_76, %c0_77], %232 {strides = array<i32>} : memref<8x8x128xf32, #tpu.memory_space<vmem>>, vector<8x1x128xf32>,
    %c0_78 = arith.constant 0 : index
    %c7 = arith.constant 7 : index
    %c0_79 = arith.constant 0 : index
    %233 = vector.load %arg1[%c0_78, %c7, %c0_79] : memref<8x8x512xf32, #tpu.memory_space<vmem>>, vector<8x1x512xf32>
    %234 = vector.shape_cast %233 : vector<8x1x512xf32> to vector<8x512xf32>
    %c0_80 = arith.constant 0 : index
    %c0_81 = arith.constant 0 : index
    %235 = vector.load %arg2[%c0_80, %c0_81] : memref<128x512xf32, #tpu.memory_space<vmem>>, vector<128x512xf32>
    %cst_82 = arith.constant dense<0.000000e+00> : vector<8x512xf32>
    %236 = tpu.matmul %229, %235, %cst_82 {dimension_numbers = #tpu.dot_dimension_numbers<[1], [0], [0], [1], [0, 0, 1, 1], [], []>} : vector<8x128xf32>, vector<128x512xf32>, vector<8x512xf32> -> vector<8x512xf32>
    %237 = arith.addf %234, %236 : vector<8x512xf32>
    %238 = vector.extract_strided_slice %237 {offsets = [0, 0], sizes = [8, 128], strides = [1, 1]} : vector<8x512xf32> to vector<8x128xf32>
    %239 = arith.negf %238 : vector<8x128xf32>
    %240 = math.exp %239 : vector<8x128xf32>
    %cst_83 = arith.constant 1.000000e+00 : f32
    %241 = vector.broadcast %cst_83 : f32 to vector<8x128xf32>
    %242 = arith.addf %241, %240 : vector<8x128xf32>
    %243 = arith.divf %241, %242 : vector<8x128xf32>
    %244 = vector.extract_strided_slice %237 {offsets = [0, 128], sizes = [8, 128], strides = [1, 1]} : vector<8x512xf32> to vector<8x128xf32>
    %245 = arith.negf %244 : vector<8x128xf32>
    %246 = math.exp %245 : vector<8x128xf32>
    %cst_84 = arith.constant 1.000000e+00 : f32
    %247 = vector.broadcast %cst_84 : f32 to vector<8x128xf32>
    %248 = arith.addf %247, %246 : vector<8x128xf32>
    %249 = arith.divf %247, %248 : vector<8x128xf32>
    %250 = vector.extract_strided_slice %237 {offsets = [0, 256], sizes = [8, 128], strides = [1, 1]} : vector<8x512xf32> to vector<8x128xf32>
    %251 = math.tanh %250 : vector<8x128xf32>
    %252 = vector.extract_strided_slice %237 {offsets = [0, 384], sizes = [8, 128], strides = [1, 1]} : vector<8x512xf32> to vector<8x128xf32>
    %253 = arith.negf %252 : vector<8x128xf32>
    %254 = math.exp %253 : vector<8x128xf32>
    %cst_85 = arith.constant 1.000000e+00 : f32
    %255 = vector.broadcast %cst_85 : f32 to vector<8x128xf32>
    %256 = arith.addf %255, %254 : vector<8x128xf32>
    %257 = arith.divf %255, %256 : vector<8x128xf32>
    %258 = arith.mulf %249, %227 : vector<8x128xf32>
    %259 = arith.mulf %243, %251 : vector<8x128xf32>
    %260 = arith.addf %258, %259 : vector<8x128xf32>
    %261 = math.tanh %260 : vector<8x128xf32>
    %262 = arith.mulf %257, %261 : vector<8x128xf32>
    %c0_86 = arith.constant 0 : index
    %c7_87 = arith.constant 7 : index
    %c0_88 = arith.constant 0 : index
    %263 = vector.load %arg3[%c0_86, %c7_87, %c0_88] : memref<8x8x128xf32, #tpu.memory_space<vmem>>, vector<8x1x128xf32>
    %264 = vector.shape_cast %263 : vector<8x1x128xf32> to vector<8x128xf32>
    %265 = vector.shape_cast %262 : vector<8x128xf32> to vector<8x1x128xf32>
    tpu.vector_store %arg3[%c0_86, %c7_87, %c0_88], %265 {strides = array<i32>} : memref<8x8x128xf32, #tpu.memory_space<vmem>>, vector<8x1x128xf32>,
    %c0_89 = arith.constant 0 : index
    %c0_90 = arith.constant 0 : index
    %266 = vector.load %arg4[%c0_89, %c0_90] : memref<8x128xf32, #tpu.memory_space<vmem>>, vector<8x128xf32>
    tpu.vector_store %arg4[%c0_89, %c0_90], %262 {strides = array<i32>} : memref<8x128xf32, #tpu.memory_space<vmem>>, vector<8x128xf32>,
    %c0_91 = arith.constant 0 : index
    %c0_92 = arith.constant 0 : index
    %267 = vector.load %arg5[%c0_91, %c0_92] : memref<8x128xf32, #tpu.memory_space<vmem>>, vector<8x128xf32>
    tpu.vector_store %arg5[%c0_91, %c0_92], %260 {strides = array<i32>} : memref<8x128xf32, #tpu.memory_space<vmem>>, vector<8x128xf32>,
    return
  }
  func.func @transform_0(%arg0: i32) -> (i32, i32, i32) {
    %c0_i32 = arith.constant 0 : i32
    %c0_i32_0 = arith.constant 0 : i32
    %c0_i32_1 = arith.constant 0 : i32
    %c0_i32_2 = arith.constant 0 : i32
    return %c0_i32, %c0_i32_0, %c0_i32_1 : i32, i32, i32
  }
  func.func @transform_1(%arg0: i32) -> (i32, i32) {
    %c0_i32 = arith.constant 0 : i32
    %c0_i32_0 = arith.constant 0 : i32
    %c0_i32_1 = arith.constant 0 : i32
    return %c0_i32, %c0_i32_0 : i32, i32
  }
  func.func @transform_2(%arg0: i32) -> (i32, i32, i32) {
    %c0_i32 = arith.constant 0 : i32
    %c0_i32_0 = arith.constant 0 : i32
    %c0_i32_1 = arith.constant 0 : i32
    %c0_i32_2 = arith.constant 0 : i32
    return %c0_i32, %c0_i32_0, %c0_i32_1 : i32, i32, i32
  }
  func.func @transform_3(%arg0: i32) -> (i32, i32) {
    %c0_i32 = arith.constant 0 : i32
    %c0_i32_0 = arith.constant 0 : i32
    %c0_i32_1 = arith.constant 0 : i32
    return %c0_i32, %c0_i32_0 : i32, i32
  }
  func.func @transform_4(%arg0: i32) -> (i32, i32) {
    %c0_i32 = arith.constant 0 : i32
    %c0_i32_0 = arith.constant 0 : i32
    %c0_i32_1 = arith.constant 0 : i32
    return %c0_i32, %c0_i32_0 : i32, i32
  }
}

</mosaic_0001>

<llo_original>
// kernel: lstm_encoder.2
$region0: #{lstm_encoder.2}
  #allocation0 [shape = 'u32[]', space=smem, size = 0x4, offset = 0x4, fixed_abs, tag = 'smem constant byte address 0x4 - core index']
  #allocation1 [shape = 'u32[144,128]{1,0:T(1,128)}', space=vmem, size = 0x12000, scoped, tag = 'internal scratch']
  %s0 = inlined_call_operand.vmem [shape: f32[64,4], index: 0, kind: input, shape index: {}]
  %s1 = inlined_call_operand.vmem [shape: f32[4,512], index: 1, kind: input, shape index: {}]
  %s2 = inlined_call_operand.vmem [shape: f32[1,512], index: 2, kind: input, shape index: {}]
  %s3 = inlined_call_operand.vmem [shape: f32[64,512], index: 3, kind: output, shape index: {}]
  %s4 = sld [smem:[#allocation0]]
  $region22: #{lstm_encoder.2} parent=0
    _
  %s6 = ssub.s32 1, %s4
  %s7 = scalar_select 0, %s6, %s4
  // Predicated region
  $region2: #{lstm_encoder.2} parent=0 // pred_check
    _
  $region3: #{lstm_encoder.2} parent=0 // pred_check_branch
    %9 = sbr.rel (0) target = $region5
  $region4: #{lstm_encoder.2} parent=0 // pred_region
    _
  $region5: #{lstm_encoder.2} parent=0 // pred_fallthru
    _
  // Predicated region
  $region6: #{lstm_encoder.2} parent=0 // pred_check
    _
  $region7: #{lstm_encoder.2} parent=0 // pred_check_branch
    %11 = sbr.rel (0) target = $region9
  $region8: #{lstm_encoder.2} parent=0 // pred_region
    _
  $region9: #{lstm_encoder.2} parent=0 // pred_fallthru
    _
  // Predicated region
  $region10: #{lstm_encoder.2} parent=0 // pred_check
    _
  $region11: #{lstm_encoder.2} parent=0 // pred_check_branch
    %13 = sbr.rel (0) target = $region13
  $region12: #{lstm_encoder.2} parent=0 // pred_region
    _
  $region13: #{lstm_encoder.2} parent=0 // pred_fallthru
    _
  %v14 = vld [vmem:[%s0] sm:$0xff]
  %v15 = vld [vmem:[%s0 + $0x8] sm:$0xff]
  %v16 = vld [vmem:[%s0 + $0x10] sm:$0xff]
  %v17 = vld [vmem:[%s0 + $0x18] sm:$0xff]
  %v18 = vld [vmem:[%s0 + $0x20] sm:$0xff]
  %v19 = vld [vmem:[%s0 + $0x28] sm:$0xff]
  %v20 = vld [vmem:[%s0 + $0x30] sm:$0xff]
  %v21 = vld [vmem:[%s0 + $0x38] sm:$0xff]
  %v22 = vld [vmem:[%s1] sm:$0xff]
  %v23 = vld [vmem:[%s1 + $0x8] sm:$0xff]
  %v24 = vld [vmem:[%s2] sm:$0xf]
  %v26 = vlaneseq
  %v27 = vshrl.u32 %v26, 7
  %v28 = vsub.s32 0, %v27
  %v29 = vrot.slane %v24, %v28
  %v30 = vlaneseq
  %v31 = vshrl.u32 %v30, 7
  %v32 = vsub.s32 1, %v31
  %v33 = vrot.slane %v24, %v32
  %v34 = vlaneseq
  %v35 = vshrl.u32 %v34, 7
  %v36 = vsub.s32 2, %v35
  %v37 = vrot.slane %v24, %v36
  %v38 = vlaneseq
  %v39 = vshrl.u32 %v38, 7
  %v40 = vsub.s32 3, %v39
  %v41 = vrot.slane %v24, %v40
  %v48 = vcombine.high %v22, %v22
  %v49 = vcombine.high %v23, %v23
  %vm50 = vcmask 31744
  %v52 = vsel %vm50, %v14, 0
  %v55 = vsel %vm50, %v15, 0
  %v58 = vsel %vm50, %v16, 0
  %v61 = vsel %vm50, %v17, 0
  %v64 = vsel %vm50, %v18, 0
  %v67 = vsel %vm50, %v19, 0
  %v70 = vsel %vm50, %v20, 0
  %v73 = vsel %vm50, %v21, 0
  %vm75 = vcmask 1043456
  %v76 = vsel %vm75, %v22, 0
  %v78 = vsel %vm75, %v48, 0
  %v80 = vsel %vm75, %v23, 0
  %v82 = vsel %vm75, %v49, 0
  %84 = vmatprep.subr.mxu0 0.0
  %85 = vmatpush1.msra.mxu0 0.0
  %86 = vmatprep.subr.mxu0 0.0
  %87 = vmatpush1.msra.mxu0 0.0
  %88 = vmatprep.subr.mxu0 0.0
  %89 = vmatpush1.msra.mxu0 0.0
  %90 = vmatprep.subr.mxu0 0.0
  %91 = vmatpush1.msra.mxu0 0.0
  %92 = vmatprep.subr.mxu0 0.0
  %93 = vmatpush1.msra.mxu0 0.0
  %94 = vmatprep.subr.mxu0 0.0
  %95 = vmatpush1.msra.mxu0 0.0
  %96 = vmatprep.subr.mxu0 0.0
  %97 = vmatpush1.msra.mxu0 0.0
  %98 = vmatprep.subr.mxu0 0.0
  %99 = vmatpush1.msra.mxu0 0.0
  %100 = vmatprep.subr.mxu0 0.0
  %101 = vmatpush1.msra.mxu0 0.0
  %102 = vmatprep.subr.mxu0 0.0
  %103 = vmatpush1.msra.mxu0 0.0
  %104 = vmatprep.subr.mxu0 0.0
  %105 = vmatpush1.msra.mxu0 0.0
  %106 = vmatprep.subr.mxu0 0.0
  %107 = vmatpush1.msra.mxu0 0.0
  %108 = vmatprep.subr.mxu0 0.0
  %109 = vmatpush1.msra.mxu0 0.0
  %110 = vmatprep.subr.mxu0 0.0
  %111 = vmatpush1.msra.mxu0 0.0
  %112 = vmatprep.subr.mxu0 0.0
  %113 = vmatpush1.msra.mxu0 0.0
  %114 = vmatprep.subr.mxu0 %v78
  %115 = vmatpush1.msra.mxu0 %v76
  %116 = vmatprep.subr.mxu0 0.0
  %117 = vmatpush2.msra.mxu0 0.0
  %118 = vmatprep.subr.mxu0 0.0
  %119 = vmatpush2.msra.mxu0 0.0
  %120 = vmatprep.subr.mxu0 0.0
  %121 = vmatpush2.msra.mxu0 0.0
  %122 = vmatprep.subr.mxu0 0.0
  %123 = vmatpush2.msra.mxu0 0.0
  %124 = vmatprep.subr.mxu0 0.0
  %125 = vmatpush2.msra.mxu0 0.0
  %126 = vmatprep.subr.mxu0 0.0
  %127 = vmatpush2.msra.mxu0 0.0
  %128 = vmatprep.subr.mxu0 0.0
  %129 = vmatpush2.msra.mxu0 0.0
  %130 = vmatprep.subr.mxu0 0.0
  %131 = vmatpush2.msra.mxu0 0.0
  %132 = vmatprep.subr.mxu0 0.0
  %133 = vmatpush2.msra.mxu0 0.0
  %134 = vmatprep.subr.mxu0 0.0
  %135 = vmatpush2.msra.mxu0 0.0
  %136 = vmatprep.subr.mxu0 0.0
  %137 = vmatpush2.msra.mxu0 0.0
  %138 = vmatprep.subr.mxu0 0.0
  %139 = vmatpush2.msra.mxu0 0.0
  %140 = vmatprep.subr.mxu0 0.0
  %141 = vmatpush2.msra.mxu0 0.0
  %142 = vmatprep.subr.mxu0 0.0
  %143 = vmatpush2.msra.mxu0 0.0
  %144 = vmatprep.subr.mxu0 0.0
  %145 = vmatpush2.msra.mxu0 0.0
  %146 = vmatprep.subr.mxu0 0.0
  %147 = vmatpush2.msra.mxu0 0.0
  %148 = vmatprep.mubr.f32.mxu0 0.0
  %149 = vmatmul.mubr.f32.gmra.mxu0 %v52
  %v150 = vpop.f32.mrf.mxu0
  %v151 = vadd.f32 %v29, %v150
  %v152 = vpop.f32.mrf.mxu0
  %v153 = vadd.f32 %v33, %v152
  %154 = vmatprep.mubr.f32.mxu0 0.0
  %155 = vmatmul.mubr.f32.gmra.mxu0 %v55
  %v156 = vpop.f32.mrf.mxu0
  %v157 = vadd.f32 %v29, %v156
  %v158 = vpop.f32.mrf.mxu0
  %v159 = vadd.f32 %v33, %v158
  %160 = vmatprep.mubr.f32.mxu0 0.0
  %161 = vmatmul.mubr.f32.gmra.mxu0 %v58
  %v162 = vpop.f32.mrf.mxu0
  %v163 = vadd.f32 %v29, %v162
  %v164 = vpop.f32.mrf.mxu0
  %v165 = vadd.f32 %v33, %v164
  %166 = vmatprep.mubr.f32.mxu0 0.0
  %167 = vmatmul.mubr.f32.gmra.mxu0 %v61
  %v168 = vpop.f32.mrf.mxu0
  %v169 = vadd.f32 %v29, %v168
  %v170 = vpop.f32.mrf.mxu0
  %v171 = vadd.f32 %v33, %v170
  %172 = vmatprep.mubr.f32.mxu0 0.0
  %173 = vmatmul.mubr.f32.gmra.mxu0 %v64
  %v174 = vpop.f32.mrf.mxu0
  %v175 = vadd.f32 %v29, %v174
  %v176 = vpop.f32.mrf.mxu0
  %v177 = vadd.f32 %v33, %v176
  %178 = vmatprep.mubr.f32.mxu0 0.0
  %179 = vmatmul.mubr.f32.gmra.mxu0 %v67
  %v180 = vpop.f32.mrf.mxu0
  %v181 = vadd.f32 %v29, %v180
  %v182 = vpop.f32.mrf.mxu0
  %v183 = vadd.f32 %v33, %v182
  %184 = vmatprep.mubr.f32.mxu0 0.0
  %185 = vmatmul.mubr.f32.gmra.mxu0 %v70
  %v186 = vpop.f32.mrf.mxu0
  %v187 = vadd.f32 %v29, %v186
  %v188 = vpop.f32.mrf.mxu0
  %v189 = vadd.f32 %v33, %v188
  %190 = vmatprep.mubr.f32.mxu0 0.0
  %191 = vmatmul.mubr.f32.gmra.mxu0 %v73
  %v192 = vpop.f32.mrf.mxu0
  %v193 = vadd.f32 %v29, %v192
  %v194 = vpop.f32.mrf.mxu0
  %v195 = vadd.f32 %v33, %v194
  %196 = vdwg.mxu0
  %197 = vmatprep.subr.mxu0 0.0
  %198 = vmatpush1.msra.mxu0 0.0
  %199 = vmatprep.subr.mxu0 0.0
  %200 = vmatpush1.msra.mxu0 0.0
  %201 = vmatprep.subr.mxu0 0.0
  %202 = vmatpush1.msra.mxu0 0.0
  %203 = vmatprep.subr.mxu0 0.0
  %204 = vmatpush1.msra.mxu0 0.0
  %205 = vmatprep.subr.mxu0 0.0
  %206 = vmatpush1.msra.mxu0 0.0
  %207 = vmatprep.subr.mxu0 0.0
  %208 = vmatpush1.msra.mxu0 0.0
  %209 = vmatprep.subr.mxu0 0.0
  %210 = vmatpush1.msra.mxu0 0.0
  %211 = vmatprep.subr.mxu0 0.0
  %212 = vmatpush1.msra.mxu0 0.0
  %213 = vmatprep.subr.mxu0 0.0
  %214 = vmatpush1.msra.mxu0 0.0
  %215 = vmatprep.subr.mxu0 0.0
  %216 = vmatpush1.msra.mxu0 0.0
  %217 = vmatprep.subr.mxu0 0.0
  %218 = vmatpush1.msra.mxu0 0.0
  %219 = vmatprep.subr.mxu0 0.0
  %220 = vmatpush1.msra.mxu0 0.0
  %221 = vmatprep.subr.mxu0 0.0
  %222 = vmatpush1.msra.mxu0 0.0
  %223 = vmatprep.subr.mxu0 0.0
  %224 = vmatpush1.msra.mxu0 0.0
  %225 = vmatprep.subr.mxu0 0.0
  %226 = vmatpush1.msra.mxu0 0.0
  %227 = vmatprep.subr.mxu0 %v82
  %228 = vmatpush1.msra.mxu0 %v80
  %229 = vmatprep.subr.mxu0 0.0
  %230 = vmatpush2.msra.mxu0 0.0
  %231 = vmatprep.subr.mxu0 0.0
  %232 = vmatpush2.msra.mxu0 0.0
  %233 = vmatprep.subr.mxu0 0.0
  %234 = vmatpush2.msra.mxu0 0.0
  %235 = vmatprep.subr.mxu0 0.0
  %236 = vmatpush2.msra.mxu0 0.0
  %237 = vmatprep.subr.mxu0 0.0
  %238 = vmatpush2.msra.mxu0 0.0
  %239 = vmatprep.subr.mxu0 0.0
  %240 = vmatpush2.msra.mxu0 0.0
  %241 = vmatprep.subr.mxu0 0.0
  %242 = vmatpush2.msra.mxu0 0.0
  %243 = vmatprep.subr.mxu0 0.0
  %244 = vmatpush2.msra.mxu0 0.0
  %245 = vmatprep.subr.mxu0 0.0
  %246 = vmatpush2.msra.mxu0 0.0
  %247 = vmatprep.subr.mxu0 0.0
  %248 = vmatpush2.msra.mxu0 0.0
  %249 = vmatprep.subr.mxu0 0.0
  %250 = vmatpush2.msra.mxu0 0.0
  %251 = vmatprep.subr.mxu0 0.0
  %252 = vmatpush2.msra.mxu0 0.0
  %253 = vmatprep.subr.mxu0 0.0
  %254 = vmatpush2.msra.mxu0 0.0
  %255 = vmatprep.subr.mxu0 0.0
  %256 = vmatpush2.msra.mxu0 0.0
  %257 = vmatprep.subr.mxu0 0.0
  %258 = vmatpush2.msra.mxu0 0.0
  %259 = vmatprep.subr.mxu0 0.0
  %260 = vmatpush2.msra.mxu0 0.0
  %261 = vmatprep.mubr.f32.mxu0 0.0
  %262 = vmatmul.mubr.f32.gmra.mxu0 %v52
  %v263 = vpop.f32.mrf.mxu0
  %v264 = vadd.f32 %v37, %v263
  %v265 = vpop.f32.mrf.mxu0
  %v266 = vadd.f32 %v41, %v265
  %267 = vmatprep.mubr.f32.mxu0 0.0
  %268 = vmatmul.mubr.f32.gmra.mxu0 %v55
  %v269 = vpop.f32.mrf.mxu0
  %v270 = vadd.f32 %v37, %v269
  %v271 = vpop.f32.mrf.mxu0
  %v272 = vadd.f32 %v41, %v271
  %273 = vmatprep.mubr.f32.mxu0 0.0
  %274 = vmatmul.mubr.f32.gmra.mxu0 %v58
  %v275 = vpop.f32.mrf.mxu0
  %v276 = vadd.f32 %v37, %v275
  %v277 = vpop.f32.mrf.mxu0
  %v278 = vadd.f32 %v41, %v277
  %279 = vmatprep.mubr.f32.mxu0 0.0
  %280 = vmatmul.mubr.f32.gmra.mxu0 %v61
  %v281 = vpop.f32.mrf.mxu0
  %v282 = vadd.f32 %v37, %v281
  %v283 = vpop.f32.mrf.mxu0
  %v284 = vadd.f32 %v41, %v283
  %285 = vmatprep.mubr.f32.mxu0 0.0
  %286 = vmatmul.mubr.f32.gmra.mxu0 %v64
  %v287 = vpop.f32.mrf.mxu0
  %v288 = vadd.f32 %v37, %v287
  %v289 = vpop.f32.mrf.mxu0
  %v290 = vadd.f32 %v41, %v289
  %291 = vmatprep.mubr.f32.mxu0 0.0
  %292 = vmatmul.mubr.f32.gmra.mxu0 %v67
  %v293 = vpop.f32.mrf.mxu0
  %v294 = vadd.f32 %v37, %v293
  %v295 = vpop.f32.mrf.mxu0
  %v296 = vadd.f32 %v41, %v295
  %297 = vmatprep.mubr.f32.mxu0 0.0
  %298 = vmatmul.mubr.f32.gmra.mxu0 %v70
  %v299 = vpop.f32.mrf.mxu0
  %v300 = vadd.f32 %v37, %v299
  %v301 = vpop.f32.mrf.mxu0
  %v302 = vadd.f32 %v41, %v301
  %303 = vmatprep.mubr.f32.mxu0 0.0
  %304 = vmatmul.mubr.f32.gmra.mxu0 %v73
  %v305 = vpop.f32.mrf.mxu0
  %v306 = vadd.f32 %v37, %v305
  %v307 = vpop.f32.mrf.mxu0
  %v308 = vadd.f32 %v41, %v307
  %309 = vdwg.mxu0
  %310 = vst [vmem:[%s3] sm:$0xff] %v151
  %311 = vst [vmem:[%s3 + $0x8] sm:$0xff] %v153
  %312 = vst [vmem:[%s3 + $0x10] sm:$0xff] %v264
  %313 = vst [vmem:[%s3 + $0x18] sm:$0xff] %v266
  %314 = vst [vmem:[%s3 + $0x20] sm:$0xff] %v157
  %315 = vst [vmem:[%s3 + $0x28] sm:$0xff] %v159
  %316 = vst [vmem:[%s3 + $0x30] sm:$0xff] %v270
  %317 = vst [vmem:[%s3 + $0x38] sm:$0xff] %v272
  %318 = vst [vmem:[%s3 + $0x40] sm:$0xff] %v163
  %319 = vst [vmem:[%s3 + $0x48] sm:$0xff] %v165
  %320 = vst [vmem:[%s3 + $0x50] sm:$0xff] %v276
  %321 = vst [vmem:[%s3 + $0x58] sm:$0xff] %v278
  %322 = vst [vmem:[%s3 + $0x60] sm:$0xff] %v169
  %323 = vst [vmem:[%s3 + $0x68] sm:$0xff] %v171
  %324 = vst [vmem:[%s3 + $0x70] sm:$0xff] %v282
  %325 = vst [vmem:[%s3 + $0x78] sm:$0xff] %v284
  %326 = vst [vmem:[%s3 + $0x80] sm:$0xff] %v175
  %327 = vst [vmem:[%s3 + $0x88] sm:$0xff] %v177
  %328 = vst [vmem:[%s3 + $0x90] sm:$0xff] %v288
  %329 = vst [vmem:[%s3 + $0x98] sm:$0xff] %v290
  %330 = vst [vmem:[%s3 + $0xa0] sm:$0xff] %v181
  %331 = vst [vmem:[%s3 + $0xa8] sm:$0xff] %v183
  %332 = vst [vmem:[%s3 + $0xb0] sm:$0xff] %v294
  %333 = vst [vmem:[%s3 + $0xb8] sm:$0xff] %v296
  %334 = vst [vmem:[%s3 + $0xc0] sm:$0xff] %v187
  %335 = vst [vmem:[%s3 + $0xc8] sm:$0xff] %v189
  %336 = vst [vmem:[%s3 + $0xd0] sm:$0xff] %v300
  %337 = vst [vmem:[%s3 + $0xd8] sm:$0xff] %v302
  %338 = vst [vmem:[%s3 + $0xe0] sm:$0xff] %v193
  %339 = vst [vmem:[%s3 + $0xe8] sm:$0xff] %v195
  %340 = vst [vmem:[%s3 + $0xf0] sm:$0xff] %v306
  %341 = vst [vmem:[%s3 + $0xf8] sm:$0xff] %v308
  // Predicated region
  $region14: #{lstm_encoder.2} parent=0 // pred_check
    _
  $region15: #{lstm_encoder.2} parent=0 // pred_check_branch
    %343 = sbr.rel (0) target = $region17
  $region16: #{lstm_encoder.2} parent=0 // pred_region
    _
  $region17: #{lstm_encoder.2} parent=0 // pred_fallthru
    _
  // Predicated region
  $region18: #{lstm_encoder.2} parent=0 // pred_check
    _
  $region19: #{lstm_encoder.2} parent=0 // pred_check_branch
    %345 = sbr.rel (0) target = $region21
  $region20: #{lstm_encoder.2} parent=0 // pred_region
    _
  $region21: #{lstm_encoder.2} parent=0 // pred_fallthru
    _

// kernel: lstm_encoder.3
$region0: #{lstm_encoder.3}
  #allocation0 [shape = 'u32[]', space=smem, size = 0x4, offset = 0x4, fixed_abs, tag = 'smem constant byte address 0x4 - core index']
  #allocation1 [shape = 'u32[144,128]{1,0:T(1,128)}', space=vmem, size = 0x12000, scoped, tag = 'internal scratch']
  %s0 = inlined_call_operand.vmem [shape: f32[8,8,512], index: 0, kind: input, shape index: {}]
  %s1 = inlined_call_operand.vmem [shape: f32[128,512], index: 1, kind: input, shape index: {}]
  %s2 = inlined_call_operand.vmem [shape: f32[8,8,128], index: 2, kind: output, shape index: {0}]
  %s3 = inlined_call_operand.vmem [shape: f32[8,128], index: 3, kind: output, shape index: {1}]
  %s4 = inlined_call_operand.vmem [shape: f32[8,128], index: 4, kind: output, shape index: {2}]
  %5 = xla_tuple %s2, %s3, %s4
  %s6 = sld [smem:[#allocation0]]
  $region34: #{lstm_encoder.3} parent=0
    _
  %s8 = ssub.s32 1, %s6
  %s9 = scalar_select 0, %s8, %s6
  // Predicated region
  $region2: #{lstm_encoder.3} parent=0 // pred_check
    _
  $region3: #{lstm_encoder.3} parent=0 // pred_check_branch
    %11 = sbr.rel (0) target = $region5
  $region4: #{lstm_encoder.3} parent=0 // pred_region
    _
  $region5: #{lstm_encoder.3} parent=0 // pred_fallthru
    _
  // Predicated region
  $region6: #{lstm_encoder.3} parent=0 // pred_check
    _
  $region7: #{lstm_encoder.3} parent=0 // pred_check_branch
    %13 = sbr.rel (0) target = $region9
  $region8: #{lstm_encoder.3} parent=0 // pred_region
    _
  $region9: #{lstm_encoder.3} parent=0 // pred_fallthru
    _
  %v14 = vld [vmem:[%s0] ss:$8 sm:$0xf]
  %s15 = scalar_lea.vmem %s0, 32
  %v16 = vld [vmem:[%s15] ss:$8 sm:$0xf]
  %s17 = scalar_lea.vmem %s0, 64
  %v18 = vld [vmem:[%s17] ss:$8 sm:$0xf]
  %s19 = scalar_lea.vmem %s0, 96
  %v20 = vld [vmem:[%s19] ss:$8 sm:$0xf]
  %s21 = scalar_lea.vmem %s0, 128
  %v22 = vld [vmem:[%s21] ss:$8 sm:$0xf]
  %s23 = scalar_lea.vmem %s0, 160
  %v24 = vld [vmem:[%s23] ss:$8 sm:$0xf]
  %s25 = scalar_lea.vmem %s0, 192
  %v26 = vld [vmem:[%s25] ss:$8 sm:$0xf]
  %s27 = scalar_lea.vmem %s0, 224
  %v28 = vld [vmem:[%s27] ss:$8 sm:$0xf]
  %v29 = vld [vmem:[%s1] sm:$0xff]
  %v30 = vld [vmem:[%s1 + $0x8] sm:$0xff]
  %v31 = vld [vmem:[%s1 + $0x10] sm:$0xff]
  %v32 = vld [vmem:[%s1 + $0x18] sm:$0xff]
  %v33 = vld [vmem:[%s1 + $0x20] sm:$0xff]
  %v34 = vld [vmem:[%s1 + $0x28] sm:$0xff]
  %v35 = vld [vmem:[%s1 + $0x30] sm:$0xff]
  %v36 = vld [vmem:[%s1 + $0x38] sm:$0xff]
  %v37 = vld [vmem:[%s1 + $0x40] sm:$0xff]
  %v38 = vld [vmem:[%s1 + $0x48] sm:$0xff]
  %v39 = vld [vmem:[%s1 + $0x50] sm:$0xff]
  %v40 = vld [vmem:[%s1 + $0x58] sm:$0xff]
  %v41 = vld [vmem:[%s1 + $0x60] sm:$0xff]
  %v42 = vld [vmem:[%s1 + $0x68] sm:$0xff]
  %v43 = vld [vmem:[%s1 + $0x70] sm:$0xff]
  %v44 = vld [vmem:[%s1 + $0x78] sm:$0xff]
  %v45 = vld [vmem:[%s1 + $0x80] sm:$0xff]
  %v46 = vld [vmem:[%s1 + $0x88] sm:$0xff]
  %v47 = vld [vmem:[%s1 + $0x90] sm:$0xff]
  %v48 = vld [vmem:[%s1 + $0x98] sm:$0xff]
  %v49 = vld [vmem:[%s1 + $0xa0] sm:$0xff]
  %v50 = vld [vmem:[%s1 + $0xa8] sm:$0xff]
  %v51 = vld [vmem:[%s1 + $0xb0] sm:$0xff]
  %v52 = vld [vmem:[%s1 + $0xb8] sm:$0xff]
  %v53 = vld [vmem:[%s1 + $0xc0] sm:$0xff]
  %v54 = vld [vmem:[%s1 + $0xc8] sm:$0xff]
  %v55 = vld [vmem:[%s1 + $0xd0] sm:$0xff]
  %v56 = vld [vmem:[%s1 + $0xd8] sm:$0xff]
  %v57 = vld [vmem:[%s1 + $0xe0] sm:$0xff]
  %v58 = vld [vmem:[%s1 + $0xe8] sm:$0xff]
  %v59 = vld [vmem:[%s1 + $0xf0] sm:$0xff]
  %v60 = vld [vmem:[%s1 + $0xf8] sm:$0xff]
  %v61 = vld [vmem:[%s1 + $0x100] sm:$0xff]
  %v62 = vld [vmem:[%s1 + $0x108] sm:$0xff]
  %v63 = vld [vmem:[%s1 + $0x110] sm:$0xff]
  %v64 = vld [vmem:[%s1 + $0x118] sm:$0xff]
  %v65 = vld [vmem:[%s1 + $0x120] sm:$0xff]
  %v66 = vld [vmem:[%s1 + $0x128] sm:$0xff]
  %v67 = vld [vmem:[%s1 + $0x130] sm:$0xff]
  %v68 = vld [vmem:[%s1 + $0x138] sm:$0xff]
  %v69 = vld [vmem:[%s1 + $0x140] sm:$0xff]
  %v70 = vld [vmem:[%s1 + $0x148] sm:$0xff]
  %v71 = vld [vmem:[%s1 + $0x150] sm:$0xff]
  %v72 = vld [vmem:[%s1 + $0x158] sm:$0xff]
  %v73 = vld [vmem:[%s1 + $0x160] sm:$0xff]
  %v74 = vld [vmem:[%s1 + $0x168] sm:$0xff]
  %v75 = vld [vmem:[%s1 + $0x170] sm:$0xff]
  %v76 = vld [vmem:[%s1 + $0x178] sm:$0xff]
  %v77 = vld [vmem:[%s1 + $0x180] sm:$0xff]
  %v78 = vld [vmem:[%s1 + $0x188] sm:$0xff]
  %v79 = vld [vmem:[%s1 + $0x190] sm:$0xff]
  %v80 = vld [vmem:[%s1 + $0x198] sm:$0xff]
  %v81 = vld [vmem:[%s1 + $0x1a0] sm:$0xff]
  %v82 = vld [vmem:[%s1 + $0x1a8] sm:$0xff]
  %v83 = vld [vmem:[%s1 + $0x1b0] sm:$0xff]
  %v84 = vld [vmem:[%s1 + $0x1b8] sm:$0xff]
  %v85 = vld [vmem:[%s1 + $0x1c0] sm:$0xff]
  %v86 = vld [vmem:[%s1 + $0x1c8] sm:$0xff]
  %v87 = vld [vmem:[%s1 + $0x1d0] sm:$0xff]
  %v88 = vld [vmem:[%s1 + $0x1d8] sm:$0xff]
  %v89 = vld [vmem:[%s1 + $0x1e0] sm:$0xff]
  %v90 = vld [vmem:[%s1 + $0x1e8] sm:$0xff]
  %v91 = vld [vmem:[%s1 + $0x1f0] sm:$0xff]
  %v92 = vld [vmem:[%s1 + $0x1f8] sm:$0xff]
  %93 = vmatprep.subr.mxu0 %v90
  %94 = vmatpush1.msra.mxu0 %v89
  %95 = vmatprep.subr.mxu0 %v86
  %96 = vmatpush1.msra.mxu0 %v85
  %97 = vmatprep.subr.mxu0 %v82
  %98 = vmatpush1.msra.mxu0 %v81
  %99 = vmatprep.subr.mxu0 %v78
  %100 = vmatpush1.msra.mxu0 %v77
  %101 = vmatprep.subr.mxu0 %v74
  %102 = vmatpush1.msra.mxu0 %v73
  %103 = vmatprep.subr.mxu0 %v70
  %104 = vmatpush1.msra.mxu0 %v69
  %105 = vmatprep.subr.mxu0 %v66
  %106 = vmatpush1.msra.mxu0 %v65
  %107 = vmatprep.subr.mxu0 %v62
  %108 = vmatpush1.msra.mxu0 %v61
  %109 = vmatprep.subr.mxu0 %v58
  %110 = vmatpush1.msra.mxu0 %v57
  %111 = vmatprep.subr.mxu0 %v54
  %112 = vmatpush1.msra.mxu0 %v53
  %113 = vmatprep.subr.mxu0 %v50
  %114 = vmatpush1.msra.mxu0 %v49
  %115 = vmatprep.subr.mxu0 %v46
  %116 = vmatpush1.msra.mxu0 %v45
  %117 = vmatprep.subr.mxu0 %v42
  %118 = vmatpush1.msra.mxu0 %v41
  %119 = vmatprep.subr.mxu0 %v38
  %120 = vmatpush1.msra.mxu0 %v37
  %121 = vmatprep.subr.mxu0 %v34
  %122 = vmatpush1.msra.mxu0 %v33
  %123 = vmatprep.subr.mxu0 %v30
  %124 = vmatpush1.msra.mxu0 %v29
  %125 = vmatprep.subr.mxu0 0.0
  %126 = vmatpush2.msra.mxu0 0.0
  %127 = vmatprep.subr.mxu0 0.0
  %128 = vmatpush2.msra.mxu0 0.0
  %129 = vmatprep.subr.mxu0 0.0
  %130 = vmatpush2.msra.mxu0 0.0
  %131 = vmatprep.subr.mxu0 0.0
  %132 = vmatpush2.msra.mxu0 0.0
  %133 = vmatprep.subr.mxu0 0.0
  %134 = vmatpush2.msra.mxu0 0.0
  %135 = vmatprep.subr.mxu0 0.0
  %136 = vmatpush2.msra.mxu0 0.0
  %137 = vmatprep.subr.mxu0 0.0
  %138 = vmatpush2.msra.mxu0 0.0
  %139 = vmatprep.subr.mxu0 0.0
  %140 = vmatpush2.msra.mxu0 0.0
  %141 = vmatprep.subr.mxu0 0.0
  %142 = vmatpush2.msra.mxu0 0.0
  %143 = vmatprep.subr.mxu0 0.0
  %144 = vmatpush2.msra.mxu0 0.0
  %145 = vmatprep.subr.mxu0 0.0
  %146 = vmatpush2.msra.mxu0 0.0
  %147 = vmatprep.subr.mxu0 0.0
  %148 = vmatpush2.msra.mxu0 0.0
  %149 = vmatprep.subr.mxu0 0.0
  %150 = vmatpush2.msra.mxu0 0.0
  %151 = vmatprep.subr.mxu0 0.0
  %152 = vmatpush2.msra.mxu0 0.0
  %153 = vmatprep.subr.mxu0 0.0
  %154 = vmatpush2.msra.mxu0 0.0
  %155 = vmatprep.subr.mxu0 0.0
  %156 = vmatpush2.msra.mxu0 0.0
  %157 = vmatprep.mubr.f32.mxu0 0.0
  %158 = vmatmul.mubr.f32.gmra.mxu0 0.0
  %v159 = vpop.f32.mrf.mxu0
  %v160 = vadd.f32 0.0, %v159
  %v161 = vpop.f32.mrf.mxu0
  %v162 = vadd.f32 0.0, %v161
  %163 = vdwg.mxu0
  %164 = vmatprep.subr.mxu0 %v92
  %165 = vmatpush1.msra.mxu0 %v91
  %166 = vmatprep.subr.mxu0 %v88
  %167 = vmatpush1.msra.mxu0 %v87
  %168 = vmatprep.subr.mxu0 %v84
  %169 = vmatpush1.msra.mxu0 %v83
  %170 = vmatprep.subr.mxu0 %v80
  %171 = vmatpush1.msra.mxu0 %v79
  %172 = vmatprep.subr.mxu0 %v76
  %173 = vmatpush1.msra.mxu0 %v75
  %174 = vmatprep.subr.mxu0 %v72
  %175 = vmatpush1.msra.mxu0 %v71
  %176 = vmatprep.subr.mxu0 %v68
  %177 = vmatpush1.msra.mxu0 %v67
  %178 = vmatprep.subr.mxu0 %v64
  %179 = vmatpush1.msra.mxu0 %v63
  %180 = vmatprep.subr.mxu0 %v60
  %181 = vmatpush1.msra.mxu0 %v59
  %182 = vmatprep.subr.mxu0 %v56
  %183 = vmatpush1.msra.mxu0 %v55
  %184 = vmatprep.subr.mxu0 %v52
  %185 = vmatpush1.msra.mxu0 %v51
  %186 = vmatprep.subr.mxu0 %v48
  %187 = vmatpush1.msra.mxu0 %v47
  %188 = vmatprep.subr.mxu0 %v44
  %189 = vmatpush1.msra.mxu0 %v43
  %190 = vmatprep.subr.mxu0 %v40
  %191 = vmatpush1.msra.mxu0 %v39
  %192 = vmatprep.subr.mxu0 %v36
  %193 = vmatpush1.msra.mxu0 %v35
  %194 = vmatprep.subr.mxu0 %v32
  %195 = vmatpush1.msra.mxu0 %v31
  %196 = vmatprep.subr.mxu0 0.0
  %197 = vmatpush2.msra.mxu0 0.0
  %198 = vmatprep.subr.mxu0 0.0
  %199 = vmatpush2.msra.mxu0 0.0
  %200 = vmatprep.subr.mxu0 0.0
  %201 = vmatpush2.msra.mxu0 0.0
  %202 = vmatprep.subr.mxu0 0.0
  %203 = vmatpush2.msra.mxu0 0.0
  %204 = vmatprep.subr.mxu0 0.0
  %205 = vmatpush2.msra.mxu0 0.0
  %206 = vmatprep.subr.mxu0 0.0
  %207 = vmatpush2.msra.mxu0 0.0
  %208 = vmatprep.subr.mxu0 0.0
  %209 = vmatpush2.msra.mxu0 0.0
  %210 = vmatprep.subr.mxu0 0.0
  %211 = vmatpush2.msra.mxu0 0.0
  %212 = vmatprep.subr.mxu0 0.0
  %213 = vmatpush2.msra.mxu0 0.0
  %214 = vmatprep.subr.mxu0 0.0
  %215 = vmatpush2.msra.mxu0 0.0
  %216 = vmatprep.subr.mxu0 0.0
  %217 = vmatpush2.msra.mxu0 0.0
  %218 = vmatprep.subr.mxu0 0.0
  %219 = vmatpush2.msra.mxu0 0.0
  %220 = vmatprep.subr.mxu0 0.0
  %221 = vmatpush2.msra.mxu0 0.0
  %222 = vmatprep.subr.mxu0 0.0
  %223 = vmatpush2.msra.mxu0 0.0
  %224 = vmatprep.subr.mxu0 0.0
  %225 = vmatpush2.msra.mxu0 0.0
  %226 = vmatprep.subr.mxu0 0.0
  %227 = vmatpush2.msra.mxu0 0.0
  %228 = vmatprep.mubr.f32.mxu0 0.0
  %229 = vmatmul.mubr.f32.gmra.mxu0 0.0
  %v230 = vpop.f32.mrf.mxu0
  %v231 = vadd.f32 0.0, %v230
  %v232 = vpop.f32.mrf.mxu0
  %v233 = vadd.f32 0.0, %v232
  %234 = vdwg.mxu0
  %v239 = vcombine.low %v160, %v162
  %v240 = vcombine.high %v160, %v162
  %v241 = vcombine.low %v231, %v233
  %v242 = vcombine.high %v231, %v233
  %v244 = vunpack.c.l.s4 1966171168
  %v245 = vunpack.c.0.s8 %v244
  %v246 = vlaneseq
  %v247 = vshrl.u32 %v246, 7
  %v248 = vsub.s32 %v245, %v247
  %v249 = vrot.slane %v239, %v248
  %v251 = vunpack.c.l.s4 1966171168
  %v252 = vunpack.c.0.s8 %v251
  %v253 = vlaneseq
  %v254 = vshrl.u32 %v253, 7
  %v255 = vsub.s32 %v252, %v254
  %v256 = vrot.slane %v240, %v255
  %v258 = vunpack.c.l.s4 1966171168
  %v259 = vunpack.c.0.s8 %v258
  %v260 = vlaneseq
  %v261 = vshrl.u32 %v260, 7
  %v262 = vsub.s32 %v259, %v261
  %v263 = vrot.slane %v241, %v262
  %v265 = vunpack.c.l.s4 1966171168
  %v266 = vunpack.c.0.s8 %v265
  %v267 = vlaneseq
  %v268 = vshrl.u32 %v267, 7
  %v269 = vsub.s32 %v266, %v268
  %v270 = vrot.slane %v242, %v269
  %v271 = vcombine.low %v249, %v263
  %v272 = vcombine.high %v249, %v263
  %v273 = vcombine.low %v256, %v270
  %v274 = vcombine.high %v256, %v270
  %v276 = vunpack.c.l.s4 1966171168
  %v277 = vunpack.c.0.s8 %v276
  %v278 = vlaneseq
  %v279 = vshrl.u32 %v278, 7
  %v280 = vsub.s32 %v277, %v279
  %v281 = vrot.slane %v271, %v280
  %v283 = vunpack.c.l.s4 1966171168
  %v284 = vunpack.c.0.s8 %v283
  %v285 = vlaneseq
  %v286 = vshrl.u32 %v285, 7
  %v287 = vsub.s32 %v284, %v286
  %v288 = vrot.slane %v273, %v287
  %v290 = vunpack.c.l.s4 1966171168
  %v291 = vunpack.c.0.s8 %v290
  %v292 = vlaneseq
  %v293 = vshrl.u32 %v292, 7
  %v294 = vsub.s32 %v291, %v293
  %v295 = vrot.slane %v272, %v294
  %v297 = vunpack.c.l.s4 1966171168
  %v298 = vunpack.c.0.s8 %v297
  %v299 = vlaneseq
  %v300 = vshrl.u32 %v299, 7
  %v301 = vsub.s32 %v298, %v300
  %v302 = vrot.slane %v274, %v301
  %v303 = vcombine.high %v281, %v281
  %v304 = vcombine.high %v288, %v288
  %v305 = vcombine.high %v295, %v295
  %v306 = vcombine.high %v302, %v302
  %v315 = vadd.f32 %v14, %v281
  %v316 = vadd.f32 %v16, %v295
  %v317 = vadd.f32 %v18, %v303
  %v318 = vadd.f32 %v20, %v305
  %v319 = vadd.f32 %v22, %v288
  %v320 = vadd.f32 %v24, %v302
  %v321 = vadd.f32 %v26, %v304
  %v322 = vadd.f32 %v28, %v306
  %v323 = vxor.u32 %v315, 2147483648
  %v324 = vxor.u32 %v316, 2147483648
  %v325 = vxor.u32 %v317, 2147483648
  %v326 = vxor.u32 %v318, 2147483648
  %v327 = vxor.u32 %v319, 2147483648
  %v328 = vxor.u32 %v320, 2147483648
  %v329 = vxor.u32 %v321, 2147483648
  %v330 = vxor.u32 %v322, 2147483648
  %v331 = vmul.f32 %v323, 1.442695
  %v332 = vpow.pop %v331
  %v333 = vmul.f32 %v324, 1.442695
  %v334 = vpow.pop %v333
  %v335 = vmul.f32 %v325, 1.442695
  %v336 = vpow.pop %v335
  %v337 = vmul.f32 %v326, 1.442695
  %v338 = vpow.pop %v337
  %v339 = vmul.f32 %v327, 1.442695
  %v340 = vpow.pop %v339
  %v341 = vmul.f32 %v328, 1.442695
  %v342 = vpow.pop %v341
  %v343 = vmul.f32 %v329, 1.442695
  %v344 = vpow.pop %v343
  %v345 = vmul.f32 %v330, 1.442695
  %v346 = vpow.pop %v345
  %v347 = vadd.f32 %v332, 1.0
  %v348 = vadd.f32 %v334, 1.0
  %v349 = vadd.f32 %v336, 1.0
  %v350 = vadd.f32 %v338, 1.0
  %v351 = vadd.f32 %v340, 1.0
  %v352 = vadd.f32 %v342, 1.0
  %v353 = vadd.f32 %v344, 1.0
  %v354 = vadd.f32 %v346, 1.0
  %v355 = vrcp.pop %v347
  %v356 = vmul.f32 1.0, %v355
  %v357 = vrcp.pop %v348
  %v358 = vmul.f32 1.0, %v357
  %v359 = vrcp.pop %v349
  %v360 = vmul.f32 1.0, %v359
  %v361 = vrcp.pop %v350
  %v362 = vmul.f32 1.0, %v361
  %v363 = vrcp.pop %v351
  %v364 = vmul.f32 1.0, %v363
  %v365 = vrcp.pop %v352
  %v366 = vmul.f32 1.0, %v365
  %v367 = vrcp.pop %v353
  %v368 = vmul.f32 1.0, %v367
  %v369 = vrcp.pop %v354
  %v370 = vmul.f32 1.0, %v369
  %v379 = vrot.slane %v315, 1
  %v380 = vrot.slane %v316, 1
  %v381 = vrot.slane %v317, 1
  %v382 = vrot.slane %v318, 1
  %v383 = vrot.slane %v319, 1
  %v384 = vrot.slane %v320, 1
  %v385 = vrot.slane %v321, 1
  %v386 = vrot.slane %v322, 1
  %v395 = vxor.u32 %v379, 2147483648
  %v396 = vxor.u32 %v380, 2147483648
  %v397 = vxor.u32 %v381, 2147483648
  %v398 = vxor.u32 %v382, 2147483648
  %v399 = vxor.u32 %v383, 2147483648
  %v400 = vxor.u32 %v384, 2147483648
  %v401 = vxor.u32 %v385, 2147483648
  %v402 = vxor.u32 %v386, 2147483648
  %v403 = vmul.f32 %v395, 1.442695
  %v404 = vpow.pop %v403
  %v405 = vmul.f32 %v396, 1.442695
  %v406 = vpow.pop %v405
  %v407 = vmul.f32 %v397, 1.442695
  %v408 = vpow.pop %v407
  %v409 = vmul.f32 %v398, 1.442695
  %v410 = vpow.pop %v409
  %v411 = vmul.f32 %v399, 1.442695
  %v412 = vpow.pop %v411
  %v413 = vmul.f32 %v400, 1.442695
  %v414 = vpow.pop %v413
  %v415 = vmul.f32 %v401, 1.442695
  %v416 = vpow.pop %v415
  %v417 = vmul.f32 %v402, 1.442695
  %v418 = vpow.pop %v417
  %v419 = vadd.f32 %v404, 1.0
  %v420 = vadd.f32 %v406, 1.0
  %v421 = vadd.f32 %v408, 1.0
  %v422 = vadd.f32 %v410, 1.0
  %v423 = vadd.f32 %v412, 1.0
  %v424 = vadd.f32 %v414, 1.0
  %v425 = vadd.f32 %v416, 1.0
  %v426 = vadd.f32 %v418, 1.0
  %v427 = vrcp.pop %v419
  %v428 = vmul.f32 1.0, %v427
  %v429 = vrcp.pop %v420
  %v430 = vmul.f32 1.0, %v429
  %v431 = vrcp.pop %v421
  %v432 = vmul.f32 1.0, %v431
  %v433 = vrcp.pop %v422
  %v434 = vmul.f32 1.0, %v433
  %v435 = vrcp.pop %v423
  %v436 = vmul.f32 1.0, %v435
  %v437 = vrcp.pop %v424
  %v438 = vmul.f32 1.0, %v437
  %v439 = vrcp.pop %v425
  %v440 = vmul.f32 1.0, %v439
  %v441 = vrcp.pop %v426
  %v442 = vmul.f32 1.0, %v441
  %v443 = vrot.slane %v315, 2
  %v444 = vrot.slane %v316, 2
  %v445 = vrot.slane %v317, 2
  %v446 = vrot.slane %v318, 2
  %v447 = vrot.slane %v319, 2
  %v448 = vrot.slane %v320, 2
  %v449 = vrot.slane %v321, 2
  %v450 = vrot.slane %v322, 2
  %v459 = vtanh.pop %v443
  %v460 = vtanh.pop %v444
  %v461 = vtanh.pop %v445
  %v462 = vtanh.pop %v446
  %v463 = vtanh.pop %v447
  %v464 = vtanh.pop %v448
  %v465 = vtanh.pop %v449
  %v466 = vtanh.pop %v450
  %v467 = vrot.slane %v315, 3
  %v468 = vrot.slane %v316, 3
  %v469 = vrot.slane %v317, 3
  %v470 = vrot.slane %v318, 3
  %v471 = vrot.slane %v319, 3
  %v472 = vrot.slane %v320, 3
  %v473 = vrot.slane %v321, 3
  %v474 = vrot.slane %v322, 3
  %v483 = vxor.u32 %v467, 2147483648
  %v484 = vxor.u32 %v468, 2147483648
  %v485 = vxor.u32 %v469, 2147483648
  %v486 = vxor.u32 %v470, 2147483648
  %v487 = vxor.u32 %v471, 2147483648
  %v488 = vxor.u32 %v472, 2147483648
  %v489 = vxor.u32 %v473, 2147483648
  %v490 = vxor.u32 %v474, 2147483648
  %v491 = vmul.f32 %v483, 1.442695
  %v492 = vpow.pop %v491
  %v493 = vmul.f32 %v484, 1.442695
  %v494 = vpow.pop %v493
  %v495 = vmul.f32 %v485, 1.442695
  %v496 = vpow.pop %v495
  %v497 = vmul.f32 %v486, 1.442695
  %v498 = vpow.pop %v497
  %v499 = vmul.f32 %v487, 1.442695
  %v500 = vpow.pop %v499
  %v501 = vmul.f32 %v488, 1.442695
  %v502 = vpow.pop %v501
  %v503 = vmul.f32 %v489, 1.442695
  %v504 = vpow.pop %v503
  %v505 = vmul.f32 %v490, 1.442695
  %v506 = vpow.pop %v505
  %v507 = vadd.f32 %v492, 1.0
  %v508 = vadd.f32 %v494, 1.0
  %v509 = vadd.f32 %v496, 1.0
  %v510 = vadd.f32 %v498, 1.0
  %v511 = vadd.f32 %v500, 1.0
  %v512 = vadd.f32 %v502, 1.0
  %v513 = vadd.f32 %v504, 1.0
  %v514 = vadd.f32 %v506, 1.0
  %v515 = vrcp.pop %v507
  %v516 = vmul.f32 1.0, %v515
  %v517 = vrcp.pop %v508
  %v518 = vmul.f32 1.0, %v517
  %v519 = vrcp.pop %v509
  %v520 = vmul.f32 1.0, %v519
  %v521 = vrcp.pop %v510
  %v522 = vmul.f32 1.0, %v521
  %v523 = vrcp.pop %v511
  %v524 = vmul.f32 1.0, %v523
  %v525 = vrcp.pop %v512
  %v526 = vmul.f32 1.0, %v525
  %v527 = vrcp.pop %v513
  %v528 = vmul.f32 1.0, %v527
  %v529 = vrcp.pop %v514
  %v530 = vmul.f32 1.0, %v529
  %v531 = vmul.f32 %v428, 0.0
  %v532 = vmul.f32 %v430, 0.0
  %v533 = vmul.f32 %v432, 0.0
  %v534 = vmul.f32 %v434, 0.0
  %v535 = vmul.f32 %v436, 0.0
  %v536 = vmul.f32 %v438, 0.0
  %v537 = vmul.f32 %v440, 0.0
  %v538 = vmul.f32 %v442, 0.0
  %v539 = vmul.f32 %v356, %v459
  %v540 = vmul.f32 %v358, %v460
  %v541 = vmul.f32 %v360, %v461
  %v542 = vmul.f32 %v362, %v462
  %v543 = vmul.f32 %v364, %v463
  %v544 = vmul.f32 %v366, %v464
  %v545 = vmul.f32 %v368, %v465
  %v546 = vmul.f32 %v370, %v466
  %v547 = vadd.f32 %v531, %v539
  %v548 = vadd.f32 %v532, %v540
  %v549 = vadd.f32 %v533, %v541
  %v550 = vadd.f32 %v534, %v542
  %v551 = vadd.f32 %v535, %v543
  %v552 = vadd.f32 %v536, %v544
  %v553 = vadd.f32 %v537, %v545
  %v554 = vadd.f32 %v538, %v546
  %v555 = vtanh.pop %v547
  %v556 = vtanh.pop %v548
  %v557 = vtanh.pop %v549
  %v558 = vtanh.pop %v550
  %v559 = vtanh.pop %v551
  %v560 = vtanh.pop %v552
  %v561 = vtanh.pop %v553
  %v562 = vtanh.pop %v554
  %v563 = vmul.f32 %v516, %v555
  %v564 = vmul.f32 %v518, %v556
  %v565 = vmul.f32 %v520, %v557
  %v566 = vmul.f32 %v522, %v558
  %v567 = vmul.f32 %v524, %v559
  %v568 = vmul.f32 %v526, %v560
  %v569 = vmul.f32 %v528, %v561
  %v570 = vmul.f32 %v530, %v562
  %571 = vst [vmem:[%s2] sm:$0x1] %v563
  %572 = vst [vmem:[%s2 + $0x8] sm:$0x1] %v564
  %573 = vst [vmem:[%s2 + $0x10] sm:$0x1] %v565
  %574 = vst [vmem:[%s2 + $0x18] sm:$0x1] %v566
  %575 = vst [vmem:[%s2 + $0x20] sm:$0x1] %v567
  %576 = vst [vmem:[%s2 + $0x28] sm:$0x1] %v568
  %577 = vst [vmem:[%s2 + $0x30] sm:$0x1] %v569
  %578 = vst [vmem:[%s2 + $0x38] sm:$0x1] %v570
  %s579 = scalar_lea.vmem %s0, 1
  %v580 = vld [vmem:[%s579] ss:$8 sm:$0xf]
  %s581 = scalar_lea.vmem %s0, 33
  %v582 = vld [vmem:[%s581] ss:$8 sm:$0xf]
  %s583 = scalar_lea.vmem %s0, 65
  %v584 = vld [vmem:[%s583] ss:$8 sm:$0xf]
  %s585 = scalar_lea.vmem %s0, 97
  %v586 = vld [vmem:[%s585] ss:$8 sm:$0xf]
  %s587 = scalar_lea.vmem %s0, 129
  %v588 = vld [vmem:[%s587] ss:$8 sm:$0xf]
  %s589 = scalar_lea.vmem %s0, 161
  %v590 = vld [vmem:[%s589] ss:$8 sm:$0xf]
  %s591 = scalar_lea.vmem %s0, 193
  %v592 = vld [vmem:[%s591] ss:$8 sm:$0xf]
  %s593 = scalar_lea.vmem %s0, 225
  %v594 = vld [vmem:[%s593] ss:$8 sm:$0xf]
  %v595 = vld [vmem:[%s1] sm:$0xff]
  %v596 = vld [vmem:[%s1 + $0x8] sm:$0xff]
  %v597 = vld [vmem:[%s1 + $0x10] sm:$0xff]
  %v598 = vld [vmem:[%s1 + $0x18] sm:$0xff]
  %v599 = vld [vmem:[%s1 + $0x20] sm:$0xff]
  %v600 = vld [vmem:[%s1 + $0x28] sm:$0xff]
  %v601 = vld [vmem:[%s1 + $0x30] sm:$0xff]
  %v602 = vld [vmem:[%s1 + $0x38] sm:$0xff]
  %v603 = vld [vmem:[%s1 + $0x40] sm:$0xff]
  %v604 = vld [vmem:[%s1 + $0x48] sm:$0xff]
  %v605 = vld [vmem:[%s1 + $0x50] sm:$0xff]
  %v606 = vld [vmem:[%s1 + $0x58] sm:$0xff]
  %v607 = vld [vmem:[%s1 + $0x60] sm:$0xff]
  %v608 = vld [vmem:[%s1 + $0x68] sm:$0xff]
  %v609 = vld [vmem:[%s1 + $0x70] sm:$0xff]
  %v610 = vld [vmem:[%s1 + $0x78] sm:$0xff]
  %v611 = vld [vmem:[%s1 + $0x80] sm:$0xff]
  %v612 = vld [vmem:[%s1 + $0x88] sm:$0xff]
  %v613 = vld [vmem:[%s1 + $0x90] sm:$0xff]
  %v614 = vld [vmem:[%s1 + $0x98] sm:$0xff]
  %v615 = vld [vmem:[%s1 + $0xa0] sm:$0xff]
  %v616 = vld [vmem:[%s1 + $0xa8] sm:$0xff]
  %v617 = vld [vmem:[%s1 + $0xb0] sm:$0xff]
  %v618 = vld [vmem:[%s1 + $0xb8] sm:$0xff]
  %v619 = vld [vmem:[%s1 + $0xc0] sm:$0xff]
  %v620 = vld [vmem:[%s1 + $0xc8] sm:$0xff]
  %v621 = vld [vmem:[%s1 + $0xd0] sm:$0xff]
  %v622 = vld [vmem:[%s1 + $0xd8] sm:$0xff]
  %v623 = vld [vmem:[%s1 + $0xe0] sm:$0xff]
  %v624 = vld [vmem:[%s1 + $0xe8] sm:$0xff]
  %v625 = vld [vmem:[%s1 + $0xf0] sm:$0xff]
  %v626 = vld [vmem:[%s1 + $0xf8] sm:$0xff]
  %v627 = vld [vmem:[%s1 + $0x100] sm:$0xff]
  %v628 = vld [vmem:[%s1 + $0x108] sm:$0xff]
  %v629 = vld [vmem:[%s1 + $0x110] sm:$0xff]
  %v630 = vld [vmem:[%s1 + $0x118] sm:$0xff]
  %v631 = vld [vmem:[%s1 + $0x120] sm:$0xff]
  %v632 = vld [vmem:[%s1 + $0x128] sm:$0xff]
  %v633 = vld [vmem:[%s1 + $0x130] sm:$0xff]
  %v634 = vld [vmem:[%s1 + $0x138] sm:$0xff]
  %v635 = vld [vmem:[%s1 + $0x140] sm:$0xff]
  %v636 = vld [vmem:[%s1 + $0x148] sm:$0xff]
  %v637 = vld [vmem:[%s1 + $0x150] sm:$0xff]
  %v638 = vld [vmem:[%s1 + $0x158] sm:$0xff]
  %v639 = vld [vmem:[%s1 + $0x160] sm:$0xff]
  %v640 = vld [vmem:[%s1 + $0x168] sm:$0xff]
  %v641 = vld [vmem:[%s1 + $0x170] sm:$0xff]
  %v642 = vld [vmem:[%s1 + $0x178] sm:$0xff]
  %v643 = vld [vmem:[%s1 + $0x180] sm:$0xff]
  %v644 = vld [vmem:[%s1 + $0x188] sm:$0xff]
  %v645 = vld [vmem:[%s1 + $0x190] sm:$0xff]
  %v646 = vld [vmem:[%s1 + $0x198] sm:$0xff]
  %v647 = vld [vmem:[%s1 + $0x1a0] sm:$0xff]
  %v648 = vld [vmem:[%s1 + $0x1a8] sm:$0xff]
  %v649 = vld [vmem:[%s1 + $0x1b0] sm:$0xff]
  %v650 = vld [vmem:[%s1 + $0x1b8] sm:$0xff]
  %v651 = vld [vmem:[%s1 + $0x1c0] sm:$0xff]
  %v652 = vld [vmem:[%s1 + $0x1c8] sm:$0xff]
  %v653 = vld [vmem:[%s1 + $0x1d0] sm:$0xff]
  %v654 = vld [vmem:[%s1 + $0x1d8] sm:$0xff]
  %v655 = vld [vmem:[%s1 + $0x1e0] sm:$0xff]
  %v656 = vld [vmem:[%s1 + $0x1e8] sm:$0xff]
  %v657 = vld [vmem:[%s1 + $0x1f0] sm:$0xff]
  %v658 = vld [vmem:[%s1 + $0x1f8] sm:$0xff]
  %v667 = vcombine.low %v563, %v564
  %v668 = vcombine.low %v565, %v566
  %v669 = vcombine.low %v567, %v568
  %v670 = vcombine.low %v569, %v570
  %v672 = vunpack.c.l.s4 1966171168
  %v673 = vunpack.c.0.s8 %v672
  %v674 = vlaneseq
  %v675 = vshrl.u32 %v674, 7
  %v676 = vsub.s32 %v673, %v675
  %v677 = vrot.slane %v667, %v676
  %v679 = vunpack.c.l.s4 1966171168
  %v680 = vunpack.c.0.s8 %v679
  %v681 = vlaneseq
  %v682 = vshrl.u32 %v681, 7
  %v683 = vsub.s32 %v680, %v682
  %v684 = vrot.slane %v668, %v683
  %v686 = vunpack.c.l.s4 1966171168
  %v687 = vunpack.c.0.s8 %v686
  %v688 = vlaneseq
  %v689 = vshrl.u32 %v688, 7
  %v690 = vsub.s32 %v687, %v689
  %v691 = vrot.slane %v669, %v690
  %v693 = vunpack.c.l.s4 1966171168
  %v694 = vunpack.c.0.s8 %v693
  %v695 = vlaneseq
  %v696 = vshrl.u32 %v695, 7
  %v697 = vsub.s32 %v694, %v696
  %v698 = vrot.slane %v670, %v697
  %v699 = vcombine.low %v677, %v684
  %v700 = vcombine.low %v691, %v698
  %v702 = vunpack.c.l.s4 1966171168
  %v703 = vunpack.c.0.s8 %v702
  %v704 = vlaneseq
  %v705 = vshrl.u32 %v704, 7
  %v706 = vsub.s32 %v703, %v705
  %v707 = vrot.slane %v699, %v706
  %v709 = vunpack.c.l.s4 1966171168
  %v710 = vunpack.c.0.s8 %v709
  %v711 = vlaneseq
  %v712 = vshrl.u32 %v711, 7
  %v713 = vsub.s32 %v710, %v712
  %v714 = vrot.slane %v700, %v713
  %v715 = vcombine.low %v707, %v714
  %717 = vmatprep.subr.mxu0 %v656
  %718 = vmatpush1.msra.mxu0 %v655
  %719 = vmatprep.subr.mxu0 %v652
  %720 = vmatpush1.msra.mxu0 %v651
  %721 = vmatprep.subr.mxu0 %v648
  %722 = vmatpush1.msra.mxu0 %v647
  %723 = vmatprep.subr.mxu0 %v644
  %724 = vmatpush1.msra.mxu0 %v643
  %725 = vmatprep.subr.mxu0 %v640
  %726 = vmatpush1.msra.mxu0 %v639
  %727 = vmatprep.subr.mxu0 %v636
  %728 = vmatpush1.msra.mxu0 %v635
  %729 = vmatprep.subr.mxu0 %v632
  %730 = vmatpush1.msra.mxu0 %v631
  %731 = vmatprep.subr.mxu0 %v628
  %732 = vmatpush1.msra.mxu0 %v627
  %733 = vmatprep.subr.mxu0 %v624
  %734 = vmatpush1.msra.mxu0 %v623
  %735 = vmatprep.subr.mxu0 %v620
  %736 = vmatpush1.msra.mxu0 %v619
  %737 = vmatprep.subr.mxu0 %v616
  %738 = vmatpush1.msra.mxu0 %v615
  %739 = vmatprep.subr.mxu0 %v612
  %740 = vmatpush1.msra.mxu0 %v611
  %741 = vmatprep.subr.mxu0 %v608
  %742 = vmatpush1.msra.mxu0 %v607
  %743 = vmatprep.subr.mxu0 %v604
  %744 = vmatpush1.msra.mxu0 %v603
  %745 = vmatprep.subr.mxu0 %v600
  %746 = vmatpush1.msra.mxu0 %v599
  %747 = vmatprep.subr.mxu0 %v596
  %748 = vmatpush1.msra.mxu0 %v595
  %749 = vmatprep.subr.mxu0 0.0
  %750 = vmatpush2.msra.mxu0 0.0
  %751 = vmatprep.subr.mxu0 0.0
  %752 = vmatpush2.msra.mxu0 0.0
  %753 = vmatprep.subr.mxu0 0.0
  %754 = vmatpush2.msra.mxu0 0.0
  %755 = vmatprep.subr.mxu0 0.0
  %756 = vmatpush2.msra.mxu0 0.0
  %757 = vmatprep.subr.mxu0 0.0
  %758 = vmatpush2.msra.mxu0 0.0
  %759 = vmatprep.subr.mxu0 0.0
  %760 = vmatpush2.msra.mxu0 0.0
  %761 = vmatprep.subr.mxu0 0.0
  %762 = vmatpush2.msra.mxu0 0.0
  %763 = vmatprep.subr.mxu0 0.0
  %764 = vmatpush2.msra.mxu0 0.0
  %765 = vmatprep.subr.mxu0 0.0
  %766 = vmatpush2.msra.mxu0 0.0
  %767 = vmatprep.subr.mxu0 0.0
  %768 = vmatpush2.msra.mxu0 0.0
  %769 = vmatprep.subr.mxu0 0.0
  %770 = vmatpush2.msra.mxu0 0.0
  %771 = vmatprep.subr.mxu0 0.0
  %772 = vmatpush2.msra.mxu0 0.0
  %773 = vmatprep.subr.mxu0 0.0
  %774 = vmatpush2.msra.mxu0 0.0
  %775 = vmatprep.subr.mxu0 0.0
  %776 = vmatpush2.msra.mxu0 0.0
  %777 = vmatprep.subr.mxu0 0.0
  %778 = vmatpush2.msra.mxu0 0.0
  %779 = vmatprep.subr.mxu0 0.0
  %780 = vmatpush2.msra.mxu0 0.0
  %781 = vmatprep.mubr.f32.mxu0 0.0
  %782 = vmatmul.mubr.f32.gmra.mxu0 %v715
  %v783 = vpop.f32.mrf.mxu0
  %v784 = vadd.f32 0.0, %v783
  %v785 = vpop.f32.mrf.mxu0
  %v786 = vadd.f32 0.0, %v785
  %787 = vdwg.mxu0
  %788 = vmatprep.subr.mxu0 %v658
  %789 = vmatpush1.msra.mxu0 %v657
  %790 = vmatprep.subr.mxu0 %v654
  %791 = vmatpush1.msra.mxu0 %v653
  %792 = vmatprep.subr.mxu0 %v650
  %793 = vmatpush1.msra.mxu0 %v649
  %794 = vmatprep.subr.mxu0 %v646
  %795 = vmatpush1.msra.mxu0 %v645
  %796 = vmatprep.subr.mxu0 %v642
  %797 = vmatpush1.msra.mxu0 %v641
  %798 = vmatprep.subr.mxu0 %v638
  %799 = vmatpush1.msra.mxu0 %v637
  %800 = vmatprep.subr.mxu0 %v634
  %801 = vmatpush1.msra.mxu0 %v633
  %802 = vmatprep.subr.mxu0 %v630
  %803 = vmatpush1.msra.mxu0 %v629
  %804 = vmatprep.subr.mxu0 %v626
  %805 = vmatpush1.msra.mxu0 %v625
  %806 = vmatprep.subr.mxu0 %v622
  %807 = vmatpush1.msra.mxu0 %v621
  %808 = vmatprep.subr.mxu0 %v618
  %809 = vmatpush1.msra.mxu0 %v617
  %810 = vmatprep.subr.mxu0 %v614
  %811 = vmatpush1.msra.mxu0 %v613
  %812 = vmatprep.subr.mxu0 %v610
  %813 = vmatpush1.msra.mxu0 %v609
  %814 = vmatprep.subr.mxu0 %v606
  %815 = vmatpush1.msra.mxu0 %v605
  %816 = vmatprep.subr.mxu0 %v602
  %817 = vmatpush1.msra.mxu0 %v601
  %818 = vmatprep.subr.mxu0 %v598
  %819 = vmatpush1.msra.mxu0 %v597
  %820 = vmatprep.subr.mxu0 0.0
  %821 = vmatpush2.msra.mxu0 0.0
  %822 = vmatprep.subr.mxu0 0.0
  %823 = vmatpush2.msra.mxu0 0.0
  %824 = vmatprep.subr.mxu0 0.0
  %825 = vmatpush2.msra.mxu0 0.0
  %826 = vmatprep.subr.mxu0 0.0
  %827 = vmatpush2.msra.mxu0 0.0
  %828 = vmatprep.subr.mxu0 0.0
  %829 = vmatpush2.msra.mxu0 0.0
  %830 = vmatprep.subr.mxu0 0.0
  %831 = vmatpush2.msra.mxu0 0.0
  %832 = vmatprep.subr.mxu0 0.0
  %833 = vmatpush2.msra.mxu0 0.0
  %834 = vmatprep.subr.mxu0 0.0
  %835 = vmatpush2.msra.mxu0 0.0
  %836 = vmatprep.subr.mxu0 0.0
  %837 = vmatpush2.msra.mxu0 0.0
  %838 = vmatprep.subr.mxu0 0.0
  %839 = vmatpush2.msra.mxu0 0.0
  %840 = vmatprep.subr.mxu0 0.0
  %841 = vmatpush2.msra.mxu0 0.0
  %842 = vmatprep.subr.mxu0 0.0
  %843 = vmatpush2.msra.mxu0 0.0
  %844 = vmatprep.subr.mxu0 0.0
  %845 = vmatpush2.msra.mxu0 0.0
  %846 = vmatprep.subr.mxu0 0.0
  %847 = vmatpush2.msra.mxu0 0.0
  %848 = vmatprep.subr.mxu0 0.0
  %849 = vmatpush2.msra.mxu0 0.0
  %850 = vmatprep.subr.mxu0 0.0
  %851 = vmatpush2.msra.mxu0 0.0
  %852 = vmatprep.mubr.f32.mxu0 0.0
  %853 = vmatmul.mubr.f32.gmra.mxu0 %v715
  %v854 = vpop.f32.mrf.mxu0
  %v855 = vadd.f32 0.0, %v854
  %v856 = vpop.f32.mrf.mxu0
  %v857 = vadd.f32 0.0, %v856
  %858 = vdwg.mxu0
  %v863 = vcombine.low %v784, %v786
  %v864 = vcombine.high %v784, %v786
  %v865 = vcombine.low %v855, %v857
  %v866 = vcombine.high %v855, %v857
  %v868 = vunpack.c.l.s4 1966171168
  %v869 = vunpack.c.0.s8 %v868
  %v870 = vlaneseq
  %v871 = vshrl.u32 %v870, 7
  %v872 = vsub.s32 %v869, %v871
  %v873 = vrot.slane %v863, %v872
  %v875 = vunpack.c.l.s4 1966171168
  %v876 = vunpack.c.0.s8 %v875
  %v877 = vlaneseq
  %v878 = vshrl.u32 %v877, 7
  %v879 = vsub.s32 %v876, %v878
  %v880 = vrot.slane %v864, %v879
  %v882 = vunpack.c.l.s4 1966171168
  %v883 = vunpack.c.0.s8 %v882
  %v884 = vlaneseq
  %v885 = vshrl.u32 %v884, 7
  %v886 = vsub.s32 %v883, %v885
  %v887 = vrot.slane %v865, %v886
  %v889 = vunpack.c.l.s4 1966171168
  %v890 = vunpack.c.0.s8 %v889
  %v891 = vlaneseq
  %v892 = vshrl.u32 %v891, 7
  %v893 = vsub.s32 %v890, %v892
  %v894 = vrot.slane %v866, %v893
  %v895 = vcombine.low %v873, %v887
  %v896 = vcombine.high %v873, %v887
  %v897 = vcombine.low %v880, %v894
  %v898 = vcombine.high %v880, %v894
  %v900 = vunpack.c.l.s4 1966171168
  %v901 = vunpack.c.0.s8 %v900
  %v902 = vlaneseq
  %v903 = vshrl.u32 %v902, 7
  %v904 = vsub.s32 %v901, %v903
  %v905 = vrot.slane %v895, %v904
  %v907 = vunpack.c.l.s4 1966171168
  %v908 = vunpack.c.0.s8 %v907
  %v909 = vlaneseq
  %v910 = vshrl.u32 %v909, 7
  %v911 = vsub.s32 %v908, %v910
  %v912 = vrot.slane %v897, %v911
  %v914 = vunpack.c.l.s4 1966171168
  %v915 = vunpack.c.0.s8 %v914
  %v916 = vlaneseq
  %v917 = vshrl.u32 %v916, 7
  %v918 = vsub.s32 %v915, %v917
  %v919 = vrot.slane %v896, %v918
  %v921 = vunpack.c.l.s4 1966171168
  %v922 = vunpack.c.0.s8 %v921
  %v923 = vlaneseq
  %v924 = vshrl.u32 %v923, 7
  %v925 = vsub.s32 %v922, %v924
  %v926 = vrot.slane %v898, %v925
  %v927 = vcombine.high %v905, %v905
  %v928 = vcombine.high %v912, %v912
  %v929 = vcombine.high %v919, %v919
  %v930 = vcombine.high %v926, %v926
  %v939 = vadd.f32 %v580, %v905
  %v940 = vadd.f32 %v582, %v919
  %v941 = vadd.f32 %v584, %v927
  %v942 = vadd.f32 %v586, %v929
  %v943 = vadd.f32 %v588, %v912
  %v944 = vadd.f32 %v590, %v926
  %v945 = vadd.f32 %v592, %v928
  %v946 = vadd.f32 %v594, %v930
  %v947 = vxor.u32 %v939, 2147483648
  %v948 = vxor.u32 %v940, 2147483648
  %v949 = vxor.u32 %v941, 2147483648
  %v950 = vxor.u32 %v942, 2147483648
  %v951 = vxor.u32 %v943, 2147483648
  %v952 = vxor.u32 %v944, 2147483648
  %v953 = vxor.u32 %v945, 2147483648
  %v954 = vxor.u32 %v946, 2147483648
  %v955 = vmul.f32 %v947, 1.442695
  %v956 = vpow.pop %v955
  %v957 = vmul.f32 %v948, 1.442695
  %v958 = vpow.pop %v957
  %v959 = vmul.f32 %v949, 1.442695
  %v960 = vpow.pop %v959
  %v961 = vmul.f32 %v950, 1.442695
  %v962 = vpow.pop %v961
  %v963 = vmul.f32 %v951, 1.442695
  %v964 = vpow.pop %v963
  %v965 = vmul.f32 %v952, 1.442695
  %v966 = vpow.pop %v965
  %v967 = vmul.f32 %v953, 1.442695
  %v968 = vpow.pop %v967
  %v969 = vmul.f32 %v954, 1.442695
  %v970 = vpow.pop %v969
  %v971 = vadd.f32 %v956, 1.0
  %v972 = vadd.f32 %v958, 1.0
  %v973 = vadd.f32 %v960, 1.0
  %v974 = vadd.f32 %v962, 1.0
  %v975 = vadd.f32 %v964, 1.0
  %v976 = vadd.f32 %v966, 1.0
  %v977 = vadd.f32 %v968, 1.0
  %v978 = vadd.f32 %v970, 1.0
  %v979 = vrcp.pop %v971
  %v980 = vmul.f32 1.0, %v979
  %v981 = vrcp.pop %v972
  %v982 = vmul.f32 1.0, %v981
  %v983 = vrcp.pop %v973
  %v984 = vmul.f32 1.0, %v983
  %v985 = vrcp.pop %v974
  %v986 = vmul.f32 1.0, %v985
  %v987 = vrcp.pop %v975
  %v988 = vmul.f32 1.0, %v987
  %v989 = vrcp.pop %v976
  %v990 = vmul.f32 1.0, %v989
  %v991 = vrcp.pop %v977
  %v992 = vmul.f32 1.0, %v991
  %v993 = vrcp.pop %v978
  %v994 = vmul.f32 1.0, %v993
  %v1003 = vrot.slane %v939, 1
  %v1004 = vrot.slane %v940, 1
  %v1005 = vrot.slane %v941, 1
  %v1006 = vrot.slane %v942, 1
  %v1007 = vrot.slane %v943, 1
  %v1008 = vrot.slane %v944, 1
  %v1009 = vrot.slane %v945, 1
  %v1010 = vrot.slane %v946, 1
  %v1019 = vxor.u32 %v1003, 2147483648
  %v1020 = vxor.u32 %v1004, 2147483648
  %v1021 = vxor.u32 %v1005, 2147483648
  %v1022 = vxor.u32 %v1006, 2147483648
  %v1023 = vxor.u32 %v1007, 2147483648
  %v1024 = vxor.u32 %v1008, 2147483648
  %v1025 = vxor.u32 %v1009, 2147483648
  %v1026 = vxor.u32 %v1010, 2147483648
  %v1027 = vmul.f32 %v1019, 1.442695
  %v1028 = vpow.pop %v1027
  %v1029 = vmul.f32 %v1020, 1.442695
  %v1030 = vpow.pop %v1029
  %v1031 = vmul.f32 %v1021, 1.442695
  %v1032 = vpow.pop %v1031
  %v1033 = vmul.f32 %v1022, 1.442695
  %v1034 = vpow.pop %v1033
  %v1035 = vmul.f32 %v1023, 1.442695
  %v1036 = vpow.pop %v1035
  %v1037 = vmul.f32 %v1024, 1.442695
  %v1038 = vpow.pop %v1037
  %v1039 = vmul.f32 %v1025, 1.442695
  %v1040 = vpow.pop %v1039
  %v1041 = vmul.f32 %v1026, 1.442695
  %v1042 = vpow.pop %v1041
  %v1043 = vadd.f32 %v1028, 1.0
  %v1044 = vadd.f32 %v1030, 1.0
  %v1045 = vadd.f32 %v1032, 1.0
  %v1046 = vadd.f32 %v1034, 1.0
  %v1047 = vadd.f32 %v1036, 1.0
  %v1048 = vadd.f32 %v1038, 1.0
  %v1049 = vadd.f32 %v1040, 1.0
  %v1050 = vadd.f32 %v1042, 1.0
  %v1051 = vrcp.pop %v1043
  %v1052 = vmul.f32 1.0, %v1051
  %v1053 = vrcp.pop %v1044
  %v1054 = vmul.f32 1.0, %v1053
  %v1055 = vrcp.pop %v1045
  %v1056 = vmul.f32 1.0, %v1055
  %v1057 = vrcp.pop %v1046
  %v1058 = vmul.f32 1.0, %v1057
  %v1059 = vrcp.pop %v1047
  %v1060 = vmul.f32 1.0, %v1059
  %v1061 = vrcp.pop %v1048
  %v1062 = vmul.f32 1.0, %v1061
  %v1063 = vrcp.pop %v1049
  %v1064 = vmul.f32 1.0, %v1063
  %v1065 = vrcp.pop %v1050
  %v1066 = vmul.f32 1.0, %v1065
  %v1067 = vrot.slane %v939, 2
  %v1068 = vrot.slane %v940, 2
  %v1069 = vrot.slane %v941, 2
  %v1070 = vrot.slane %v942, 2
  %v1071 = vrot.slane %v943, 2
  %v1072 = vrot.slane %v944, 2
  %v1073 = vrot.slane %v945, 2
  %v1074 = vrot.slane %v946, 2
  %v1083 = vtanh.pop %v1067
  %v1084 = vtanh.pop %v1068
  %v1085 = vtanh.pop %v1069
  %v1086 = vtanh.pop %v1070
  %v1087 = vtanh.pop %v1071
  %v1088 = vtanh.pop %v1072
  %v1089 = vtanh.pop %v1073
  %v1090 = vtanh.pop %v1074
  %v1091 = vrot.slane %v939, 3
  %v1092 = vrot.slane %v940, 3
  %v1093 = vrot.slane %v941, 3
  %v1094 = vrot.slane %v942, 3
  %v1095 = vrot.slane %v943, 3
  %v1096 = vrot.slane %v944, 3
  %v1097 = vrot.slane %v945, 3
  %v1098 = vrot.slane %v946, 3
  %v1107 = vxor.u32 %v1091, 2147483648
  %v1108 = vxor.u32 %v1092, 2147483648
  %v1109 = vxor.u32 %v1093, 2147483648
  %v1110 = vxor.u32 %v1094, 2147483648
  %v1111 = vxor.u32 %v1095, 2147483648
  %v1112 = vxor.u32 %v1096, 2147483648
  %v1113 = vxor.u32 %v1097, 2147483648
  %v1114 = vxor.u32 %v1098, 2147483648
  %v1115 = vmul.f32 %v1107, 1.442695
  %v1116 = vpow.pop %v1115
  %v1117 = vmul.f32 %v1108, 1.442695
  %v1118 = vpow.pop %v1117
  %v1119 = vmul.f32 %v1109, 1.442695
  %v1120 = vpow.pop %v1119
  %v1121 = vmul.f32 %v1110, 1.442695
  %v1122 = vpow.pop %v1121
  %v1123 = vmul.f32 %v1111, 1.442695
  %v1124 = vpow.pop %v1123
  %v1125 = vmul.f32 %v1112, 1.442695
  %v1126 = vpow.pop %v1125
  %v1127 = vmul.f32 %v1113, 1.442695
  %v1128 = vpow.pop %v1127
  %v1129 = vmul.f32 %v1114, 1.442695
  %v1130 = vpow.pop %v1129
  %v1131 = vadd.f32 %v1116, 1.0
  %v1132 = vadd.f32 %v1118, 1.0
  %v1133 = vadd.f32 %v1120, 1.0
  %v1134 = vadd.f32 %v1122, 1.0
  %v1135 = vadd.f32 %v1124, 1.0
  %v1136 = vadd.f32 %v1126, 1.0
  %v1137 = vadd.f32 %v1128, 1.0
  %v1138 = vadd.f32 %v1130, 1.0
  %v1139 = vrcp.pop %v1131
  %v1140 = vmul.f32 1.0, %v1139
  %v1141 = vrcp.pop %v1132
  %v1142 = vmul.f32 1.0, %v1141
  %v1143 = vrcp.pop %v1133
  %v1144 = vmul.f32 1.0, %v1143
  %v1145 = vrcp.pop %v1134
  %v1146 = vmul.f32 1.0, %v1145
  %v1147 = vrcp.pop %v1135
  %v1148 = vmul.f32 1.0, %v1147
  %v1149 = vrcp.pop %v1136
  %v1150 = vmul.f32 1.0, %v1149
  %v1151 = vrcp.pop %v1137
  %v1152 = vmul.f32 1.0, %v1151
  %v1153 = vrcp.pop %v1138
  %v1154 = vmul.f32 1.0, %v1153
  %v1155 = vmul.f32 %v1052, %v547
  %v1156 = vmul.f32 %v1054, %v548
  %v1157 = vmul.f32 %v1056, %v549
  %v1158 = vmul.f32 %v1058, %v550
  %v1159 = vmul.f32 %v1060, %v551
  %v1160 = vmul.f32 %v1062, %v552
  %v1161 = vmul.f32 %v1064, %v553
  %v1162 = vmul.f32 %v1066, %v554
  %v1163 = vmul.f32 %v980, %v1083
  %v1164 = vmul.f32 %v982, %v1084
  %v1165 = vmul.f32 %v984, %v1085
  %v1166 = vmul.f32 %v986, %v1086
  %v1167 = vmul.f32 %v988, %v1087
  %v1168 = vmul.f32 %v990, %v1088
  %v1169 = vmul.f32 %v992, %v1089
  %v1170 = vmul.f32 %v994, %v1090
  %v1171 = vadd.f32 %v1155, %v1163
  %v1172 = vadd.f32 %v1156, %v1164
  %v1173 = vadd.f32 %v1157, %v1165
  %v1174 = vadd.f32 %v1158, %v1166
  %v1175 = vadd.f32 %v1159, %v1167
  %v1176 = vadd.f32 %v1160, %v1168
  %v1177 = vadd.f32 %v1161, %v1169
  %v1178 = vadd.f32 %v1162, %v1170
  %v1179 = vtanh.pop %v1171
  %v1180 = vtanh.pop %v1172
  %v1181 = vtanh.pop %v1173
  %v1182 = vtanh.pop %v1174
  %v1183 = vtanh.pop %v1175
  %v1184 = vtanh.pop %v1176
  %v1185 = vtanh.pop %v1177
  %v1186 = vtanh.pop %v1178
  %v1187 = vmul.f32 %v1140, %v1179
  %v1188 = vmul.f32 %v1142, %v1180
  %v1189 = vmul.f32 %v1144, %v1181
  %v1190 = vmul.f32 %v1146, %v1182
  %v1191 = vmul.f32 %v1148, %v1183
  %v1192 = vmul.f32 %v1150, %v1184
  %v1193 = vmul.f32 %v1152, %v1185
  %v1194 = vmul.f32 %v1154, %v1186
  %1195 = vst [vmem:[%s2 + $0x1] sm:$0x1] %v1187
  %1196 = vst [vmem:[%s2 + $0x9] sm:$0x1] %v1188
  %1197 = vst [vmem:[%s2 + $0x11] sm:$0x1] %v1189
  %1198 = vst [vmem:[%s2 + $0x19] sm:$0x1] %v1190
  %1199 = vst [vmem:[%s2 + $0x21] sm:$0x1] %v1191
  %1200 = vst [vmem:[%s2 + $0x29] sm:$0x1] %v1192
  %1201 = vst [vmem:[%s2 + $0x31] sm:$0x1] %v1193
  %1202 = vst [vmem:[%s2 + $0x39] sm:$0x1] %v1194
  %s1203 = scalar_lea.vmem %s0, 2
  %v1204 = vld [vmem:[%s1203] ss:$8 sm:$0xf]
  %s1205 = scalar_lea.vmem %s0, 34
  %v1206 = vld [vmem:[%s1205] ss:$8 sm:$0xf]
  %s1207 = scalar_lea.vmem %s0, 66
  %v1208 = vld [vmem:[%s1207] ss:$8 sm:$0xf]
  %s1209 = scalar_lea.vmem %s0, 98
  %v1210 = vld [vmem:[%s1209] ss:$8 sm:$0xf]
  %s1211 = scalar_lea.vmem %s0, 130
  %v1212 = vld [vmem:[%s1211] ss:$8 sm:$0xf]
  %s1213 = scalar_lea.vmem %s0, 162
  %v1214 = vld [vmem:[%s1213] ss:$8 sm:$0xf]
  %s1215 = scalar_lea.vmem %s0, 194
  %v1216 = vld [vmem:[%s1215] ss:$8 sm:$0xf]
  %s1217 = scalar_lea.vmem %s0, 226
  %v1218 = vld [vmem:[%s1217] ss:$8 sm:$0xf]
  %v1219 = vld [vmem:[%s1] sm:$0xff]
  %v1220 = vld [vmem:[%s1 + $0x8] sm:$0xff]
  %v1221 = vld [vmem:[%s1 + $0x10] sm:$0xff]
  %v1222 = vld [vmem:[%s1 + $0x18] sm:$0xff]
  %v1223 = vld [vmem:[%s1 + $0x20] sm:$0xff]
  %v1224 = vld [vmem:[%s1 + $0x28] sm:$0xff]
  %v1225 = vld [vmem:[%s1 + $0x30] sm:$0xff]
  %v1226 = vld [vmem:[%s1 + $0x38] sm:$0xff]
  %v1227 = vld [vmem:[%s1 + $0x40] sm:$0xff]
  %v1228 = vld [vmem:[%s1 + $0x48] sm:$0xff]
  %v1229 = vld [vmem:[%s1 + $0x50] sm:$0xff]
  %v1230 = vld [vmem:[%s1 + $0x58] sm:$0xff]
  %v1231 = vld [vmem:[%s1 + $0x60] sm:$0xff]
  %v1232 = vld [vmem:[%s1 + $0x68] sm:$0xff]
  %v1233 = vld [vmem:[%s1 + $0x70] sm:$0xff]
  %v1234 = vld [vmem:[%s1 + $0x78] sm:$0xff]
  %v1235 = vld [vmem:[%s1 + $0x80] sm:$0xff]
  %v1236 = vld [vmem:[%s1 + $0x88] sm:$0xff]
  %v1237 = vld [vmem:[%s1 + $0x90] sm:$0xff]
  %v1238 = vld [vmem:[%s1 + $0x98] sm:$0xff]
  %v1239 = vld [vmem:[%s1 + $0xa0] sm:$0xff]
  %v1240 = vld [vmem:[%s1 + $0xa8] sm:$0xff]
  %v1241 = vld [vmem:[%s1 + $0xb0] sm:$0xff]
  %v1242 = vld [vmem:[%s1 + $0xb8] sm:$0xff]
  %v1243 = vld [vmem:[%s1 + $0xc0] sm:$0xff]
  %v1244 = vld [vmem:[%s1 + $0xc8] sm:$0xff]
  %v1245 = vld [vmem:[%s1 + $0xd0] sm:$0xff]
  %v1246 = vld [vmem:[%s1 + $0xd8] sm:$0xff]
  %v1247 = vld [vmem:[%s1 + $0xe0] sm:$0xff]
  %v1248 = vld [vmem:[%s1 + $0xe8] sm:$0xff]
  %v1249 = vld [vmem:[%s1 + $0xf0] sm:$0xff]
  %v1250 = vld [vmem:[%s1 + $0xf8] sm:$0xff]
  %v1251 = vld [vmem:[%s1 + $0x100] sm:$0xff]
  %v1252 = vld [vmem:[%s1 + $0x108] sm:$0xff]
  %v1253 = vld [vmem:[%s1 + $0x110] sm:$0xff]
  %v1254 = vld [vmem:[%s1 + $0x118] sm:$0xff]
  %v1255 = vld [vmem:[%s1 + $0x120] sm:$0xff]
  %v1256 = vld [vmem:[%s1 + $0x128] sm:$0xff]
  %v1257 = vld [vmem:[%s1 + $0x130] sm:$0xff]
  %v1258 = vld [vmem:[%s1 + $0x138] sm:$0xff]
  %v1259 = vld [vmem:[%s1 + $0x140] sm:$0xff]
  %v1260 = vld [vmem:[%s1 + $0x148] sm:$0xff]
  %v1261 = vld [vmem:[%s1 + $0x150] sm:$0xff]
  %v1262 = vld [vmem:[%s1 + $0x158] sm:$0xff]
  %v1263 = vld [vmem:[%s1 + $0x160] sm:$0xff]
  %v1264 = vld [vmem:[%s1 + $0x168] sm:$0xff]
  %v1265 = vld [vmem:[%s1 + $0x170] sm:$0xff]
  %v1266 = vld [vmem:[%s1 + $0x178] sm:$0xff]
  %v1267 = vld [vmem:[%s1 + $0x180] sm:$0xff]
  %v1268 = vld [vmem:[%s1 + $0x188] sm:$0xff]
  %v1269 = vld [vmem:[%s1 + $0x190] sm:$0xff]
  %v1270 = vld [vmem:[%s1 + $0x198] sm:$0xff]
  %v1271 = vld [vmem:[%s1 + $0x1a0] sm:$0xff]
  %v1272 = vld [vmem:[%s1 + $0x1a8] sm:$0xff]
  %v1273 = vld [vmem:[%s1 + $0x1b0] sm:$0xff]
  %v1274 = vld [vmem:[%s1 + $0x1b8] sm:$0xff]
  %v1275 = vld [vmem:[%s1 + $0x1c0] sm:$0xff]
  %v1276 = vld [vmem:[%s1 + $0x1c8] sm:$0xff]
  %v1277 = vld [vmem:[%s1 + $0x1d0] sm:$0xff]
  %v1278 = vld [vmem:[%s1 + $0x1d8] sm:$0xff]
  %v1279 = vld [vmem:[%s1 + $0x1e0] sm:$0xff]
  %v1280 = vld [vmem:[%s1 + $0x1e8] sm:$0xff]
  %v1281 = vld [vmem:[%s1 + $0x1f0] sm:$0xff]
  %v1282 = vld [vmem:[%s1 + $0x1f8] sm:$0xff]
  %v1291 = vcombine.low %v1187, %v1188
  %v1292 = vcombine.low %v1189, %v1190
  %v1293 = vcombine.low %v1191, %v1192
  %v1294 = vcombine.low %v1193, %v1194
  %v1296 = vunpack.c.l.s4 1966171168
  %v1297 = vunpack.c.0.s8 %v1296
  %v1298 = vlaneseq
  %v1299 = vshrl.u32 %v1298, 7
  %v1300 = vsub.s32 %v1297, %v1299
  %v1301 = vrot.slane %v1291, %v1300
  %v1303 = vunpack.c.l.s4 1966171168
  %v1304 = vunpack.c.0.s8 %v1303
  %v1305 = vlaneseq
  %v1306 = vshrl.u32 %v1305, 7
  %v1307 = vsub.s32 %v1304, %v1306
  %v1308 = vrot.slane %v1292, %v1307
  %v1310 = vunpack.c.l.s4 1966171168
  %v1311 = vunpack.c.0.s8 %v1310
  %v1312 = vlaneseq
  %v1313 = vshrl.u32 %v1312, 7
  %v1314 = vsub.s32 %v1311, %v1313
  %v1315 = vrot.slane %v1293, %v1314
  %v1317 = vunpack.c.l.s4 1966171168
  %v1318 = vunpack.c.0.s8 %v1317
  %v1319 = vlaneseq
  %v1320 = vshrl.u32 %v1319, 7
  %v1321 = vsub.s32 %v1318, %v1320
  %v1322 = vrot.slane %v1294, %v1321
  %v1323 = vcombine.low %v1301, %v1308
  %v1324 = vcombine.low %v1315, %v1322
  %v1326 = vunpack.c.l.s4 1966171168
  %v1327 = vunpack.c.0.s8 %v1326
  %v1328 = vlaneseq
  %v1329 = vshrl.u32 %v1328, 7
  %v1330 = vsub.s32 %v1327, %v1329
  %v1331 = vrot.slane %v1323, %v1330
  %v1333 = vunpack.c.l.s4 1966171168
  %v1334 = vunpack.c.0.s8 %v1333
  %v1335 = vlaneseq
  %v1336 = vshrl.u32 %v1335, 7
  %v1337 = vsub.s32 %v1334, %v1336
  %v1338 = vrot.slane %v1324, %v1337
  %v1339 = vcombine.low %v1331, %v1338
  %1341 = vmatprep.subr.mxu0 %v1280
  %1342 = vmatpush1.msra.mxu0 %v1279
  %1343 = vmatprep.subr.mxu0 %v1276
  %1344 = vmatpush1.msra.mxu0 %v1275
  %1345 = vmatprep.subr.mxu0 %v1272
  %1346 = vmatpush1.msra.mxu0 %v1271
  %1347 = vmatprep.subr.mxu0 %v1268
  %1348 = vmatpush1.msra.mxu0 %v1267
  %1349 = vmatprep.subr.mxu0 %v1264
  %1350 = vmatpush1.msra.mxu0 %v1263
  %1351 = vmatprep.subr.mxu0 %v1260
  %1352 = vmatpush1.msra.mxu0 %v1259
  %1353 = vmatprep.subr.mxu0 %v1256
  %1354 = vmatpush1.msra.mxu0 %v1255
  %1355 = vmatprep.subr.mxu0 %v1252
  %1356 = vmatpush1.msra.mxu0 %v1251
  %1357 = vmatprep.subr.mxu0 %v1248
  %1358 = vmatpush1.msra.mxu0 %v1247
  %1359 = vmatprep.subr.mxu0 %v1244
  %1360 = vmatpush1.msra.mxu0 %v1243
  %1361 = vmatprep.subr.mxu0 %v1240
  %1362 = vmatpush1.msra.mxu0 %v1239
  %1363 = vmatprep.subr.mxu0 %v1236
  %1364 = vmatpush1.msra.mxu0 %v1235
  %1365 = vmatprep.subr.mxu0 %v1232
  %1366 = vmatpush1.msra.mxu0 %v1231
  %1367 = vmatprep.subr.mxu0 %v1228
  %1368 = vmatpush1.msra.mxu0 %v1227
  %1369 = vmatprep.subr.mxu0 %v1224
  %1370 = vmatpush1.msra.mxu0 %v1223
  %1371 = vmatprep.subr.mxu0 %v1220
  %1372 = vmatpush1.msra.mxu0 %v1219
  %1373 = vmatprep.subr.mxu0 0.0
  %1374 = vmatpush2.msra.mxu0 0.0
  %1375 = vmatprep.subr.mxu0 0.0
  %1376 = vmatpush2.msra.mxu0 0.0
  %1377 = vmatprep.subr.mxu0 0.0
  %1378 = vmatpush2.msra.mxu0 0.0
  %1379 = vmatprep.subr.mxu0 0.0
  %1380 = vmatpush2.msra.mxu0 0.0
  %1381 = vmatprep.subr.mxu0 0.0
  %1382 = vmatpush2.msra.mxu0 0.0
  %1383 = vmatprep.subr.mxu0 0.0
  %1384 = vmatpush2.msra.mxu0 0.0
  %1385 = vmatprep.subr.mxu0 0.0
  %1386 = vmatpush2.msra.mxu0 0.0
  %1387 = vmatprep.subr.mxu0 0.0
  %1388 = vmatpush2.msra.mxu0 0.0
  %1389 = vmatprep.subr.mxu0 0.0
  %1390 = vmatpush2.msra.mxu0 0.0
  %1391 = vmatprep.subr.mxu0 0.0
  %1392 = vmatpush2.msra.mxu0 0.0
  %1393 = vmatprep.subr.mxu0 0.0
  %1394 = vmatpush2.msra.mxu0 0.0
  %1395 = vmatprep.subr.mxu0 0.0
  %1396 = vmatpush2.msra.mxu0 0.0
  %1397 = vmatprep.subr.mxu0 0.0
  %1398 = vmatpush2.msra.mxu0 0.0
  %1399 = vmatprep.subr.mxu0 0.0
  %1400 = vmatpush2.msra.mxu0 0.0
  %1401 = vmatprep.subr.mxu0 0.0
  %1402 = vmatpush2.msra.mxu0 0.0
  %1403 = vmatprep.subr.mxu0 0.0
  %1404 = vmatpush2.msra.mxu0 0.0
  %1405 = vmatprep.mubr.f32.mxu0 0.0
  %1406 = vmatmul.mubr.f32.gmra.mxu0 %v1339
  %v1407 = vpop.f32.mrf.mxu0
  %v1408 = vadd.f32 0.0, %v1407
  %v1409 = vpop.f32.mrf.mxu0
  %v1410 = vadd.f32 0.0, %v1409
  %1411 = vdwg.mxu0
  %1412 = vmatprep.subr.mxu0 %v1282
  %1413 = vmatpush1.msra.mxu0 %v1281
  %1414 = vmatprep.subr.mxu0 %v1278
  %1415 = vmatpush1.msra.mxu0 %v1277
  %1416 = vmatprep.subr.mxu0 %v1274
  %1417 = vmatpush1.msra.mxu0 %v1273
  %1418 = vmatprep.subr.mxu0 %v1270
  %1419 = vmatpush1.msra.mxu0 %v1269
  %1420 = vmatprep.subr.mxu0 %v1266
  %1421 = vmatpush1.msra.mxu0 %v1265
  %1422 = vmatprep.subr.mxu0 %v1262
  %1423 = vmatpush1.msra.mxu0 %v1261
  %1424 = vmatprep.subr.mxu0 %v1258
  %1425 = vmatpush1.msra.mxu0 %v1257
  %1426 = vmatprep.subr.mxu0 %v1254
  %1427 = vmatpush1.msra.mxu0 %v1253
  %1428 = vmatprep.subr.mxu0 %v1250
  %1429 = vmatpush1.msra.mxu0 %v1249
  %1430 = vmatprep.subr.mxu0 %v1246
  %1431 = vmatpush1.msra.mxu0 %v1245
  %1432 = vmatprep.subr.mxu0 %v1242
  %1433 = vmatpush1.msra.mxu0 %v1241
  %1434 = vmatprep.subr.mxu0 %v1238
  %1435 = vmatpush1.msra.mxu0 %v1237
  %1436 = vmatprep.subr.mxu0 %v1234
  %1437 = vmatpush1.msra.mxu0 %v1233
  %1438 = vmatprep.subr.mxu0 %v1230
  %1439 = vmatpush1.msra.mxu0 %v1229
  %1440 = vmatprep.subr.mxu0 %v1226
  %1441 = vmatpush1.msra.mxu0 %v1225
  %1442 = vmatprep.subr.mxu0 %v1222
  %1443 = vmatpush1.msra.mxu0 %v1221
  %1444 = vmatprep.subr.mxu0 0.0
  %1445 = vmatpush2.msra.mxu0 0.0
  %1446 = vmatprep.subr.mxu0 0.0
  %1447 = vmatpush2.msra.mxu0 0.0
  %1448 = vmatprep.subr.mxu0 0.0
  %1449 = vmatpush2.msra.mxu0 0.0
  %1450 = vmatprep.subr.mxu0 0.0
  %1451 = vmatpush2.msra.mxu0 0.0
  %1452 = vmatprep.subr.mxu0 0.0
  %1453 = vmatpush2.msra.mxu0 0.0
  %1454 = vmatprep.subr.mxu0 0.0
  %1455 = vmatpush2.msra.mxu0 0.0
  %1456 = vmatprep.subr.mxu0 0.0
  %1457 = vmatpush2.msra.mxu0 0.0
  %1458 = vmatprep.subr.mxu0 0.0
  %1459 = vmatpush2.msra.mxu0 0.0
  %1460 = vmatprep.subr.mxu0 0.0
  %1461 = vmatpush2.msra.mxu0 0.0
  %1462 = vmatprep.subr.mxu0 0.0
  %1463 = vmatpush2.msra.mxu0 0.0
  %1464 = vmatprep.subr.mxu0 0.0
  %1465 = vmatpush2.msra.mxu0 0.0
  %1466 = vmatprep.subr.mxu0 0.0
  %1467 = vmatpush2.msra.mxu0 0.0
  %1468 = vmatprep.subr.mxu0 0.0
  %1469 = vmatpush2.msra.mxu0 0.0
  %1470 = vmatprep.subr.mxu0 0.0
  %1471 = vmatpush2.msra.mxu0 0.0
  %1472 = vmatprep.subr.mxu0 0.0
  %1473 = vmatpush2.msra.mxu0 0.0
  %1474 = vmatprep.subr.mxu0 0.0
  %1475 = vmatpush2.msra.mxu0 0.0
  %1476 = vmatprep.mubr.f32.mxu0 0.0
  %1477 = vmatmul.mubr.f32.gmra.mxu0 %v1339
  %v1478 = vpop.f32.mrf.mxu0
  %v1479 = vadd.f32 0.0, %v1478
  %v1480 = vpop.f32.mrf.mxu0
  %v1481 = vadd.f32 0.0, %v1480
  %1482 = vdwg.mxu0
  %v1487 = vcombine.low %v1408, %v1410
  %v1488 = vcombine.high %v1408, %v1410
  %v1489 = vcombine.low %v1479, %v1481
  %v1490 = vcombine.high %v1479, %v1481
  %v1492 = vunpack.c.l.s4 1966171168
  %v1493 = vunpack.c.0.s8 %v1492
  %v1494 = vlaneseq
  %v1495 = vshrl.u32 %v1494, 7
  %v1496 = vsub.s32 %v1493, %v1495
  %v1497 = vrot.slane %v1487, %v1496
  %v1499 = vunpack.c.l.s4 1966171168
  %v1500 = vunpack.c.0.s8 %v1499
  %v1501 = vlaneseq
  %v1502 = vshrl.u32 %v1501, 7
  %v1503 = vsub.s32 %v1500, %v1502
  %v1504 = vrot.slane %v1488, %v1503
  %v1506 = vunpack.c.l.s4 1966171168
  %v1507 = vunpack.c.0.s8 %v1506
  %v1508 = vlaneseq
  %v1509 = vshrl.u32 %v1508, 7
  %v1510 = vsub.s32 %v1507, %v1509
  %v1511 = vrot.slane %v1489, %v1510
  %v1513 = vunpack.c.l.s4 1966171168
  %v1514 = vunpack.c.0.s8 %v1513
  %v1515 = vlaneseq
  %v1516 = vshrl.u32 %v1515, 7
  %v1517 = vsub.s32 %v1514, %v1516
  %v1518 = vrot.slane %v1490, %v1517
  %v1519 = vcombine.low %v1497, %v1511
  %v1520 = vcombine.high %v1497, %v1511
  %v1521 = vcombine.low %v1504, %v1518
  %v1522 = vcombine.high %v1504, %v1518
  %v1524 = vunpack.c.l.s4 1966171168
  %v1525 = vunpack.c.0.s8 %v1524
  %v1526 = vlaneseq
  %v1527 = vshrl.u32 %v1526, 7
  %v1528 = vsub.s32 %v1525, %v1527
  %v1529 = vrot.slane %v1519, %v1528
  %v1531 = vunpack.c.l.s4 1966171168
  %v1532 = vunpack.c.0.s8 %v1531
  %v1533 = vlaneseq
  %v1534 = vshrl.u32 %v1533, 7
  %v1535 = vsub.s32 %v1532, %v1534
  %v1536 = vrot.slane %v1521, %v1535
  %v1538 = vunpack.c.l.s4 1966171168
  %v1539 = vunpack.c.0.s8 %v1538
  %v1540 = vlaneseq
  %v1541 = vshrl.u32 %v1540, 7
  %v1542 = vsub.s32 %v1539, %v1541
  %v1543 = vrot.slane %v1520, %v1542
  %v1545 = vunpack.c.l.s4 1966171168
  %v1546 = vunpack.c.0.s8 %v1545
  %v1547 = vlaneseq
  %v1548 = vshrl.u32 %v1547, 7
  %v1549 = vsub.s32 %v1546, %v1548
  %v1550 = vrot.slane %v1522, %v1549
  %v1551 = vcombine.high %v1529, %v1529
  %v1552 = vcombine.high %v1536, %v1536
  %v1553 = vcombine.high %v1543, %v1543
  %v1554 = vcombine.high %v1550, %v1550
  %v1563 = vadd.f32 %v1204, %v1529
  %v1564 = vadd.f32 %v1206, %v1543
  %v1565 = vadd.f32 %v1208, %v1551
  %v1566 = vadd.f32 %v1210, %v1553
  %v1567 = vadd.f32 %v1212, %v1536
  %v1568 = vadd.f32 %v1214, %v1550
  %v1569 = vadd.f32 %v1216, %v1552
  %v1570 = vadd.f32 %v1218, %v1554
  %v1571 = vxor.u32 %v1563, 2147483648
  %v1572 = vxor.u32 %v1564, 2147483648
  %v1573 = vxor.u32 %v1565, 2147483648
  %v1574 = vxor.u32 %v1566, 2147483648
  %v1575 = vxor.u32 %v1567, 2147483648
  %v1576 = vxor.u32 %v1568, 2147483648
  %v1577 = vxor.u32 %v1569, 2147483648
  %v1578 = vxor.u32 %v1570, 2147483648
  %v1579 = vmul.f32 %v1571, 1.442695
  %v1580 = vpow.pop %v1579
  %v1581 = vmul.f32 %v1572, 1.442695
  %v1582 = vpow.pop %v1581
  %v1583 = vmul.f32 %v1573, 1.442695
  %v1584 = vpow.pop %v1583
  %v1585 = vmul.f32 %v1574, 1.442695
  %v1586 = vpow.pop %v1585
  %v1587 = vmul.f32 %v1575, 1.442695
  %v1588 = vpow.pop %v1587
  %v1589 = vmul.f32 %v1576, 1.442695
  %v1590 = vpow.pop %v1589
  %v1591 = vmul.f32 %v1577, 1.442695
  %v1592 = vpow.pop %v1591
  %v1593 = vmul.f32 %v1578, 1.442695
  %v1594 = vpow.pop %v1593
  %v1595 = vadd.f32 %v1580, 1.0
  %v1596 = vadd.f32 %v1582, 1.0
  %v1597 = vadd.f32 %v1584, 1.0
  %v1598 = vadd.f32 %v1586, 1.0
  %v1599 = vadd.f32 %v1588, 1.0
  %v1600 = vadd.f32 %v1590, 1.0
  %v1601 = vadd.f32 %v1592, 1.0
  %v1602 = vadd.f32 %v1594, 1.0
  %v1603 = vrcp.pop %v1595
  %v1604 = vmul.f32 1.0, %v1603
  %v1605 = vrcp.pop %v1596
  %v1606 = vmul.f32 1.0, %v1605
  %v1607 = vrcp.pop %v1597
  %v1608 = vmul.f32 1.0, %v1607
  %v1609 = vrcp.pop %v1598
  %v1610 = vmul.f32 1.0, %v1609
  %v1611 = vrcp.pop %v1599
  %v1612 = vmul.f32 1.0, %v1611
  %v1613 = vrcp.pop %v1600
  %v1614 = vmul.f32 1.0, %v1613
  %v1615 = vrcp.pop %v1601
  %v1616 = vmul.f32 1.0, %v1615
  %v1617 = vrcp.pop %v1602
  %v1618 = vmul.f32 1.0, %v1617
  %v1627 = vrot.slane %v1563, 1
  %v1628 = vrot.slane %v1564, 1
  %v1629 = vrot.slane %v1565, 1
  %v1630 = vrot.slane %v1566, 1
  %v1631 = vrot.slane %v1567, 1
  %v1632 = vrot.slane %v1568, 1
  %v1633 = vrot.slane %v1569, 1
  %v1634 = vrot.slane %v1570, 1
  %v1643 = vxor.u32 %v1627, 2147483648
  %v1644 = vxor.u32 %v1628, 2147483648
  %v1645 = vxor.u32 %v1629, 2147483648
  %v1646 = vxor.u32 %v1630, 2147483648
  %v1647 = vxor.u32 %v1631, 2147483648
  %v1648 = vxor.u32 %v1632, 2147483648
  %v1649 = vxor.u32 %v1633, 2147483648
  %v1650 = vxor.u32 %v1634, 2147483648
  %v1651 = vmul.f32 %v1643, 1.442695
  %v1652 = vpow.pop %v1651
  %v1653 = vmul.f32 %v1644, 1.442695
  %v1654 = vpow.pop %v1653
  %v1655 = vmul.f32 %v1645, 1.442695
  %v1656 = vpow.pop %v1655
  %v1657 = vmul.f32 %v1646, 1.442695
  %v1658 = vpow.pop %v1657
  %v1659 = vmul.f32 %v1647, 1.442695
  %v1660 = vpow.pop %v1659
  %v1661 = vmul.f32 %v1648, 1.442695
  %v1662 = vpow.pop %v1661
  %v1663 = vmul.f32 %v1649, 1.442695
  %v1664 = vpow.pop %v1663
  %v1665 = vmul.f32 %v1650, 1.442695
  %v1666 = vpow.pop %v1665
  %v1667 = vadd.f32 %v1652, 1.0
  %v1668 = vadd.f32 %v1654, 1.0
  %v1669 = vadd.f32 %v1656, 1.0
  %v1670 = vadd.f32 %v1658, 1.0
  %v1671 = vadd.f32 %v1660, 1.0
  %v1672 = vadd.f32 %v1662, 1.0
  %v1673 = vadd.f32 %v1664, 1.0
  %v1674 = vadd.f32 %v1666, 1.0
  %v1675 = vrcp.pop %v1667
  %v1676 = vmul.f32 1.0, %v1675
  %v1677 = vrcp.pop %v1668
  %v1678 = vmul.f32 1.0, %v1677
  %v1679 = vrcp.pop %v1669
  %v1680 = vmul.f32 1.0, %v1679
  %v1681 = vrcp.pop %v1670
  %v1682 = vmul.f32 1.0, %v1681
  %v1683 = vrcp.pop %v1671
  %v1684 = vmul.f32 1.0, %v1683
  %v1685 = vrcp.pop %v1672
  %v1686 = vmul.f32 1.0, %v1685
  %v1687 = vrcp.pop %v1673
  %v1688 = vmul.f32 1.0, %v1687
  %v1689 = vrcp.pop %v1674
  %v1690 = vmul.f32 1.0, %v1689
  %v1691 = vrot.slane %v1563, 2
  %v1692 = vrot.slane %v1564, 2
  %v1693 = vrot.slane %v1565, 2
  %v1694 = vrot.slane %v1566, 2
  %v1695 = vrot.slane %v1567, 2
  %v1696 = vrot.slane %v1568, 2
  %v1697 = vrot.slane %v1569, 2
  %v1698 = vrot.slane %v1570, 2
  %v1707 = vtanh.pop %v1691
  %v1708 = vtanh.pop %v1692
  %v1709 = vtanh.pop %v1693
  %v1710 = vtanh.pop %v1694
  %v1711 = vtanh.pop %v1695
  %v1712 = vtanh.pop %v1696
  %v1713 = vtanh.pop %v1697
  %v1714 = vtanh.pop %v1698
  %v1715 = vrot.slane %v1563, 3
  %v1716 = vrot.slane %v1564, 3
  %v1717 = vrot.slane %v1565, 3
  %v1718 = vrot.slane %v1566, 3
  %v1719 = vrot.slane %v1567, 3
  %v1720 = vrot.slane %v1568, 3
  %v1721 = vrot.slane %v1569, 3
  %v1722 = vrot.slane %v1570, 3
  %v1731 = vxor.u32 %v1715, 2147483648
  %v1732 = vxor.u32 %v1716, 2147483648
  %v1733 = vxor.u32 %v1717, 2147483648
  %v1734 = vxor.u32 %v1718, 2147483648
  %v1735 = vxor.u32 %v1719, 2147483648
  %v1736 = vxor.u32 %v1720, 2147483648
  %v1737 = vxor.u32 %v1721, 2147483648
  %v1738 = vxor.u32 %v1722, 2147483648
  %v1739 = vmul.f32 %v1731, 1.442695
  %v1740 = vpow.pop %v1739
  %v1741 = vmul.f32 %v1732, 1.442695
  %v1742 = vpow.pop %v1741
  %v1743 = vmul.f32 %v1733, 1.442695
  %v1744 = vpow.pop %v1743
  %v1745 = vmul.f32 %v1734, 1.442695
  %v1746 = vpow.pop %v1745
  %v1747 = vmul.f32 %v1735, 1.442695
  %v1748 = vpow.pop %v1747
  %v1749 = vmul.f32 %v1736, 1.442695
  %v1750 = vpow.pop %v1749
  %v1751 = vmul.f32 %v1737, 1.442695
  %v1752 = vpow.pop %v1751
  %v1753 = vmul.f32 %v1738, 1.442695
  %v1754 = vpow.pop %v1753
  %v1755 = vadd.f32 %v1740, 1.0
  %v1756 = vadd.f32 %v1742, 1.0
  %v1757 = vadd.f32 %v1744, 1.0
  %v1758 = vadd.f32 %v1746, 1.0
  %v1759 = vadd.f32 %v1748, 1.0
  %v1760 = vadd.f32 %v1750, 1.0
  %v1761 = vadd.f32 %v1752, 1.0
  %v1762 = vadd.f32 %v1754, 1.0
  %v1763 = vrcp.pop %v1755
  %v1764 = vmul.f32 1.0, %v1763
  %v1765 = vrcp.pop %v1756
  %v1766 = vmul.f32 1.0, %v1765
  %v1767 = vrcp.pop %v1757
  %v1768 = vmul.f32 1.0, %v1767
  %v1769 = vrcp.pop %v1758
  %v1770 = vmul.f32 1.0, %v1769
  %v1771 = vrcp.pop %v1759
  %v1772 = vmul.f32 1.0, %v1771
  %v1773 = vrcp.pop %v1760
  %v1774 = vmul.f32 1.0, %v1773
  %v1775 = vrcp.pop %v1761
  %v1776 = vmul.f32 1.0, %v1775
  %v1777 = vrcp.pop %v1762
  %v1778 = vmul.f32 1.0, %v1777
  %v1779 = vmul.f32 %v1676, %v1171
  %v1780 = vmul.f32 %v1678, %v1172
  %v1781 = vmul.f32 %v1680, %v1173
  %v1782 = vmul.f32 %v1682, %v1174
  %v1783 = vmul.f32 %v1684, %v1175
  %v1784 = vmul.f32 %v1686, %v1176
  %v1785 = vmul.f32 %v1688, %v1177
  %v1786 = vmul.f32 %v1690, %v1178
  %v1787 = vmul.f32 %v1604, %v1707
  %v1788 = vmul.f32 %v1606, %v1708
  %v1789 = vmul.f32 %v1608, %v1709
  %v1790 = vmul.f32 %v1610, %v1710
  %v1791 = vmul.f32 %v1612, %v1711
  %v1792 = vmul.f32 %v1614, %v1712
  %v1793 = vmul.f32 %v1616, %v1713
  %v1794 = vmul.f32 %v1618, %v1714
  %v1795 = vadd.f32 %v1779, %v1787
  %v1796 = vadd.f32 %v1780, %v1788
  %v1797 = vadd.f32 %v1781, %v1789
  %v1798 = vadd.f32 %v1782, %v1790
  %v1799 = vadd.f32 %v1783, %v1791
  %v1800 = vadd.f32 %v1784, %v1792
  %v1801 = vadd.f32 %v1785, %v1793
  %v1802 = vadd.f32 %v1786, %v1794
  %v1803 = vtanh.pop %v1795
  %v1804 = vtanh.pop %v1796
  %v1805 = vtanh.pop %v1797
  %v1806 = vtanh.pop %v1798
  %v1807 = vtanh.pop %v1799
  %v1808 = vtanh.pop %v1800
  %v1809 = vtanh.pop %v1801
  %v1810 = vtanh.pop %v1802
  %v1811 = vmul.f32 %v1764, %v1803
  %v1812 = vmul.f32 %v1766, %v1804
  %v1813 = vmul.f32 %v1768, %v1805
  %v1814 = vmul.f32 %v1770, %v1806
  %v1815 = vmul.f32 %v1772, %v1807
  %v1816 = vmul.f32 %v1774, %v1808
  %v1817 = vmul.f32 %v1776, %v1809
  %v1818 = vmul.f32 %v1778, %v1810
  %1819 = vst [vmem:[%s2 + $0x2] sm:$0x1] %v1811
  %1820 = vst [vmem:[%s2 + $0xa] sm:$0x1] %v1812
  %1821 = vst [vmem:[%s2 + $0x12] sm:$0x1] %v1813
  %1822 = vst [vmem:[%s2 + $0x1a] sm:$0x1] %v1814
  %1823 = vst [vmem:[%s2 + $0x22] sm:$0x1] %v1815
  %1824 = vst [vmem:[%s2 + $0x2a] sm:$0x1] %v1816
  %1825 = vst [vmem:[%s2 + $0x32] sm:$0x1] %v1817
  %1826 = vst [vmem:[%s2 + $0x3a] sm:$0x1] %v1818
  %s1827 = scalar_lea.vmem %s0, 3
  %v1828 = vld [vmem:[%s1827] ss:$8 sm:$0xf]
  %s1829 = scalar_lea.vmem %s0, 35
  %v1830 = vld [vmem:[%s1829] ss:$8 sm:$0xf]
  %s1831 = scalar_lea.vmem %s0, 67
  %v1832 = vld [vmem:[%s1831] ss:$8 sm:$0xf]
  %s1833 = scalar_lea.vmem %s0, 99
  %v1834 = vld [vmem:[%s1833] ss:$8 sm:$0xf]
  %s1835 = scalar_lea.vmem %s0, 131
  %v1836 = vld [vmem:[%s1835] ss:$8 sm:$0xf]
  %s1837 = scalar_lea.vmem %s0, 163
  %v1838 = vld [vmem:[%s1837] ss:$8 sm:$0xf]
  %s1839 = scalar_lea.vmem %s0, 195
  %v1840 = vld [vmem:[%s1839] ss:$8 sm:$0xf]
  %s1841 = scalar_lea.vmem %s0, 227
  %v1842 = vld [vmem:[%s1841] ss:$8 sm:$0xf]
  %v1843 = vld [vmem:[%s1] sm:$0xff]
  %v1844 = vld [vmem:[%s1 + $0x8] sm:$0xff]
  %v1845 = vld [vmem:[%s1 + $0x10] sm:$0xff]
  %v1846 = vld [vmem:[%s1 + $0x18] sm:$0xff]
  %v1847 = vld [vmem:[%s1 + $0x20] sm:$0xff]
  %v1848 = vld [vmem:[%s1 + $0x28] sm:$0xff]
  %v1849 = vld [vmem:[%s1 + $0x30] sm:$0xff]
  %v1850 = vld [vmem:[%s1 + $0x38] sm:$0xff]
  %v1851 = vld [vmem:[%s1 + $0x40] sm:$0xff]
  %v1852 = vld [vmem:[%s1 + $0x48] sm:$0xff]
  %v1853 = vld [vmem:[%s1 + $0x50] sm:$0xff]
  %v1854 = vld [vmem:[%s1 + $0x58] sm:$0xff]
  %v1855 = vld [vmem:[%s1 + $0x60] sm:$0xff]
  %v1856 = vld [vmem:[%s1 + $0x68] sm:$0xff]
  %v1857 = vld [vmem:[%s1 + $0x70] sm:$0xff]
  %v1858 = vld [vmem:[%s1 + $0x78] sm:$0xff]
  %v1859 = vld [vmem:[%s1 + $0x80] sm:$0xff]
  %v1860 = vld [vmem:[%s1 + $0x88] sm:$0xff]
  %v1861 = vld [vmem:[%s1 + $0x90] sm:$0xff]
  %v1862 = vld [vmem:[%s1 + $0x98] sm:$0xff]
  %v1863 = vld [vmem:[%s1 + $0xa0] sm:$0xff]
  %v1864 = vld [vmem:[%s1 + $0xa8] sm:$0xff]
  %v1865 = vld [vmem:[%s1 + $0xb0] sm:$0xff]
  %v1866 = vld [vmem:[%s1 + $0xb8] sm:$0xff]
  %v1867 = vld [vmem:[%s1 + $0xc0] sm:$0xff]
  %v1868 = vld [vmem:[%s1 + $0xc8] sm:$0xff]
  %v1869 = vld [vmem:[%s1 + $0xd0] sm:$0xff]
  %v1870 = vld [vmem:[%s1 + $0xd8] sm:$0xff]
  %v1871 = vld [vmem:[%s1 + $0xe0] sm:$0xff]
  %v1872 = vld [vmem:[%s1 + $0xe8] sm:$0xff]
  %v1873 = vld [vmem:[%s1 + $0xf0] sm:$0xff]
  %v1874 = vld [vmem:[%s1 + $0xf8] sm:$0xff]
  %v1875 = vld [vmem:[%s1 + $0x100] sm:$0xff]
  %v1876 = vld [vmem:[%s1 + $0x108] sm:$0xff]
  %v1877 = vld [vmem:[%s1 + $0x110] sm:$0xff]
  %v1878 = vld [vmem:[%s1 + $0x118] sm:$0xff]
  %v1879 = vld [vmem:[%s1 + $0x120] sm:$0xff]
  %v1880 = vld [vmem:[%s1 + $0x128] sm:$0xff]
  %v1881 = vld [vmem:[%s1 + $0x130] sm:$0xff]
  %v1882 = vld [vmem:[%s1 + $0x138] sm:$0xff]
  %v1883 = vld [vmem:[%s1 + $0x140] sm:$0xff]
  %v1884 = vld [vmem:[%s1 + $0x148] sm:$0xff]
  %v1885 = vld [vmem:[%s1 + $0x150] sm:$0xff]
  %v1886 = vld [vmem:[%s1 + $0x158] sm:$0xff]
  %v1887 = vld [vmem:[%s1 + $0x160] sm:$0xff]
  %v1888 = vld [vmem:[%s1 + $0x168] sm:$0xff]
  %v1889 = vld [vmem:[%s1 + $0x170] sm:$0xff]
  %v1890 = vld [vmem:[%s1 + $0x178] sm:$0xff]
  %v1891 = vld [vmem:[%s1 + $0x180] sm:$0xff]
  %v1892 = vld [vmem:[%s1 + $0x188] sm:$0xff]
  %v1893 = vld [vmem:[%s1 + $0x190] sm:$0xff]
  %v1894 = vld [vmem:[%s1 + $0x198] sm:$0xff]
  %v1895 = vld [vmem:[%s1 + $0x1a0] sm:$0xff]
  %v1896 = vld [vmem:[%s1 + $0x1a8] sm:$0xff]
  %v1897 = vld [vmem:[%s1 + $0x1b0] sm:$0xff]
  %v1898 = vld [vmem:[%s1 + $0x1b8] sm:$0xff]
  %v1899 = vld [vmem:[%s1 + $0x1c0] sm:$0xff]
  %v1900 = vld [vmem:[%s1 + $0x1c8] sm:$0xff]
  %v1901 = vld [vmem:[%s1 + $0x1d0] sm:$0xff]
  %v1902 = vld [vmem:[%s1 + $0x1d8] sm:$0xff]
  %v1903 = vld [vmem:[%s1 + $0x1e0] sm:$0xff]
  %v1904 = vld [vmem:[%s1 + $0x1e8] sm:$0xff]
  %v1905 = vld [vmem:[%s1 + $0x1f0] sm:$0xff]
  %v1906 = vld [vmem:[%s1 + $0x1f8] sm:$0xff]
  %v1915 = vcombine.low %v1811, %v1812
  %v1916 = vcombine.low %v1813, %v1814
  %v1917 = vcombine.low %v1815, %v1816
  %v1918 = vcombine.low %v1817, %v1818
  %v1920 = vunpack.c.l.s4 1966171168
  %v1921 = vunpack.c.0.s8 %v1920
  %v1922 = vlaneseq
  %v1923 = vshrl.u32 %v1922, 7
  %v1924 = vsub.s32 %v1921, %v1923
  %v1925 = vrot.slane %v1915, %v1924
  %v1927 = vunpack.c.l.s4 1966171168
  %v1928 = vunpack.c.0.s8 %v1927
  %v1929 = vlaneseq
  %v1930 = vshrl.u32 %v1929, 7
  %v1931 = vsub.s32 %v1928, %v1930
  %v1932 = vrot.slane %v1916, %v1931
  %v1934 = vunpack.c.l.s4 1966171168
  %v1935 = vunpack.c.0.s8 %v1934
  %v1936 = vlaneseq
  %v1937 = vshrl.u32 %v1936, 7
  %v1938 = vsub.s32 %v1935, %v1937
  %v1939 = vrot.slane %v1917, %v1938
  %v1941 = vunpack.c.l.s4 1966171168
  %v1942 = vunpack.c.0.s8 %v1941
  %v1943 = vlaneseq
  %v1944 = vshrl.u32 %v1943, 7
  %v1945 = vsub.s32 %v1942, %v1944
  %v1946 = vrot.slane %v1918, %v1945
  %v1947 = vcombine.low %v1925, %v1932
  %v1948 = vcombine.low %v1939, %v1946
  %v1950 = vunpack.c.l.s4 1966171168
  %v1951 = vunpack.c.0.s8 %v1950
  %v1952 = vlaneseq
  %v1953 = vshrl.u32 %v1952, 7
  %v1954 = vsub.s32 %v1951, %v1953
  %v1955 = vrot.slane %v1947, %v1954
  %v1957 = vunpack.c.l.s4 1966171168
  %v1958 = vunpack.c.0.s8 %v1957
  %v1959 = vlaneseq
  %v1960 = vshrl.u32 %v1959, 7
  %v1961 = vsub.s32 %v1958, %v1960
  %v1962 = vrot.slane %v1948, %v1961
  %v1963 = vcombine.low %v1955, %v1962
  %1965 = vmatprep.subr.mxu0 %v1904
  %1966 = vmatpush1.msra.mxu0 %v1903
  %1967 = vmatprep.subr.mxu0 %v1900
  %1968 = vmatpush1.msra.mxu0 %v1899
  %1969 = vmatprep.subr.mxu0 %v1896
  %1970 = vmatpush1.msra.mxu0 %v1895
  %1971 = vmatprep.subr.mxu0 %v1892
  %1972 = vmatpush1.msra.mxu0 %v1891
  %1973 = vmatprep.subr.mxu0 %v1888
  %1974 = vmatpush1.msra.mxu0 %v1887
  %1975 = vmatprep.subr.mxu0 %v1884
  %1976 = vmatpush1.msra.mxu0 %v1883
  %1977 = vmatprep.subr.mxu0 %v1880
  %1978 = vmatpush1.msra.mxu0 %v1879
  %1979 = vmatprep.subr.mxu0 %v1876
  %1980 = vmatpush1.msra.mxu0 %v1875
  %1981 = vmatprep.subr.mxu0 %v1872
  %1982 = vmatpush1.msra.mxu0 %v1871
  %1983 = vmatprep.subr.mxu0 %v1868
  %1984 = vmatpush1.msra.mxu0 %v1867
  %1985 = vmatprep.subr.mxu0 %v1864
  %1986 = vmatpush1.msra.mxu0 %v1863
  %1987 = vmatprep.subr.mxu0 %v1860
  %1988 = vmatpush1.msra.mxu0 %v1859
  %1989 = vmatprep.subr.mxu0 %v1856
  %1990 = vmatpush1.msra.mxu0 %v1855
  %1991 = vmatprep.subr.mxu0 %v1852
  %1992 = vmatpush1.msra.mxu0 %v1851
  %1993 = vmatprep.subr.mxu0 %v1848
  %1994 = vmatpush1.msra.mxu0 %v1847
  %1995 = vmatprep.subr.mxu0 %v1844
  %1996 = vmatpush1.msra.mxu0 %v1843
  %1997 = vmatprep.subr.mxu0 0.0
  %1998 = vmatpush2.msra.mxu0 0.0
  %1999 = vmatprep.subr.mxu0 0.0
  %2000 = vmatpush2.msra.mxu0 0.0
  %2001 = vmatprep.subr.mxu0 0.0
  %2002 = vmatpush2.msra.mxu0 0.0
  %2003 = vmatprep.subr.mxu0 0.0
  %2004 = vmatpush2.msra.mxu0 0.0
  %2005 = vmatprep.subr.mxu0 0.0
  %2006 = vmatpush2.msra.mxu0 0.0
  %2007 = vmatprep.subr.mxu0 0.0
  %2008 = vmatpush2.msra.mxu0 0.0
  %2009 = vmatprep.subr.mxu0 0.0
  %2010 = vmatpush2.msra.mxu0 0.0
  %2011 = vmatprep.subr.mxu0 0.0
  %2012 = vmatpush2.msra.mxu0 0.0
  %2013 = vmatprep.subr.mxu0 0.0
  %2014 = vmatpush2.msra.mxu0 0.0
  %2015 = vmatprep.subr.mxu0 0.0
  %2016 = vmatpush2.msra.mxu0 0.0
  %2017 = vmatprep.subr.mxu0 0.0
  %2018 = vmatpush2.msra.mxu0 0.0
  %2019 = vmatprep.subr.mxu0 0.0
  %2020 = vmatpush2.msra.mxu0 0.0
  %2021 = vmatprep.subr.mxu0 0.0
  %2022 = vmatpush2.msra.mxu0 0.0
  %2023 = vmatprep.subr.mxu0 0.0
  %2024 = vmatpush2.msra.mxu0 0.0
  %2025 = vmatprep.subr.mxu0 0.0
  %2026 = vmatpush2.msra.mxu0 0.0
  %2027 = vmatprep.subr.mxu0 0.0
  %2028 = vmatpush2.msra.mxu0 0.0
  %2029 = vmatprep.mubr.f32.mxu0 0.0
  %2030 = vmatmul.mubr.f32.gmra.mxu0 %v1963
  %v2031 = vpop.f32.mrf.mxu0
  %v2032 = vadd.f32 0.0, %v2031
  %v2033 = vpop.f32.mrf.mxu0
  %v2034 = vadd.f32 0.0, %v2033
  %2035 = vdwg.mxu0
  %2036 = vmatprep.subr.mxu0 %v1906
  %2037 = vmatpush1.msra.mxu0 %v1905
  %2038 = vmatprep.subr.mxu0 %v1902
  %2039 = vmatpush1.msra.mxu0 %v1901
  %2040 = vmatprep.subr.mxu0 %v1898
  %2041 = vmatpush1.msra.mxu0 %v1897
  %2042 = vmatprep.subr.mxu0 %v1894
  %2043 = vmatpush1.msra.mxu0 %v1893
  %2044 = vmatprep.subr.mxu0 %v1890
  %2045 = vmatpush1.msra.mxu0 %v1889
  %2046 = vmatprep.subr.mxu0 %v1886
  %2047 = vmatpush1.msra.mxu0 %v1885
  %2048 = vmatprep.subr.mxu0 %v1882
  %2049 = vmatpush1.msra.mxu0 %v1881
  %2050 = vmatprep.subr.mxu0 %v1878
  %2051 = vmatpush1.msra.mxu0 %v1877
  %2052 = vmatprep.subr.mxu0 %v1874
  %2053 = vmatpush1.msra.mxu0 %v1873
  %2054 = vmatprep.subr.mxu0 %v1870
  %2055 = vmatpush1.msra.mxu0 %v1869
  %2056 = vmatprep.subr.mxu0 %v1866
  %2057 = vmatpush1.msra.mxu0 %v1865
  %2058 = vmatprep.subr.mxu0 %v1862
  %2059 = vmatpush1.msra.mxu0 %v1861
  %2060 = vmatprep.subr.mxu0 %v1858
  %2061 = vmatpush1.msra.mxu0 %v1857
  %2062 = vmatprep.subr.mxu0 %v1854
  %2063 = vmatpush1.msra.mxu0 %v1853
  %2064 = vmatprep.subr.mxu0 %v1850
  %2065 = vmatpush1.msra.mxu0 %v1849
  %2066 = vmatprep.subr.mxu0 %v1846
  %2067 = vmatpush1.msra.mxu0 %v1845
  %2068 = vmatprep.subr.mxu0 0.0
  %2069 = vmatpush2.msra.mxu0 0.0
  %2070 = vmatprep.subr.mxu0 0.0
  %2071 = vmatpush2.msra.mxu0 0.0
  %2072 = vmatprep.subr.mxu0 0.0
  %2073 = vmatpush2.msra.mxu0 0.0
  %2074 = vmatprep.subr.mxu0 0.0
  %2075 = vmatpush2.msra.mxu0 0.0
  %2076 = vmatprep.subr.mxu0 0.0
  %2077 = vmatpush2.msra.mxu0 0.0
  %2078 = vmatprep.subr.mxu0 0.0
  %2079 = vmatpush2.msra.mxu0 0.0
  %2080 = vmatprep.subr.mxu0 0.0
  %2081 = vmatpush2.msra.mxu0 0.0
  %2082 = vmatprep.subr.mxu0 0.0
  %2083 = vmatpush2.msra.mxu0 0.0
  %2084 = vmatprep.subr.mxu0 0.0
  %2085 = vmatpush2.msra.mxu0 0.0
  %2086 = vmatprep.subr.mxu0 0.0
  %2087 = vmatpush2.msra.mxu0 0.0
  %2088 = vmatprep.subr.mxu0 0.0
  %2089 = vmatpush2.msra.mxu0 0.0
  %2090 = vmatprep.subr.mxu0 0.0
  %2091 = vmatpush2.msra.mxu0 0.0
  %2092 = vmatprep.subr.mxu0 0.0
  %2093 = vmatpush2.msra.mxu0 0.0
  %2094 = vmatprep.subr.mxu0 0.0
  %2095 = vmatpush2.msra.mxu0 0.0
  %2096 = vmatprep.subr.mxu0 0.0
  %2097 = vmatpush2.msra.mxu0 0.0
  %2098 = vmatprep.subr.mxu0 0.0
  %2099 = vmatpush2.msra.mxu0 0.0
  %2100 = vmatprep.mubr.f32.mxu0 0.0
  %2101 = vmatmul.mubr.f32.gmra.mxu0 %v1963
  %v2102 = vpop.f32.mrf.mxu0
  %v2103 = vadd.f32 0.0, %v2102
  %v2104 = vpop.f32.mrf.mxu0
  %v2105 = vadd.f32 0.0, %v2104
  %2106 = vdwg.mxu0
  %v2111 = vcombine.low %v2032, %v2034
  %v2112 = vcombine.high %v2032, %v2034
  %v2113 = vcombine.low %v2103, %v2105
  %v2114 = vcombine.high %v2103, %v2105
  %v2116 = vunpack.c.l.s4 1966171168
  %v2117 = vunpack.c.0.s8 %v2116
  %v2118 = vlaneseq
  %v2119 = vshrl.u32 %v2118, 7
  %v2120 = vsub.s32 %v2117, %v2119
  %v2121 = vrot.slane %v2111, %v2120
  %v2123 = vunpack.c.l.s4 1966171168
  %v2124 = vunpack.c.0.s8 %v2123
  %v2125 = vlaneseq
  %v2126 = vshrl.u32 %v2125, 7
  %v2127 = vsub.s32 %v2124, %v2126
  %v2128 = vrot.slane %v2112, %v2127
  %v2130 = vunpack.c.l.s4 1966171168
  %v2131 = vunpack.c.0.s8 %v2130
  %v2132 = vlaneseq
  %v2133 = vshrl.u32 %v2132, 7
  %v2134 = vsub.s32 %v2131, %v2133
  %v2135 = vrot.slane %v2113, %v2134
  %v2137 = vunpack.c.l.s4 1966171168
  %v2138 = vunpack.c.0.s8 %v2137
  %v2139 = vlaneseq
  %v2140 = vshrl.u32 %v2139, 7
  %v2141 = vsub.s32 %v2138, %v2140
  %v2142 = vrot.slane %v2114, %v2141
  %v2143 = vcombine.low %v2121, %v2135
  %v2144 = vcombine.high %v2121, %v2135
  %v2145 = vcombine.low %v2128, %v2142
  %v2146 = vcombine.high %v2128, %v2142
  %v2148 = vunpack.c.l.s4 1966171168
  %v2149 = vunpack.c.0.s8 %v2148
  %v2150 = vlaneseq
  %v2151 = vshrl.u32 %v2150, 7
  %v2152 = vsub.s32 %v2149, %v2151
  %v2153 = vrot.slane %v2143, %v2152
  %v2155 = vunpack.c.l.s4 1966171168
  %v2156 = vunpack.c.0.s8 %v2155
  %v2157 = vlaneseq
  %v2158 = vshrl.u32 %v2157, 7
  %v2159 = vsub.s32 %v2156, %v2158
  %v2160 = vrot.slane %v2145, %v2159
  %v2162 = vunpack.c.l.s4 1966171168
  %v2163 = vunpack.c.0.s8 %v2162
  %v2164 = vlaneseq
  %v2165 = vshrl.u32 %v2164, 7
  %v2166 = vsub.s32 %v2163, %v2165
  %v2167 = vrot.slane %v2144, %v2166
  %v2169 = vunpack.c.l.s4 1966171168
  %v2170 = vunpack.c.0.s8 %v2169
  %v2171 = vlaneseq
  %v2172 = vshrl.u32 %v2171, 7
  %v2173 = vsub.s32 %v2170, %v2172
  %v2174 = vrot.slane %v2146, %v2173
  %v2175 = vcombine.high %v2153, %v2153
  %v2176 = vcombine.high %v2160, %v2160
  %v2177 = vcombine.high %v2167, %v2167
  %v2178 = vcombine.high %v2174, %v2174
  %v2187 = vadd.f32 %v1828, %v2153
  %v2188 = vadd.f32 %v1830, %v2167
  %v2189 = vadd.f32 %v1832, %v2175
  %v2190 = vadd.f32 %v1834, %v2177
  %v2191 = vadd.f32 %v1836, %v2160
  %v2192 = vadd.f32 %v1838, %v2174
  %v2193 = vadd.f32 %v1840, %v2176
  %v2194 = vadd.f32 %v1842, %v2178
  %v2195 = vxor.u32 %v2187, 2147483648
  %v2196 = vxor.u32 %v2188, 2147483648
  %v2197 = vxor.u32 %v2189, 2147483648
  %v2198 = vxor.u32 %v2190, 2147483648
  %v2199 = vxor.u32 %v2191, 2147483648
  %v2200 = vxor.u32 %v2192, 2147483648
  %v2201 = vxor.u32 %v2193, 2147483648
  %v2202 = vxor.u32 %v2194, 2147483648
  %v2203 = vmul.f32 %v2195, 1.442695
  %v2204 = vpow.pop %v2203
  %v2205 = vmul.f32 %v2196, 1.442695
  %v2206 = vpow.pop %v2205
  %v2207 = vmul.f32 %v2197, 1.442695
  %v2208 = vpow.pop %v2207
  %v2209 = vmul.f32 %v2198, 1.442695
  %v2210 = vpow.pop %v2209
  %v2211 = vmul.f32 %v2199, 1.442695
  %v2212 = vpow.pop %v2211
  %v2213 = vmul.f32 %v2200, 1.442695
  %v2214 = vpow.pop %v2213
  %v2215 = vmul.f32 %v2201, 1.442695
  %v2216 = vpow.pop %v2215
  %v2217 = vmul.f32 %v2202, 1.442695
  %v2218 = vpow.pop %v2217
  %v2219 = vadd.f32 %v2204, 1.0
  %v2220 = vadd.f32 %v2206, 1.0
  %v2221 = vadd.f32 %v2208, 1.0
  %v2222 = vadd.f32 %v2210, 1.0
  %v2223 = vadd.f32 %v2212, 1.0
  %v2224 = vadd.f32 %v2214, 1.0
  %v2225 = vadd.f32 %v2216, 1.0
  %v2226 = vadd.f32 %v2218, 1.0
  %v2227 = vrcp.pop %v2219
  %v2228 = vmul.f32 1.0, %v2227
  %v2229 = vrcp.pop %v2220
  %v2230 = vmul.f32 1.0, %v2229
  %v2231 = vrcp.pop %v2221
  %v2232 = vmul.f32 1.0, %v2231
  %v2233 = vrcp.pop %v2222
  %v2234 = vmul.f32 1.0, %v2233
  %v2235 = vrcp.pop %v2223
  %v2236 = vmul.f32 1.0, %v2235
  %v2237 = vrcp.pop %v2224
  %v2238 = vmul.f32 1.0, %v2237
  %v2239 = vrcp.pop %v2225
  %v2240 = vmul.f32 1.0, %v2239
  %v2241 = vrcp.pop %v2226
  %v2242 = vmul.f32 1.0, %v2241
  %v2251 = vrot.slane %v2187, 1
  %v2252 = vrot.slane %v2188, 1
  %v2253 = vrot.slane %v2189, 1
  %v2254 = vrot.slane %v2190, 1
  %v2255 = vrot.slane %v2191, 1
  %v2256 = vrot.slane %v2192, 1
  %v2257 = vrot.slane %v2193, 1
  %v2258 = vrot.slane %v2194, 1
  %v2267 = vxor.u32 %v2251, 2147483648
  %v2268 = vxor.u32 %v2252, 2147483648
  %v2269 = vxor.u32 %v2253, 2147483648
  %v2270 = vxor.u32 %v2254, 2147483648
  %v2271 = vxor.u32 %v2255, 2147483648
  %v2272 = vxor.u32 %v2256, 2147483648
  %v2273 = vxor.u32 %v2257, 2147483648
  %v2274 = vxor.u32 %v2258, 2147483648
  %v2275 = vmul.f32 %v2267, 1.442695
  %v2276 = vpow.pop %v2275
  %v2277 = vmul.f32 %v2268, 1.442695
  %v2278 = vpow.pop %v2277
  %v2279 = vmul.f32 %v2269, 1.442695
  %v2280 = vpow.pop %v2279
  %v2281 = vmul.f32 %v2270, 1.442695
  %v2282 = vpow.pop %v2281
  %v2283 = vmul.f32 %v2271, 1.442695
  %v2284 = vpow.pop %v2283
  %v2285 = vmul.f32 %v2272, 1.442695
  %v2286 = vpow.pop %v2285
  %v2287 = vmul.f32 %v2273, 1.442695
  %v2288 = vpow.pop %v2287
  %v2289 = vmul.f32 %v2274, 1.442695
  %v2290 = vpow.pop %v2289
  %v2291 = vadd.f32 %v2276, 1.0
  %v2292 = vadd.f32 %v2278, 1.0
  %v2293 = vadd.f32 %v2280, 1.0
  %v2294 = vadd.f32 %v2282, 1.0
  %v2295 = vadd.f32 %v2284, 1.0
  %v2296 = vadd.f32 %v2286, 1.0
  %v2297 = vadd.f32 %v2288, 1.0
  %v2298 = vadd.f32 %v2290, 1.0
  %v2299 = vrcp.pop %v2291
  %v2300 = vmul.f32 1.0, %v2299
  %v2301 = vrcp.pop %v2292
  %v2302 = vmul.f32 1.0, %v2301
  %v2303 = vrcp.pop %v2293
  %v2304 = vmul.f32 1.0, %v2303
  %v2305 = vrcp.pop %v2294
  %v2306 = vmul.f32 1.0, %v2305
  %v2307 = vrcp.pop %v2295
  %v2308 = vmul.f32 1.0, %v2307
  %v2309 = vrcp.pop %v2296
  %v2310 = vmul.f32 1.0, %v2309
  %v2311 = vrcp.pop %v2297
  %v2312 = vmul.f32 1.0, %v2311
  %v2313 = vrcp.pop %v2298
  %v2314 = vmul.f32 1.0, %v2313
  %v2315 = vrot.slane %v2187, 2
  %v2316 = vrot.slane %v2188, 2
  %v2317 = vrot.slane %v2189, 2
  %v2318 = vrot.slane %v2190, 2
  %v2319 = vrot.slane %v2191, 2
  %v2320 = vrot.slane %v2192, 2
  %v2321 = vrot.slane %v2193, 2
  %v2322 = vrot.slane %v2194, 2
  %v2331 = vtanh.pop %v2315
  %v2332 = vtanh.pop %v2316
  %v2333 = vtanh.pop %v2317
  %v2334 = vtanh.pop %v2318
  %v2335 = vtanh.pop %v2319
  %v2336 = vtanh.pop %v2320
  %v2337 = vtanh.pop %v2321
  %v2338 = vtanh.pop %v2322
  %v2339 = vrot.slane %v2187, 3
  %v2340 = vrot.slane %v2188, 3
  %v2341 = vrot.slane %v2189, 3
  %v2342 = vrot.slane %v2190, 3
  %v2343 = vrot.slane %v2191, 3
  %v2344 = vrot.slane %v2192, 3
  %v2345 = vrot.slane %v2193, 3
  %v2346 = vrot.slane %v2194, 3
  %v2355 = vxor.u32 %v2339, 2147483648
  %v2356 = vxor.u32 %v2340, 2147483648
  %v2357 = vxor.u32 %v2341, 2147483648
  %v2358 = vxor.u32 %v2342, 2147483648
  %v2359 = vxor.u32 %v2343, 2147483648
  %v2360 = vxor.u32 %v2344, 2147483648
  %v2361 = vxor.u32 %v2345, 2147483648
  %v2362 = vxor.u32 %v2346, 2147483648
  %v2363 = vmul.f32 %v2355, 1.442695
  %v2364 = vpow.pop %v2363
  %v2365 = vmul.f32 %v2356, 1.442695
  %v2366 = vpow.pop %v2365
  %v2367 = vmul.f32 %v2357, 1.442695
  %v2368 = vpow.pop %v2367
  %v2369 = vmul.f32 %v2358, 1.442695
  %v2370 = vpow.pop %v2369
  %v2371 = vmul.f32 %v2359, 1.442695
  %v2372 = vpow.pop %v2371
  %v2373 = vmul.f32 %v2360, 1.442695
  %v2374 = vpow.pop %v2373
  %v2375 = vmul.f32 %v2361, 1.442695
  %v2376 = vpow.pop %v2375
  %v2377 = vmul.f32 %v2362, 1.442695
  %v2378 = vpow.pop %v2377
  %v2379 = vadd.f32 %v2364, 1.0
  %v2380 = vadd.f32 %v2366, 1.0
  %v2381 = vadd.f32 %v2368, 1.0
  %v2382 = vadd.f32 %v2370, 1.0
  %v2383 = vadd.f32 %v2372, 1.0
  %v2384 = vadd.f32 %v2374, 1.0
  %v2385 = vadd.f32 %v2376, 1.0
  %v2386 = vadd.f32 %v2378, 1.0
  %v2387 = vrcp.pop %v2379
  %v2388 = vmul.f32 1.0, %v2387
  %v2389 = vrcp.pop %v2380
  %v2390 = vmul.f32 1.0, %v2389
  %v2391 = vrcp.pop %v2381
  %v2392 = vmul.f32 1.0, %v2391
  %v2393 = vrcp.pop %v2382
  %v2394 = vmul.f32 1.0, %v2393
  %v2395 = vrcp.pop %v2383
  %v2396 = vmul.f32 1.0, %v2395
  %v2397 = vrcp.pop %v2384
  %v2398 = vmul.f32 1.0, %v2397
  %v2399 = vrcp.pop %v2385
  %v2400 = vmul.f32 1.0, %v2399
  %v2401 = vrcp.pop %v2386
  %v2402 = vmul.f32 1.0, %v2401
  %v2403 = vmul.f32 %v2300, %v1795
  %v2404 = vmul.f32 %v2302, %v1796
  %v2405 = vmul.f32 %v2304, %v1797
  %v2406 = vmul.f32 %v2306, %v1798
  %v2407 = vmul.f32 %v2308, %v1799
  %v2408 = vmul.f32 %v2310, %v1800
  %v2409 = vmul.f32 %v2312, %v1801
  %v2410 = vmul.f32 %v2314, %v1802
  %v2411 = vmul.f32 %v2228, %v2331
  %v2412 = vmul.f32 %v2230, %v2332
  %v2413 = vmul.f32 %v2232, %v2333
  %v2414 = vmul.f32 %v2234, %v2334
  %v2415 = vmul.f32 %v2236, %v2335
  %v2416 = vmul.f32 %v2238, %v2336
  %v2417 = vmul.f32 %v2240, %v2337
  %v2418 = vmul.f32 %v2242, %v2338
  %v2419 = vadd.f32 %v2403, %v2411
  %v2420 = vadd.f32 %v2404, %v2412
  %v2421 = vadd.f32 %v2405, %v2413
  %v2422 = vadd.f32 %v2406, %v2414
  %v2423 = vadd.f32 %v2407, %v2415
  %v2424 = vadd.f32 %v2408, %v2416
  %v2425 = vadd.f32 %v2409, %v2417
  %v2426 = vadd.f32 %v2410, %v2418
  %v2427 = vtanh.pop %v2419
  %v2428 = vtanh.pop %v2420
  %v2429 = vtanh.pop %v2421
  %v2430 = vtanh.pop %v2422
  %v2431 = vtanh.pop %v2423
  %v2432 = vtanh.pop %v2424
  %v2433 = vtanh.pop %v2425
  %v2434 = vtanh.pop %v2426
  %v2435 = vmul.f32 %v2388, %v2427
  %v2436 = vmul.f32 %v2390, %v2428
  %v2437 = vmul.f32 %v2392, %v2429
  %v2438 = vmul.f32 %v2394, %v2430
  %v2439 = vmul.f32 %v2396, %v2431
  %v2440 = vmul.f32 %v2398, %v2432
  %v2441 = vmul.f32 %v2400, %v2433
  %v2442 = vmul.f32 %v2402, %v2434
  %2443 = vst [vmem:[%s2 + $0x3] sm:$0x1] %v2435
  %2444 = vst [vmem:[%s2 + $0xb] sm:$0x1] %v2436
  %2445 = vst [vmem:[%s2 + $0x13] sm:$0x1] %v2437
  %2446 = vst [vmem:[%s2 + $0x1b] sm:$0x1] %v2438
  %2447 = vst [vmem:[%s2 + $0x23] sm:$0x1] %v2439
  %2448 = vst [vmem:[%s2 + $0x2b] sm:$0x1] %v2440
  %2449 = vst [vmem:[%s2 + $0x33] sm:$0x1] %v2441
  %2450 = vst [vmem:[%s2 + $0x3b] sm:$0x1] %v2442
  %s2451 = scalar_lea.vmem %s0, 4
  %v2452 = vld [vmem:[%s2451] ss:$8 sm:$0xf]
  %s2453 = scalar_lea.vmem %s0, 36
  %v2454 = vld [vmem:[%s2453] ss:$8 sm:$0xf]
  %s2455 = scalar_lea.vmem %s0, 68
  %v2456 = vld [vmem:[%s2455] ss:$8 sm:$0xf]
  %s2457 = scalar_lea.vmem %s0, 100
  %v2458 = vld [vmem:[%s2457] ss:$8 sm:$0xf]
  %s2459 = scalar_lea.vmem %s0, 132
  %v2460 = vld [vmem:[%s2459] ss:$8 sm:$0xf]
  %s2461 = scalar_lea.vmem %s0, 164
  %v2462 = vld [vmem:[%s2461] ss:$8 sm:$0xf]
  %s2463 = scalar_lea.vmem %s0, 196
  %v2464 = vld [vmem:[%s2463] ss:$8 sm:$0xf]
  %s2465 = scalar_lea.vmem %s0, 228
  %v2466 = vld [vmem:[%s2465] ss:$8 sm:$0xf]
  %v2467 = vld [vmem:[%s1] sm:$0xff]
  %v2468 = vld [vmem:[%s1 + $0x8] sm:$0xff]
  %v2469 = vld [vmem:[%s1 + $0x10] sm:$0xff]
  %v2470 = vld [vmem:[%s1 + $0x18] sm:$0xff]
  %v2471 = vld [vmem:[%s1 + $0x20] sm:$0xff]
  %v2472 = vld [vmem:[%s1 + $0x28] sm:$0xff]
  %v2473 = vld [vmem:[%s1 + $0x30] sm:$0xff]
  %v2474 = vld [vmem:[%s1 + $0x38] sm:$0xff]
  %v2475 = vld [vmem:[%s1 + $0x40] sm:$0xff]
  %v2476 = vld [vmem:[%s1 + $0x48] sm:$0xff]
  %v2477 = vld [vmem:[%s1 + $0x50] sm:$0xff]
  %v2478 = vld [vmem:[%s1 + $0x58] sm:$0xff]
  %v2479 = vld [vmem:[%s1 + $0x60] sm:$0xff]
  %v2480 = vld [vmem:[%s1 + $0x68] sm:$0xff]
  %v2481 = vld [vmem:[%s1 + $0x70] sm:$0xff]
  %v2482 = vld [vmem:[%s1 + $0x78] sm:$0xff]
  %v2483 = vld [vmem:[%s1 + $0x80] sm:$0xff]
  %v2484 = vld [vmem:[%s1 + $0x88] sm:$0xff]
  %v2485 = vld [vmem:[%s1 + $0x90] sm:$0xff]
  %v2486 = vld [vmem:[%s1 + $0x98] sm:$0xff]
  %v2487 = vld [vmem:[%s1 + $0xa0] sm:$0xff]
  %v2488 = vld [vmem:[%s1 + $0xa8] sm:$0xff]
  %v2489 = vld [vmem:[%s1 + $0xb0] sm:$0xff]
  %v2490 = vld [vmem:[%s1 + $0xb8] sm:$0xff]
  %v2491 = vld [vmem:[%s1 + $0xc0] sm:$0xff]
  %v2492 = vld [vmem:[%s1 + $0xc8] sm:$0xff]
  %v2493 = vld [vmem:[%s1 + $0xd0] sm:$0xff]
  %v2494 = vld [vmem:[%s1 + $0xd8] sm:$0xff]
  %v2495 = vld [vmem:[%s1 + $0xe0] sm:$0xff]
  %v2496 = vld [vmem:[%s1 + $0xe8] sm:$0xff]
  %v2497 = vld [vmem:[%s1 + $0xf0] sm:$0xff]
  %v2498 = vld [vmem:[%s1 + $0xf8] sm:$0xff]
  %v2499 = vld [vmem:[%s1 + $0x100] sm:$0xff]
  %v2500 = vld [vmem:[%s1 + $0x108] sm:$0xff]
  %v2501 = vld [vmem:[%s1 + $0x110] sm:$0xff]
  %v2502 = vld [vmem:[%s1 + $0x118] sm:$0xff]
  %v2503 = vld [vmem:[%s1 + $0x120] sm:$0xff]
  %v2504 = vld [vmem:[%s1 + $0x128] sm:$0xff]
  %v2505 = vld [vmem:[%s1 + $0x130] sm:$0xff]
  %v2506 = vld [vmem:[%s1 + $0x138] sm:$0xff]
  %v2507 = vld [vmem:[%s1 + $0x140] sm:$0xff]
  %v2508 = vld [vmem:[%s1 + $0x148] sm:$0xff]
  %v2509 = vld [vmem:[%s1 + $0x150] sm:$0xff]
  %v2510 = vld [vmem:[%s1 + $0x158] sm:$0xff]
  %v2511 = vld [vmem:[%s1 + $0x160] sm:$0xff]
  %v2512 = vld [vmem:[%s1 + $0x168] sm:$0xff]
  %v2513 = vld [vmem:[%s1 + $0x170] sm:$0xff]
  %v2514 = vld [vmem:[%s1 + $0x178] sm:$0xff]
  %v2515 = vld [vmem:[%s1 + $0x180] sm:$0xff]
  %v2516 = vld [vmem:[%s1 + $0x188] sm:$0xff]
  %v2517 = vld [vmem:[%s1 + $0x190] sm:$0xff]
  %v2518 = vld [vmem:[%s1 + $0x198] sm:$0xff]
  %v2519 = vld [vmem:[%s1 + $0x1a0] sm:$0xff]
  %v2520 = vld [vmem:[%s1 + $0x1a8] sm:$0xff]
  %v2521 = vld [vmem:[%s1 + $0x1b0] sm:$0xff]
  %v2522 = vld [vmem:[%s1 + $0x1b8] sm:$0xff]
  %v2523 = vld [vmem:[%s1 + $0x1c0] sm:$0xff]
  %v2524 = vld [vmem:[%s1 + $0x1c8] sm:$0xff]
  %v2525 = vld [vmem:[%s1 + $0x1d0] sm:$0xff]
  %v2526 = vld [vmem:[%s1 + $0x1d8] sm:$0xff]
  %v2527 = vld [vmem:[%s1 + $0x1e0] sm:$0xff]
  %v2528 = vld [vmem:[%s1 + $0x1e8] sm:$0xff]
  %v2529 = vld [vmem:[%s1 + $0x1f0] sm:$0xff]
  %v2530 = vld [vmem:[%s1 + $0x1f8] sm:$0xff]
  %v2539 = vcombine.low %v2435, %v2436
  %v2540 = vcombine.low %v2437, %v2438
  %v2541 = vcombine.low %v2439, %v2440
  %v2542 = vcombine.low %v2441, %v2442
  %v2544 = vunpack.c.l.s4 1966171168
  %v2545 = vunpack.c.0.s8 %v2544
  %v2546 = vlaneseq
  %v2547 = vshrl.u32 %v2546, 7
  %v2548 = vsub.s32 %v2545, %v2547
  %v2549 = vrot.slane %v2539, %v2548
  %v2551 = vunpack.c.l.s4 1966171168
  %v2552 = vunpack.c.0.s8 %v2551
  %v2553 = vlaneseq
  %v2554 = vshrl.u32 %v2553, 7
  %v2555 = vsub.s32 %v2552, %v2554
  %v2556 = vrot.slane %v2540, %v2555
  %v2558 = vunpack.c.l.s4 1966171168
  %v2559 = vunpack.c.0.s8 %v2558
  %v2560 = vlaneseq
  %v2561 = vshrl.u32 %v2560, 7
  %v2562 = vsub.s32 %v2559, %v2561
  %v2563 = vrot.slane %v2541, %v2562
  %v2565 = vunpack.c.l.s4 1966171168
  %v2566 = vunpack.c.0.s8 %v2565
  %v2567 = vlaneseq
  %v2568 = vshrl.u32 %v2567, 7
  %v2569 = vsub.s32 %v2566, %v2568
  %v2570 = vrot.slane %v2542, %v2569
  %v2571 = vcombine.low %v2549, %v2556
  %v2572 = vcombine.low %v2563, %v2570
  %v2574 = vunpack.c.l.s4 1966171168
  %v2575 = vunpack.c.0.s8 %v2574
  %v2576 = vlaneseq
  %v2577 = vshrl.u32 %v2576, 7
  %v2578 = vsub.s32 %v2575, %v2577
  %v2579 = vrot.slane %v2571, %v2578
  %v2581 = vunpack.c.l.s4 1966171168
  %v2582 = vunpack.c.0.s8 %v2581
  %v2583 = vlaneseq
  %v2584 = vshrl.u32 %v2583, 7
  %v2585 = vsub.s32 %v2582, %v2584
  %v2586 = vrot.slane %v2572, %v2585
  %v2587 = vcombine.low %v2579, %v2586
  %2589 = vmatprep.subr.mxu0 %v2528
  %2590 = vmatpush1.msra.mxu0 %v2527
  %2591 = vmatprep.subr.mxu0 %v2524
  %2592 = vmatpush1.msra.mxu0 %v2523
  %2593 = vmatprep.subr.mxu0 %v2520
  %2594 = vmatpush1.msra.mxu0 %v2519
  %2595 = vmatprep.subr.mxu0 %v2516
  %2596 = vmatpush1.msra.mxu0 %v2515
  %2597 = vmatprep.subr.mxu0 %v2512
  %2598 = vmatpush1.msra.mxu0 %v2511
  %2599 = vmatprep.subr.mxu0 %v2508
  %2600 = vmatpush1.msra.mxu0 %v2507
  %2601 = vmatprep.subr.mxu0 %v2504
  %2602 = vmatpush1.msra.mxu0 %v2503
  %2603 = vmatprep.subr.mxu0 %v2500
  %2604 = vmatpush1.msra.mxu0 %v2499
  %2605 = vmatprep.subr.mxu0 %v2496
  %2606 = vmatpush1.msra.mxu0 %v2495
  %2607 = vmatprep.subr.mxu0 %v2492
  %2608 = vmatpush1.msra.mxu0 %v2491
  %2609 = vmatprep.subr.mxu0 %v2488
  %2610 = vmatpush1.msra.mxu0 %v2487
  %2611 = vmatprep.subr.mxu0 %v2484
  %2612 = vmatpush1.msra.mxu0 %v2483
  %2613 = vmatprep.subr.mxu0 %v2480
  %2614 = vmatpush1.msra.mxu0 %v2479
  %2615 = vmatprep.subr.mxu0 %v2476
  %2616 = vmatpush1.msra.mxu0 %v2475
  %2617 = vmatprep.subr.mxu0 %v2472
  %2618 = vmatpush1.msra.mxu0 %v2471
  %2619 = vmatprep.subr.mxu0 %v2468
  %2620 = vmatpush1.msra.mxu0 %v2467
  %2621 = vmatprep.subr.mxu0 0.0
  %2622 = vmatpush2.msra.mxu0 0.0
  %2623 = vmatprep.subr.mxu0 0.0
  %2624 = vmatpush2.msra.mxu0 0.0
  %2625 = vmatprep.subr.mxu0 0.0
  %2626 = vmatpush2.msra.mxu0 0.0
  %2627 = vmatprep.subr.mxu0 0.0
  %2628 = vmatpush2.msra.mxu0 0.0
  %2629 = vmatprep.subr.mxu0 0.0
  %2630 = vmatpush2.msra.mxu0 0.0
  %2631 = vmatprep.subr.mxu0 0.0
  %2632 = vmatpush2.msra.mxu0 0.0
  %2633 = vmatprep.subr.mxu0 0.0
  %2634 = vmatpush2.msra.mxu0 0.0
  %2635 = vmatprep.subr.mxu0 0.0
  %2636 = vmatpush2.msra.mxu0 0.0
  %2637 = vmatprep.subr.mxu0 0.0
  %2638 = vmatpush2.msra.mxu0 0.0
  %2639 = vmatprep.subr.mxu0 0.0
  %2640 = vmatpush2.msra.mxu0 0.0
  %2641 = vmatprep.subr.mxu0 0.0
  %2642 = vmatpush2.msra.mxu0 0.0
  %2643 = vmatprep.subr.mxu0 0.0
  %2644 = vmatpush2.msra.mxu0 0.0
  %2645 = vmatprep.subr.mxu0 0.0
  %2646 = vmatpush2.msra.mxu0 0.0
  %2647 = vmatprep.subr.mxu0 0.0
  %2648 = vmatpush2.msra.mxu0 0.0
  %2649 = vmatprep.subr.mxu0 0.0
  %2650 = vmatpush2.msra.mxu0 0.0
  %2651 = vmatprep.subr.mxu0 0.0
  %2652 = vmatpush2.msra.mxu0 0.0
  %2653 = vmatprep.mubr.f32.mxu0 0.0
  %2654 = vmatmul.mubr.f32.gmra.mxu0 %v2587
  %v2655 = vpop.f32.mrf.mxu0
  %v2656 = vadd.f32 0.0, %v2655
  %v2657 = vpop.f32.mrf.mxu0
  %v2658 = vadd.f32 0.0, %v2657
  %2659 = vdwg.mxu0
  %2660 = vmatprep.subr.mxu0 %v2530
  %2661 = vmatpush1.msra.mxu0 %v2529
  %2662 = vmatprep.subr.mxu0 %v2526
  %2663 = vmatpush1.msra.mxu0 %v2525
  %2664 = vmatprep.subr.mxu0 %v2522
  %2665 = vmatpush1.msra.mxu0 %v2521
  %2666 = vmatprep.subr.mxu0 %v2518
  %2667 = vmatpush1.msra.mxu0 %v2517
  %2668 = vmatprep.subr.mxu0 %v2514
  %2669 = vmatpush1.msra.mxu0 %v2513
  %2670 = vmatprep.subr.mxu0 %v2510
  %2671 = vmatpush1.msra.mxu0 %v2509
  %2672 = vmatprep.subr.mxu0 %v2506
  %2673 = vmatpush1.msra.mxu0 %v2505
  %2674 = vmatprep.subr.mxu0 %v2502
  %2675 = vmatpush1.msra.mxu0 %v2501
  %2676 = vmatprep.subr.mxu0 %v2498
  %2677 = vmatpush1.msra.mxu0 %v2497
  %2678 = vmatprep.subr.mxu0 %v2494
  %2679 = vmatpush1.msra.mxu0 %v2493
  %2680 = vmatprep.subr.mxu0 %v2490
  %2681 = vmatpush1.msra.mxu0 %v2489
  %2682 = vmatprep.subr.mxu0 %v2486
  %2683 = vmatpush1.msra.mxu0 %v2485
  %2684 = vmatprep.subr.mxu0 %v2482
  %2685 = vmatpush1.msra.mxu0 %v2481
  %2686 = vmatprep.subr.mxu0 %v2478
  %2687 = vmatpush1.msra.mxu0 %v2477
  %2688 = vmatprep.subr.mxu0 %v2474
  %2689 = vmatpush1.msra.mxu0 %v2473
  %2690 = vmatprep.subr.mxu0 %v2470
  %2691 = vmatpush1.msra.mxu0 %v2469
  %2692 = vmatprep.subr.mxu0 0.0
  %2693 = vmatpush2.msra.mxu0 0.0
  %2694 = vmatprep.subr.mxu0 0.0
  %2695 = vmatpush2.msra.mxu0 0.0
  %2696 = vmatprep.subr.mxu0 0.0
  %2697 = vmatpush2.msra.mxu0 0.0
  %2698 = vmatprep.subr.mxu0 0.0
  %2699 = vmatpush2.msra.mxu0 0.0
  %2700 = vmatprep.subr.mxu0 0.0
  %2701 = vmatpush2.msra.mxu0 0.0
  %2702 = vmatprep.subr.mxu0 0.0
  %2703 = vmatpush2.msra.mxu0 0.0
  %2704 = vmatprep.subr.mxu0 0.0
  %2705 = vmatpush2.msra.mxu0 0.0
  %2706 = vmatprep.subr.mxu0 0.0
  %2707 = vmatpush2.msra.mxu0 0.0
  %2708 = vmatprep.subr.mxu0 0.0
  %2709 = vmatpush2.msra.mxu0 0.0
  %2710 = vmatprep.subr.mxu0 0.0
  %2711 = vmatpush2.msra.mxu0 0.0
  %2712 = vmatprep.subr.mxu0 0.0
  %2713 = vmatpush2.msra.mxu0 0.0
  %2714 = vmatprep.subr.mxu0 0.0
  %2715 = vmatpush2.msra.mxu0 0.0
  %2716 = vmatprep.subr.mxu0 0.0
  %2717 = vmatpush2.msra.mxu0 0.0
  %2718 = vmatprep.subr.mxu0 0.0
  %2719 = vmatpush2.msra.mxu0 0.0
  %2720 = vmatprep.subr.mxu0 0.0
  %2721 = vmatpush2.msra.mxu0 0.0
  %2722 = vmatprep.subr.mxu0 0.0
  %2723 = vmatpush2.msra.mxu0 0.0
  %2724 = vmatprep.mubr.f32.mxu0 0.0
  %2725 = vmatmul.mubr.f32.gmra.mxu0 %v2587
  %v2726 = vpop.f32.mrf.mxu0
  %v2727 = vadd.f32 0.0, %v2726
  %v2728 = vpop.f32.mrf.mxu0
  %v2729 = vadd.f32 0.0, %v2728
  %2730 = vdwg.mxu0
  %v2735 = vcombine.low %v2656, %v2658
  %v2736 = vcombine.high %v2656, %v2658
  %v2737 = vcombine.low %v2727, %v2729
  %v2738 = vcombine.high %v2727, %v2729
  %v2740 = vunpack.c.l.s4 1966171168
  %v2741 = vunpack.c.0.s8 %v2740
  %v2742 = vlaneseq
  %v2743 = vshrl.u32 %v2742, 7
  %v2744 = vsub.s32 %v2741, %v2743
  %v2745 = vrot.slane %v2735, %v2744
  %v2747 = vunpack.c.l.s4 1966171168
  %v2748 = vunpack.c.0.s8 %v2747
  %v2749 = vlaneseq
  %v2750 = vshrl.u32 %v2749, 7
  %v2751 = vsub.s32 %v2748, %v2750
  %v2752 = vrot.slane %v2736, %v2751
  %v2754 = vunpack.c.l.s4 1966171168
  %v2755 = vunpack.c.0.s8 %v2754
  %v2756 = vlaneseq
  %v2757 = vshrl.u32 %v2756, 7
  %v2758 = vsub.s32 %v2755, %v2757
  %v2759 = vrot.slane %v2737, %v2758
  %v2761 = vunpack.c.l.s4 1966171168
  %v2762 = vunpack.c.0.s8 %v2761
  %v2763 = vlaneseq
  %v2764 = vshrl.u32 %v2763, 7
  %v2765 = vsub.s32 %v2762, %v2764
  %v2766 = vrot.slane %v2738, %v2765
  %v2767 = vcombine.low %v2745, %v2759
  %v2768 = vcombine.high %v2745, %v2759
  %v2769 = vcombine.low %v2752, %v2766
  %v2770 = vcombine.high %v2752, %v2766
  %v2772 = vunpack.c.l.s4 1966171168
  %v2773 = vunpack.c.0.s8 %v2772
  %v2774 = vlaneseq
  %v2775 = vshrl.u32 %v2774, 7
  %v2776 = vsub.s32 %v2773, %v2775
  %v2777 = vrot.slane %v2767, %v2776
  %v2779 = vunpack.c.l.s4 1966171168
  %v2780 = vunpack.c.0.s8 %v2779
  %v2781 = vlaneseq
  %v2782 = vshrl.u32 %v2781, 7
  %v2783 = vsub.s32 %v2780, %v2782
  %v2784 = vrot.slane %v2769, %v2783
  %v2786 = vunpack.c.l.s4 1966171168
  %v2787 = vunpack.c.0.s8 %v2786
  %v2788 = vlaneseq
  %v2789 = vshrl.u32 %v2788, 7
  %v2790 = vsub.s32 %v2787, %v2789
  %v2791 = vrot.slane %v2768, %v2790
  %v2793 = vunpack.c.l.s4 1966171168
  %v2794 = vunpack.c.0.s8 %v2793
  %v2795 = vlaneseq
  %v2796 = vshrl.u32 %v2795, 7
  %v2797 = vsub.s32 %v2794, %v2796
  %v2798 = vrot.slane %v2770, %v2797
  %v2799 = vcombine.high %v2777, %v2777
  %v2800 = vcombine.high %v2784, %v2784
  %v2801 = vcombine.high %v2791, %v2791
  %v2802 = vcombine.high %v2798, %v2798
  %v2811 = vadd.f32 %v2452, %v2777
  %v2812 = vadd.f32 %v2454, %v2791
  %v2813 = vadd.f32 %v2456, %v2799
  %v2814 = vadd.f32 %v2458, %v2801
  %v2815 = vadd.f32 %v2460, %v2784
  %v2816 = vadd.f32 %v2462, %v2798
  %v2817 = vadd.f32 %v2464, %v2800
  %v2818 = vadd.f32 %v2466, %v2802
  %v2819 = vxor.u32 %v2811, 2147483648
  %v2820 = vxor.u32 %v2812, 2147483648
  %v2821 = vxor.u32 %v2813, 2147483648
  %v2822 = vxor.u32 %v2814, 2147483648
  %v2823 = vxor.u32 %v2815, 2147483648
  %v2824 = vxor.u32 %v2816, 2147483648
  %v2825 = vxor.u32 %v2817, 2147483648
  %v2826 = vxor.u32 %v2818, 2147483648
  %v2827 = vmul.f32 %v2819, 1.442695
  %v2828 = vpow.pop %v2827
  %v2829 = vmul.f32 %v2820, 1.442695
  %v2830 = vpow.pop %v2829
  %v2831 = vmul.f32 %v2821, 1.442695
  %v2832 = vpow.pop %v2831
  %v2833 = vmul.f32 %v2822, 1.442695
  %v2834 = vpow.pop %v2833
  %v2835 = vmul.f32 %v2823, 1.442695
  %v2836 = vpow.pop %v2835
  %v2837 = vmul.f32 %v2824, 1.442695
  %v2838 = vpow.pop %v2837
  %v2839 = vmul.f32 %v2825, 1.442695
  %v2840 = vpow.pop %v2839
  %v2841 = vmul.f32 %v2826, 1.442695
  %v2842 = vpow.pop %v2841
  %v2843 = vadd.f32 %v2828, 1.0
  %v2844 = vadd.f32 %v2830, 1.0
  %v2845 = vadd.f32 %v2832, 1.0
  %v2846 = vadd.f32 %v2834, 1.0
  %v2847 = vadd.f32 %v2836, 1.0
  %v2848 = vadd.f32 %v2838, 1.0
  %v2849 = vadd.f32 %v2840, 1.0
  %v2850 = vadd.f32 %v2842, 1.0
  %v2851 = vrcp.pop %v2843
  %v2852 = vmul.f32 1.0, %v2851
  %v2853 = vrcp.pop %v2844
  %v2854 = vmul.f32 1.0, %v2853
  %v2855 = vrcp.pop %v2845
  %v2856 = vmul.f32 1.0, %v2855
  %v2857 = vrcp.pop %v2846
  %v2858 = vmul.f32 1.0, %v2857
  %v2859 = vrcp.pop %v2847
  %v2860 = vmul.f32 1.0, %v2859
  %v2861 = vrcp.pop %v2848
  %v2862 = vmul.f32 1.0, %v2861
  %v2863 = vrcp.pop %v2849
  %v2864 = vmul.f32 1.0, %v2863
  %v2865 = vrcp.pop %v2850
  %v2866 = vmul.f32 1.0, %v2865
  %v2875 = vrot.slane %v2811, 1
  %v2876 = vrot.slane %v2812, 1
  %v2877 = vrot.slane %v2813, 1
  %v2878 = vrot.slane %v2814, 1
  %v2879 = vrot.slane %v2815, 1
  %v2880 = vrot.slane %v2816, 1
  %v2881 = vrot.slane %v2817, 1
  %v2882 = vrot.slane %v2818, 1
  %v2891 = vxor.u32 %v2875, 2147483648
  %v2892 = vxor.u32 %v2876, 2147483648
  %v2893 = vxor.u32 %v2877, 2147483648
  %v2894 = vxor.u32 %v2878, 2147483648
  %v2895 = vxor.u32 %v2879, 2147483648
  %v2896 = vxor.u32 %v2880, 2147483648
  %v2897 = vxor.u32 %v2881, 2147483648
  %v2898 = vxor.u32 %v2882, 2147483648
  %v2899 = vmul.f32 %v2891, 1.442695
  %v2900 = vpow.pop %v2899
  %v2901 = vmul.f32 %v2892, 1.442695
  %v2902 = vpow.pop %v2901
  %v2903 = vmul.f32 %v2893, 1.442695
  %v2904 = vpow.pop %v2903
  %v2905 = vmul.f32 %v2894, 1.442695
  %v2906 = vpow.pop %v2905
  %v2907 = vmul.f32 %v2895, 1.442695
  %v2908 = vpow.pop %v2907
  %v2909 = vmul.f32 %v2896, 1.442695
  %v2910 = vpow.pop %v2909
  %v2911 = vmul.f32 %v2897, 1.442695
  %v2912 = vpow.pop %v2911
  %v2913 = vmul.f32 %v2898, 1.442695
  %v2914 = vpow.pop %v2913
  %v2915 = vadd.f32 %v2900, 1.0
  %v2916 = vadd.f32 %v2902, 1.0
  %v2917 = vadd.f32 %v2904, 1.0
  %v2918 = vadd.f32 %v2906, 1.0
  %v2919 = vadd.f32 %v2908, 1.0
  %v2920 = vadd.f32 %v2910, 1.0
  %v2921 = vadd.f32 %v2912, 1.0
  %v2922 = vadd.f32 %v2914, 1.0
  %v2923 = vrcp.pop %v2915
  %v2924 = vmul.f32 1.0, %v2923
  %v2925 = vrcp.pop %v2916
  %v2926 = vmul.f32 1.0, %v2925
  %v2927 = vrcp.pop %v2917
  %v2928 = vmul.f32 1.0, %v2927
  %v2929 = vrcp.pop %v2918
  %v2930 = vmul.f32 1.0, %v2929
  %v2931 = vrcp.pop %v2919
  %v2932 = vmul.f32 1.0, %v2931
  %v2933 = vrcp.pop %v2920
  %v2934 = vmul.f32 1.0, %v2933
  %v2935 = vrcp.pop %v2921
  %v2936 = vmul.f32 1.0, %v2935
  %v2937 = vrcp.pop %v2922
  %v2938 = vmul.f32 1.0, %v2937
  %v2939 = vrot.slane %v2811, 2
  %v2940 = vrot.slane %v2812, 2
  %v2941 = vrot.slane %v2813, 2
  %v2942 = vrot.slane %v2814, 2
  %v2943 = vrot.slane %v2815, 2
  %v2944 = vrot.slane %v2816, 2
  %v2945 = vrot.slane %v2817, 2
  %v2946 = vrot.slane %v2818, 2
  %v2955 = vtanh.pop %v2939
  %v2956 = vtanh.pop %v2940
  %v2957 = vtanh.pop %v2941
  %v2958 = vtanh.pop %v2942
  %v2959 = vtanh.pop %v2943
  %v2960 = vtanh.pop %v2944
  %v2961 = vtanh.pop %v2945
  %v2962 = vtanh.pop %v2946
  %v2963 = vrot.slane %v2811, 3
  %v2964 = vrot.slane %v2812, 3
  %v2965 = vrot.slane %v2813, 3
  %v2966 = vrot.slane %v2814, 3
  %v2967 = vrot.slane %v2815, 3
  %v2968 = vrot.slane %v2816, 3
  %v2969 = vrot.slane %v2817, 3
  %v2970 = vrot.slane %v2818, 3
  %v2979 = vxor.u32 %v2963, 2147483648
  %v2980 = vxor.u32 %v2964, 2147483648
  %v2981 = vxor.u32 %v2965, 2147483648
  %v2982 = vxor.u32 %v2966, 2147483648
  %v2983 = vxor.u32 %v2967, 2147483648
  %v2984 = vxor.u32 %v2968, 2147483648
  %v2985 = vxor.u32 %v2969, 2147483648
  %v2986 = vxor.u32 %v2970, 2147483648
  %v2987 = vmul.f32 %v2979, 1.442695
  %v2988 = vpow.pop %v2987
  %v2989 = vmul.f32 %v2980, 1.442695
  %v2990 = vpow.pop %v2989
  %v2991 = vmul.f32 %v2981, 1.442695
  %v2992 = vpow.pop %v2991
  %v2993 = vmul.f32 %v2982, 1.442695
  %v2994 = vpow.pop %v2993
  %v2995 = vmul.f32 %v2983, 1.442695
  %v2996 = vpow.pop %v2995
  %v2997 = vmul.f32 %v2984, 1.442695
  %v2998 = vpow.pop %v2997
  %v2999 = vmul.f32 %v2985, 1.442695
  %v3000 = vpow.pop %v2999
  %v3001 = vmul.f32 %v2986, 1.442695
  %v3002 = vpow.pop %v3001
  %v3003 = vadd.f32 %v2988, 1.0
  %v3004 = vadd.f32 %v2990, 1.0
  %v3005 = vadd.f32 %v2992, 1.0
  %v3006 = vadd.f32 %v2994, 1.0
  %v3007 = vadd.f32 %v2996, 1.0
  %v3008 = vadd.f32 %v2998, 1.0
  %v3009 = vadd.f32 %v3000, 1.0
  %v3010 = vadd.f32 %v3002, 1.0
  %v3011 = vrcp.pop %v3003
  %v3012 = vmul.f32 1.0, %v3011
  %v3013 = vrcp.pop %v3004
  %v3014 = vmul.f32 1.0, %v3013
  %v3015 = vrcp.pop %v3005
  %v3016 = vmul.f32 1.0, %v3015
  %v3017 = vrcp.pop %v3006
  %v3018 = vmul.f32 1.0, %v3017
  %v3019 = vrcp.pop %v3007
  %v3020 = vmul.f32 1.0, %v3019
  %v3021 = vrcp.pop %v3008
  %v3022 = vmul.f32 1.0, %v3021
  %v3023 = vrcp.pop %v3009
  %v3024 = vmul.f32 1.0, %v3023
  %v3025 = vrcp.pop %v3010
  %v3026 = vmul.f32 1.0, %v3025
  %v3027 = vmul.f32 %v2924, %v2419
  %v3028 = vmul.f32 %v2926, %v2420
  %v3029 = vmul.f32 %v2928, %v2421
  %v3030 = vmul.f32 %v2930, %v2422
  %v3031 = vmul.f32 %v2932, %v2423
  %v3032 = vmul.f32 %v2934, %v2424
  %v3033 = vmul.f32 %v2936, %v2425
  %v3034 = vmul.f32 %v2938, %v2426
  %v3035 = vmul.f32 %v2852, %v2955
  %v3036 = vmul.f32 %v2854, %v2956
  %v3037 = vmul.f32 %v2856, %v2957
  %v3038 = vmul.f32 %v2858, %v2958
  %v3039 = vmul.f32 %v2860, %v2959
  %v3040 = vmul.f32 %v2862, %v2960
  %v3041 = vmul.f32 %v2864, %v2961
  %v3042 = vmul.f32 %v2866, %v2962
  %v3043 = vadd.f32 %v3027, %v3035
  %v3044 = vadd.f32 %v3028, %v3036
  %v3045 = vadd.f32 %v3029, %v3037
  %v3046 = vadd.f32 %v3030, %v3038
  %v3047 = vadd.f32 %v3031, %v3039
  %v3048 = vadd.f32 %v3032, %v3040
  %v3049 = vadd.f32 %v3033, %v3041
  %v3050 = vadd.f32 %v3034, %v3042
  %v3051 = vtanh.pop %v3043
  %v3052 = vtanh.pop %v3044
  %v3053 = vtanh.pop %v3045
  %v3054 = vtanh.pop %v3046
  %v3055 = vtanh.pop %v3047
  %v3056 = vtanh.pop %v3048
  %v3057 = vtanh.pop %v3049
  %v3058 = vtanh.pop %v3050
  %v3059 = vmul.f32 %v3012, %v3051
  %v3060 = vmul.f32 %v3014, %v3052
  %v3061 = vmul.f32 %v3016, %v3053
  %v3062 = vmul.f32 %v3018, %v3054
  %v3063 = vmul.f32 %v3020, %v3055
  %v3064 = vmul.f32 %v3022, %v3056
  %v3065 = vmul.f32 %v3024, %v3057
  %v3066 = vmul.f32 %v3026, %v3058
  %3067 = vst [vmem:[%s2 + $0x4] sm:$0x1] %v3059
  %3068 = vst [vmem:[%s2 + $0xc] sm:$0x1] %v3060
  %3069 = vst [vmem:[%s2 + $0x14] sm:$0x1] %v3061
  %3070 = vst [vmem:[%s2 + $0x1c] sm:$0x1] %v3062
  %3071 = vst [vmem:[%s2 + $0x24] sm:$0x1] %v3063
  %3072 = vst [vmem:[%s2 + $0x2c] sm:$0x1] %v3064
  %3073 = vst [vmem:[%s2 + $0x34] sm:$0x1] %v3065
  %3074 = vst [vmem:[%s2 + $0x3c] sm:$0x1] %v3066
  %s3075 = scalar_lea.vmem %s0, 5
  %v3076 = vld [vmem:[%s3075] ss:$8 sm:$0xf]
  %s3077 = scalar_lea.vmem %s0, 37
  %v3078 = vld [vmem:[%s3077] ss:$8 sm:$0xf]
  %s3079 = scalar_lea.vmem %s0, 69
  %v3080 = vld [vmem:[%s3079] ss:$8 sm:$0xf]
  %s3081 = scalar_lea.vmem %s0, 101
  %v3082 = vld [vmem:[%s3081] ss:$8 sm:$0xf]
  %s3083 = scalar_lea.vmem %s0, 133
  %v3084 = vld [vmem:[%s3083] ss:$8 sm:$0xf]
  %s3085 = scalar_lea.vmem %s0, 165
  %v3086 = vld [vmem:[%s3085] ss:$8 sm:$0xf]
  %s3087 = scalar_lea.vmem %s0, 197
  %v3088 = vld [vmem:[%s3087] ss:$8 sm:$0xf]
  %s3089 = scalar_lea.vmem %s0, 229
  %v3090 = vld [vmem:[%s3089] ss:$8 sm:$0xf]
  %v3091 = vld [vmem:[%s1] sm:$0xff]
  %v3092 = vld [vmem:[%s1 + $0x8] sm:$0xff]
  %v3093 = vld [vmem:[%s1 + $0x10] sm:$0xff]
  %v3094 = vld [vmem:[%s1 + $0x18] sm:$0xff]
  %v3095 = vld [vmem:[%s1 + $0x20] sm:$0xff]
  %v3096 = vld [vmem:[%s1 + $0x28] sm:$0xff]
  %v3097 = vld [vmem:[%s1 + $0x30] sm:$0xff]
  %v3098 = vld [vmem:[%s1 + $0x38] sm:$0xff]
  %v3099 = vld [vmem:[%s1 + $0x40] sm:$0xff]
  %v3100 = vld [vmem:[%s1 + $0x48] sm:$0xff]
  %v3101 = vld [vmem:[%s1 + $0x50] sm:$0xff]
  %v3102 = vld [vmem:[%s1 + $0x58] sm:$0xff]
  %v3103 = vld [vmem:[%s1 + $0x60] sm:$0xff]
  %v3104 = vld [vmem:[%s1 + $0x68] sm:$0xff]
  %v3105 = vld [vmem:[%s1 + $0x70] sm:$0xff]
  %v3106 = vld [vmem:[%s1 + $0x78] sm:$0xff]
  %v3107 = vld [vmem:[%s1 + $0x80] sm:$0xff]
  %v3108 = vld [vmem:[%s1 + $0x88] sm:$0xff]
  %v3109 = vld [vmem:[%s1 + $0x90] sm:$0xff]
  %v3110 = vld [vmem:[%s1 + $0x98] sm:$0xff]
  %v3111 = vld [vmem:[%s1 + $0xa0] sm:$0xff]
  %v3112 = vld [vmem:[%s1 + $0xa8] sm:$0xff]
  %v3113 = vld [vmem:[%s1 + $0xb0] sm:$0xff]
  %v3114 = vld [vmem:[%s1 + $0xb8] sm:$0xff]
  %v3115 = vld [vmem:[%s1 + $0xc0] sm:$0xff]
  %v3116 = vld [vmem:[%s1 + $0xc8] sm:$0xff]
  %v3117 = vld [vmem:[%s1 + $0xd0] sm:$0xff]
  %v3118 = vld [vmem:[%s1 + $0xd8] sm:$0xff]
  %v3119 = vld [vmem:[%s1 + $0xe0] sm:$0xff]
  %v3120 = vld [vmem:[%s1 + $0xe8] sm:$0xff]
  %v3121 = vld [vmem:[%s1 + $0xf0] sm:$0xff]
  %v3122 = vld [vmem:[%s1 + $0xf8] sm:$0xff]
  %v3123 = vld [vmem:[%s1 + $0x100] sm:$0xff]
  %v3124 = vld [vmem:[%s1 + $0x108] sm:$0xff]
  %v3125 = vld [vmem:[%s1 + $0x110] sm:$0xff]
  %v3126 = vld [vmem:[%s1 + $0x118] sm:$0xff]
  %v3127 = vld [vmem:[%s1 + $0x120] sm:$0xff]
  %v3128 = vld [vmem:[%s1 + $0x128] sm:$0xff]
  %v3129 = vld [vmem:[%s1 + $0x130] sm:$0xff]
  %v3130 = vld [vmem:[%s1 + $0x138] sm:$0xff]
  %v3131 = vld [vmem:[%s1 + $0x140] sm:$0xff]
  %v3132 = vld [vmem:[%s1 + $0x148] sm:$0xff]
  %v3133 = vld [vmem:[%s1 + $0x150] sm:$0xff]
  %v3134 = vld [vmem:[%s1 + $0x158] sm:$0xff]
  %v3135 = vld [vmem:[%s1 + $0x160] sm:$0xff]
  %v3136 = vld [vmem:[%s1 + $0x168] sm:$0xff]
  %v3137 = vld [vmem:[%s1 + $0x170] sm:$0xff]
  %v3138 = vld [vmem:[%s1 + $0x178] sm:$0xff]
  %v3139 = vld [vmem:[%s1 + $0x180] sm:$0xff]
  %v3140 = vld [vmem:[%s1 + $0x188] sm:$0xff]
  %v3141 = vld [vmem:[%s1 + $0x190] sm:$0xff]
  %v3142 = vld [vmem:[%s1 + $0x198] sm:$0xff]
  %v3143 = vld [vmem:[%s1 + $0x1a0] sm:$0xff]
  %v3144 = vld [vmem:[%s1 + $0x1a8] sm:$0xff]
  %v3145 = vld [vmem:[%s1 + $0x1b0] sm:$0xff]
  %v3146 = vld [vmem:[%s1 + $0x1b8] sm:$0xff]
  %v3147 = vld [vmem:[%s1 + $0x1c0] sm:$0xff]
  %v3148 = vld [vmem:[%s1 + $0x1c8] sm:$0xff]
  %v3149 = vld [vmem:[%s1 + $0x1d0] sm:$0xff]
  %v3150 = vld [vmem:[%s1 + $0x1d8] sm:$0xff]
  %v3151 = vld [vmem:[%s1 + $0x1e0] sm:$0xff]
  %v3152 = vld [vmem:[%s1 + $0x1e8] sm:$0xff]
  %v3153 = vld [vmem:[%s1 + $0x1f0] sm:$0xff]
  %v3154 = vld [vmem:[%s1 + $0x1f8] sm:$0xff]
  %v3163 = vcombine.low %v3059, %v3060
  %v3164 = vcombine.low %v3061, %v3062
  %v3165 = vcombine.low %v3063, %v3064
  %v3166 = vcombine.low %v3065, %v3066
  %v3168 = vunpack.c.l.s4 1966171168
  %v3169 = vunpack.c.0.s8 %v3168
  %v3170 = vlaneseq
  %v3171 = vshrl.u32 %v3170, 7
  %v3172 = vsub.s32 %v3169, %v3171
  %v3173 = vrot.slane %v3163, %v3172
  %v3175 = vunpack.c.l.s4 1966171168
  %v3176 = vunpack.c.0.s8 %v3175
  %v3177 = vlaneseq
  %v3178 = vshrl.u32 %v3177, 7
  %v3179 = vsub.s32 %v3176, %v3178
  %v3180 = vrot.slane %v3164, %v3179
  %v3182 = vunpack.c.l.s4 1966171168
  %v3183 = vunpack.c.0.s8 %v3182
  %v3184 = vlaneseq
  %v3185 = vshrl.u32 %v3184, 7
  %v3186 = vsub.s32 %v3183, %v3185
  %v3187 = vrot.slane %v3165, %v3186
  %v3189 = vunpack.c.l.s4 1966171168
  %v3190 = vunpack.c.0.s8 %v3189
  %v3191 = vlaneseq
  %v3192 = vshrl.u32 %v3191, 7
  %v3193 = vsub.s32 %v3190, %v3192
  %v3194 = vrot.slane %v3166, %v3193
  %v3195 = vcombine.low %v3173, %v3180
  %v3196 = vcombine.low %v3187, %v3194
  %v3198 = vunpack.c.l.s4 1966171168
  %v3199 = vunpack.c.0.s8 %v3198
  %v3200 = vlaneseq
  %v3201 = vshrl.u32 %v3200, 7
  %v3202 = vsub.s32 %v3199, %v3201
  %v3203 = vrot.slane %v3195, %v3202
  %v3205 = vunpack.c.l.s4 1966171168
  %v3206 = vunpack.c.0.s8 %v3205
  %v3207 = vlaneseq
  %v3208 = vshrl.u32 %v3207, 7
  %v3209 = vsub.s32 %v3206, %v3208
  %v3210 = vrot.slane %v3196, %v3209
  %v3211 = vcombine.low %v3203, %v3210
  %3213 = vmatprep.subr.mxu0 %v3152
  %3214 = vmatpush1.msra.mxu0 %v3151
  %3215 = vmatprep.subr.mxu0 %v3148
  %3216 = vmatpush1.msra.mxu0 %v3147
  %3217 = vmatprep.subr.mxu0 %v3144
  %3218 = vmatpush1.msra.mxu0 %v3143
  %3219 = vmatprep.subr.mxu0 %v3140
  %3220 = vmatpush1.msra.mxu0 %v3139
  %3221 = vmatprep.subr.mxu0 %v3136
  %3222 = vmatpush1.msra.mxu0 %v3135
  %3223 = vmatprep.subr.mxu0 %v3132
  %3224 = vmatpush1.msra.mxu0 %v3131
  %3225 = vmatprep.subr.mxu0 %v3128
  %3226 = vmatpush1.msra.mxu0 %v3127
  %3227 = vmatprep.subr.mxu0 %v3124
  %3228 = vmatpush1.msra.mxu0 %v3123
  %3229 = vmatprep.subr.mxu0 %v3120
  %3230 = vmatpush1.msra.mxu0 %v3119
  %3231 = vmatprep.subr.mxu0 %v3116
  %3232 = vmatpush1.msra.mxu0 %v3115
  %3233 = vmatprep.subr.mxu0 %v3112
  %3234 = vmatpush1.msra.mxu0 %v3111
  %3235 = vmatprep.subr.mxu0 %v3108
  %3236 = vmatpush1.msra.mxu0 %v3107
  %3237 = vmatprep.subr.mxu0 %v3104
  %3238 = vmatpush1.msra.mxu0 %v3103
  %3239 = vmatprep.subr.mxu0 %v3100
  %3240 = vmatpush1.msra.mxu0 %v3099
  %3241 = vmatprep.subr.mxu0 %v3096
  %3242 = vmatpush1.msra.mxu0 %v3095
  %3243 = vmatprep.subr.mxu0 %v3092
  %3244 = vmatpush1.msra.mxu0 %v3091
  %3245 = vmatprep.subr.mxu0 0.0
  %3246 = vmatpush2.msra.mxu0 0.0
  %3247 = vmatprep.subr.mxu0 0.0
  %3248 = vmatpush2.msra.mxu0 0.0
  %3249 = vmatprep.subr.mxu0 0.0
  %3250 = vmatpush2.msra.mxu0 0.0
  %3251 = vmatprep.subr.mxu0 0.0
  %3252 = vmatpush2.msra.mxu0 0.0
  %3253 = vmatprep.subr.mxu0 0.0
  %3254 = vmatpush2.msra.mxu0 0.0
  %3255 = vmatprep.subr.mxu0 0.0
  %3256 = vmatpush2.msra.mxu0 0.0
  %3257 = vmatprep.subr.mxu0 0.0
  %3258 = vmatpush2.msra.mxu0 0.0
  %3259 = vmatprep.subr.mxu0 0.0
  %3260 = vmatpush2.msra.mxu0 0.0
  %3261 = vmatprep.subr.mxu0 0.0
  %3262 = vmatpush2.msra.mxu0 0.0
  %3263 = vmatprep.subr.mxu0 0.0
  %3264 = vmatpush2.msra.mxu0 0.0
  %3265 = vmatprep.subr.mxu0 0.0
  %3266 = vmatpush2.msra.mxu0 0.0
  %3267 = vmatprep.subr.mxu0 0.0
  %3268 = vmatpush2.msra.mxu0 0.0
  %3269 = vmatprep.subr.mxu0 0.0
  %3270 = vmatpush2.msra.mxu0 0.0
  %3271 = vmatprep.subr.mxu0 0.0
  %3272 = vmatpush2.msra.mxu0 0.0
  %3273 = vmatprep.subr.mxu0 0.0
  %3274 = vmatpush2.msra.mxu0 0.0
  %3275 = vmatprep.subr.mxu0 0.0
  %3276 = vmatpush2.msra.mxu0 0.0
  %3277 = vmatprep.mubr.f32.mxu0 0.0
  %3278 = vmatmul.mubr.f32.gmra.mxu0 %v3211
  %v3279 = vpop.f32.mrf.mxu0
  %v3280 = vadd.f32 0.0, %v3279
  %v3281 = vpop.f32.mrf.mxu0
  %v3282 = vadd.f32 0.0, %v3281
  %3283 = vdwg.mxu0
  %3284 = vmatprep.subr.mxu0 %v3154
  %3285 = vmatpush1.msra.mxu0 %v3153
  %3286 = vmatprep.subr.mxu0 %v3150
  %3287 = vmatpush1.msra.mxu0 %v3149
  %3288 = vmatprep.subr.mxu0 %v3146
  %3289 = vmatpush1.msra.mxu0 %v3145
  %3290 = vmatprep.subr.mxu0 %v3142
  %3291 = vmatpush1.msra.mxu0 %v3141
  %3292 = vmatprep.subr.mxu0 %v3138
  %3293 = vmatpush1.msra.mxu0 %v3137
  %3294 = vmatprep.subr.mxu0 %v3134
  %3295 = vmatpush1.msra.mxu0 %v3133
  %3296 = vmatprep.subr.mxu0 %v3130
  %3297 = vmatpush1.msra.mxu0 %v3129
  %3298 = vmatprep.subr.mxu0 %v3126
  %3299 = vmatpush1.msra.mxu0 %v3125
  %3300 = vmatprep.subr.mxu0 %v3122
  %3301 = vmatpush1.msra.mxu0 %v3121
  %3302 = vmatprep.subr.mxu0 %v3118
  %3303 = vmatpush1.msra.mxu0 %v3117
  %3304 = vmatprep.subr.mxu0 %v3114
  %3305 = vmatpush1.msra.mxu0 %v3113
  %3306 = vmatprep.subr.mxu0 %v3110
  %3307 = vmatpush1.msra.mxu0 %v3109
  %3308 = vmatprep.subr.mxu0 %v3106
  %3309 = vmatpush1.msra.mxu0 %v3105
  %3310 = vmatprep.subr.mxu0 %v3102
  %3311 = vmatpush1.msra.mxu0 %v3101
  %3312 = vmatprep.subr.mxu0 %v3098
  %3313 = vmatpush1.msra.mxu0 %v3097
  %3314 = vmatprep.subr.mxu0 %v3094
  %3315 = vmatpush1.msra.mxu0 %v3093
  %3316 = vmatprep.subr.mxu0 0.0
  %3317 = vmatpush2.msra.mxu0 0.0
  %3318 = vmatprep.subr.mxu0 0.0
  %3319 = vmatpush2.msra.mxu0 0.0
  %3320 = vmatprep.subr.mxu0 0.0
  %3321 = vmatpush2.msra.mxu0 0.0
  %3322 = vmatprep.subr.mxu0 0.0
  %3323 = vmatpush2.msra.mxu0 0.0
  %3324 = vmatprep.subr.mxu0 0.0
  %3325 = vmatpush2.msra.mxu0 0.0
  %3326 = vmatprep.subr.mxu0 0.0
  %3327 = vmatpush2.msra.mxu0 0.0
  %3328 = vmatprep.subr.mxu0 0.0
  %3329 = vmatpush2.msra.mxu0 0.0
  %3330 = vmatprep.subr.mxu0 0.0
  %3331 = vmatpush2.msra.mxu0 0.0
  %3332 = vmatprep.subr.mxu0 0.0
  %3333 = vmatpush2.msra.mxu0 0.0
  %3334 = vmatprep.subr.mxu0 0.0
  %3335 = vmatpush2.msra.mxu0 0.0
  %3336 = vmatprep.subr.mxu0 0.0
  %3337 = vmatpush2.msra.mxu0 0.0
  %3338 = vmatprep.subr.mxu0 0.0
  %3339 = vmatpush2.msra.mxu0 0.0
  %3340 = vmatprep.subr.mxu0 0.0
  %3341 = vmatpush2.msra.mxu0 0.0
  %3342 = vmatprep.subr.mxu0 0.0
  %3343 = vmatpush2.msra.mxu0 0.0
  %3344 = vmatprep.subr.mxu0 0.0
  %3345 = vmatpush2.msra.mxu0 0.0
  %3346 = vmatprep.subr.mxu0 0.0
  %3347 = vmatpush2.msra.mxu0 0.0
  %3348 = vmatprep.mubr.f32.mxu0 0.0
  %3349 = vmatmul.mubr.f32.gmra.mxu0 %v3211
  %v3350 = vpop.f32.mrf.mxu0
  %v3351 = vadd.f32 0.0, %v3350
  %v3352 = vpop.f32.mrf.mxu0
  %v3353 = vadd.f32 0.0, %v3352
  %3354 = vdwg.mxu0
  %v3359 = vcombine.low %v3280, %v3282
  %v3360 = vcombine.high %v3280, %v3282
  %v3361 = vcombine.low %v3351, %v3353
  %v3362 = vcombine.high %v3351, %v3353
  %v3364 = vunpack.c.l.s4 1966171168
  %v3365 = vunpack.c.0.s8 %v3364
  %v3366 = vlaneseq
  %v3367 = vshrl.u32 %v3366, 7
  %v3368 = vsub.s32 %v3365, %v3367
  %v3369 = vrot.slane %v3359, %v3368
  %v3371 = vunpack.c.l.s4 1966171168
  %v3372 = vunpack.c.0.s8 %v3371
  %v3373 = vlaneseq
  %v3374 = vshrl.u32 %v3373, 7
  %v3375 = vsub.s32 %v3372, %v3374
  %v3376 = vrot.slane %v3360, %v3375
  %v3378 = vunpack.c.l.s4 1966171168
  %v3379 = vunpack.c.0.s8 %v3378
  %v3380 = vlaneseq
  %v3381 = vshrl.u32 %v3380, 7
  %v3382 = vsub.s32 %v3379, %v3381
  %v3383 = vrot.slane %v3361, %v3382
  %v3385 = vunpack.c.l.s4 1966171168
  %v3386 = vunpack.c.0.s8 %v3385
  %v3387 = vlaneseq
  %v3388 = vshrl.u32 %v3387, 7
  %v3389 = vsub.s32 %v3386, %v3388
  %v3390 = vrot.slane %v3362, %v3389
  %v3391 = vcombine.low %v3369, %v3383
  %v3392 = vcombine.high %v3369, %v3383
  %v3393 = vcombine.low %v3376, %v3390
  %v3394 = vcombine.high %v3376, %v3390
  %v3396 = vunpack.c.l.s4 1966171168
  %v3397 = vunpack.c.0.s8 %v3396
  %v3398 = vlaneseq
  %v3399 = vshrl.u32 %v3398, 7
  %v3400 = vsub.s32 %v3397, %v3399
  %v3401 = vrot.slane %v3391, %v3400
  %v3403 = vunpack.c.l.s4 1966171168
  %v3404 = vunpack.c.0.s8 %v3403
  %v3405 = vlaneseq
  %v3406 = vshrl.u32 %v3405, 7
  %v3407 = vsub.s32 %v3404, %v3406
  %v3408 = vrot.slane %v3393, %v3407
  %v3410 = vunpack.c.l.s4 1966171168
  %v3411 = vunpack.c.0.s8 %v3410
  %v3412 = vlaneseq
  %v3413 = vshrl.u32 %v3412, 7
  %v3414 = vsub.s32 %v3411, %v3413
  %v3415 = vrot.slane %v3392, %v3414
  %v3417 = vunpack.c.l.s4 1966171168
  %v3418 = vunpack.c.0.s8 %v3417
  %v3419 = vlaneseq
  %v3420 = vshrl.u32 %v3419, 7
  %v3421 = vsub.s32 %v3418, %v3420
  %v3422 = vrot.slane %v3394, %v3421
  %v3423 = vcombine.high %v3401, %v3401
  %v3424 = vcombine.high %v3408, %v3408
  %v3425 = vcombine.high %v3415, %v3415
  %v3426 = vcombine.high %v3422, %v3422
  %v3435 = vadd.f32 %v3076, %v3401
  %v3436 = vadd.f32 %v3078, %v3415
  %v3437 = vadd.f32 %v3080, %v3423
  %v3438 = vadd.f32 %v3082, %v3425
  %v3439 = vadd.f32 %v3084, %v3408
  %v3440 = vadd.f32 %v3086, %v3422
  %v3441 = vadd.f32 %v3088, %v3424
  %v3442 = vadd.f32 %v3090, %v3426
  %v3443 = vxor.u32 %v3435, 2147483648
  %v3444 = vxor.u32 %v3436, 2147483648
  %v3445 = vxor.u32 %v3437, 2147483648
  %v3446 = vxor.u32 %v3438, 2147483648
  %v3447 = vxor.u32 %v3439, 2147483648
  %v3448 = vxor.u32 %v3440, 2147483648
  %v3449 = vxor.u32 %v3441, 2147483648
  %v3450 = vxor.u32 %v3442, 2147483648
  %v3451 = vmul.f32 %v3443, 1.442695
  %v3452 = vpow.pop %v3451
  %v3453 = vmul.f32 %v3444, 1.442695
  %v3454 = vpow.pop %v3453
  %v3455 = vmul.f32 %v3445, 1.442695
  %v3456 = vpow.pop %v3455
  %v3457 = vmul.f32 %v3446, 1.442695
  %v3458 = vpow.pop %v3457
  %v3459 = vmul.f32 %v3447, 1.442695
  %v3460 = vpow.pop %v3459
  %v3461 = vmul.f32 %v3448, 1.442695
  %v3462 = vpow.pop %v3461
  %v3463 = vmul.f32 %v3449, 1.442695
  %v3464 = vpow.pop %v3463
  %v3465 = vmul.f32 %v3450, 1.442695
  %v3466 = vpow.pop %v3465
  %v3467 = vadd.f32 %v3452, 1.0
  %v3468 = vadd.f32 %v3454, 1.0
  %v3469 = vadd.f32 %v3456, 1.0
  %v3470 = vadd.f32 %v3458, 1.0
  %v3471 = vadd.f32 %v3460, 1.0
  %v3472 = vadd.f32 %v3462, 1.0
  %v3473 = vadd.f32 %v3464, 1.0
  %v3474 = vadd.f32 %v3466, 1.0
  %v3475 = vrcp.pop %v3467
  %v3476 = vmul.f32 1.0, %v3475
  %v3477 = vrcp.pop %v3468
  %v3478 = vmul.f32 1.0, %v3477
  %v3479 = vrcp.pop %v3469
  %v3480 = vmul.f32 1.0, %v3479
  %v3481 = vrcp.pop %v3470
  %v3482 = vmul.f32 1.0, %v3481
  %v3483 = vrcp.pop %v3471
  %v3484 = vmul.f32 1.0, %v3483
  %v3485 = vrcp.pop %v3472
  %v3486 = vmul.f32 1.0, %v3485
  %v3487 = vrcp.pop %v3473
  %v3488 = vmul.f32 1.0, %v3487
  %v3489 = vrcp.pop %v3474
  %v3490 = vmul.f32 1.0, %v3489
  %v3499 = vrot.slane %v3435, 1
  %v3500 = vrot.slane %v3436, 1
  %v3501 = vrot.slane %v3437, 1
  %v3502 = vrot.slane %v3438, 1
  %v3503 = vrot.slane %v3439, 1
  %v3504 = vrot.slane %v3440, 1
  %v3505 = vrot.slane %v3441, 1
  %v3506 = vrot.slane %v3442, 1
  %v3515 = vxor.u32 %v3499, 2147483648
  %v3516 = vxor.u32 %v3500, 2147483648
  %v3517 = vxor.u32 %v3501, 2147483648
  %v3518 = vxor.u32 %v3502, 2147483648
  %v3519 = vxor.u32 %v3503, 2147483648
  %v3520 = vxor.u32 %v3504, 2147483648
  %v3521 = vxor.u32 %v3505, 2147483648
  %v3522 = vxor.u32 %v3506, 2147483648
  %v3523 = vmul.f32 %v3515, 1.442695
  %v3524 = vpow.pop %v3523
  %v3525 = vmul.f32 %v3516, 1.442695
  %v3526 = vpow.pop %v3525
  %v3527 = vmul.f32 %v3517, 1.442695
  %v3528 = vpow.pop %v3527
  %v3529 = vmul.f32 %v3518, 1.442695
  %v3530 = vpow.pop %v3529
  %v3531 = vmul.f32 %v3519, 1.442695
  %v3532 = vpow.pop %v3531
  %v3533 = vmul.f32 %v3520, 1.442695
  %v3534 = vpow.pop %v3533
  %v3535 = vmul.f32 %v3521, 1.442695
  %v3536 = vpow.pop %v3535
  %v3537 = vmul.f32 %v3522, 1.442695
  %v3538 = vpow.pop %v3537
  %v3539 = vadd.f32 %v3524, 1.0
  %v3540 = vadd.f32 %v3526, 1.0
  %v3541 = vadd.f32 %v3528, 1.0
  %v3542 = vadd.f32 %v3530, 1.0
  %v3543 = vadd.f32 %v3532, 1.0
  %v3544 = vadd.f32 %v3534, 1.0
  %v3545 = vadd.f32 %v3536, 1.0
  %v3546 = vadd.f32 %v3538, 1.0
  %v3547 = vrcp.pop %v3539
  %v3548 = vmul.f32 1.0, %v3547
  %v3549 = vrcp.pop %v3540
  %v3550 = vmul.f32 1.0, %v3549
  %v3551 = vrcp.pop %v3541
  %v3552 = vmul.f32 1.0, %v3551
  %v3553 = vrcp.pop %v3542
  %v3554 = vmul.f32 1.0, %v3553
  %v3555 = vrcp.pop %v3543
  %v3556 = vmul.f32 1.0, %v3555
  %v3557 = vrcp.pop %v3544
  %v3558 = vmul.f32 1.0, %v3557
  %v3559 = vrcp.pop %v3545
  %v3560 = vmul.f32 1.0, %v3559
  %v3561 = vrcp.pop %v3546
  %v3562 = vmul.f32 1.0, %v3561
  %v3563 = vrot.slane %v3435, 2
  %v3564 = vrot.slane %v3436, 2
  %v3565 = vrot.slane %v3437, 2
  %v3566 = vrot.slane %v3438, 2
  %v3567 = vrot.slane %v3439, 2
  %v3568 = vrot.slane %v3440, 2
  %v3569 = vrot.slane %v3441, 2
  %v3570 = vrot.slane %v3442, 2
  %v3579 = vtanh.pop %v3563
  %v3580 = vtanh.pop %v3564
  %v3581 = vtanh.pop %v3565
  %v3582 = vtanh.pop %v3566
  %v3583 = vtanh.pop %v3567
  %v3584 = vtanh.pop %v3568
  %v3585 = vtanh.pop %v3569
  %v3586 = vtanh.pop %v3570
  %v3587 = vrot.slane %v3435, 3
  %v3588 = vrot.slane %v3436, 3
  %v3589 = vrot.slane %v3437, 3
  %v3590 = vrot.slane %v3438, 3
  %v3591 = vrot.slane %v3439, 3
  %v3592 = vrot.slane %v3440, 3
  %v3593 = vrot.slane %v3441, 3
  %v3594 = vrot.slane %v3442, 3
  %v3603 = vxor.u32 %v3587, 2147483648
  %v3604 = vxor.u32 %v3588, 2147483648
  %v3605 = vxor.u32 %v3589, 2147483648
  %v3606 = vxor.u32 %v3590, 2147483648
  %v3607 = vxor.u32 %v3591, 2147483648
  %v3608 = vxor.u32 %v3592, 2147483648
  %v3609 = vxor.u32 %v3593, 2147483648
  %v3610 = vxor.u32 %v3594, 2147483648
  %v3611 = vmul.f32 %v3603, 1.442695
  %v3612 = vpow.pop %v3611
  %v3613 = vmul.f32 %v3604, 1.442695
  %v3614 = vpow.pop %v3613
  %v3615 = vmul.f32 %v3605, 1.442695
  %v3616 = vpow.pop %v3615
  %v3617 = vmul.f32 %v3606, 1.442695
  %v3618 = vpow.pop %v3617
  %v3619 = vmul.f32 %v3607, 1.442695
  %v3620 = vpow.pop %v3619
  %v3621 = vmul.f32 %v3608, 1.442695
  %v3622 = vpow.pop %v3621
  %v3623 = vmul.f32 %v3609, 1.442695
  %v3624 = vpow.pop %v3623
  %v3625 = vmul.f32 %v3610, 1.442695
  %v3626 = vpow.pop %v3625
  %v3627 = vadd.f32 %v3612, 1.0
  %v3628 = vadd.f32 %v3614, 1.0
  %v3629 = vadd.f32 %v3616, 1.0
  %v3630 = vadd.f32 %v3618, 1.0
  %v3631 = vadd.f32 %v3620, 1.0
  %v3632 = vadd.f32 %v3622, 1.0
  %v3633 = vadd.f32 %v3624, 1.0
  %v3634 = vadd.f32 %v3626, 1.0
  %v3635 = vrcp.pop %v3627
  %v3636 = vmul.f32 1.0, %v3635
  %v3637 = vrcp.pop %v3628
  %v3638 = vmul.f32 1.0, %v3637
  %v3639 = vrcp.pop %v3629
  %v3640 = vmul.f32 1.0, %v3639
  %v3641 = vrcp.pop %v3630
  %v3642 = vmul.f32 1.0, %v3641
  %v3643 = vrcp.pop %v3631
  %v3644 = vmul.f32 1.0, %v3643
  %v3645 = vrcp.pop %v3632
  %v3646 = vmul.f32 1.0, %v3645
  %v3647 = vrcp.pop %v3633
  %v3648 = vmul.f32 1.0, %v3647
  %v3649 = vrcp.pop %v3634
  %v3650 = vmul.f32 1.0, %v3649
  %v3651 = vmul.f32 %v3548, %v3043
  %v3652 = vmul.f32 %v3550, %v3044
  %v3653 = vmul.f32 %v3552, %v3045
  %v3654 = vmul.f32 %v3554, %v3046
  %v3655 = vmul.f32 %v3556, %v3047
  %v3656 = vmul.f32 %v3558, %v3048
  %v3657 = vmul.f32 %v3560, %v3049
  %v3658 = vmul.f32 %v3562, %v3050
  %v3659 = vmul.f32 %v3476, %v3579
  %v3660 = vmul.f32 %v3478, %v3580
  %v3661 = vmul.f32 %v3480, %v3581
  %v3662 = vmul.f32 %v3482, %v3582
  %v3663 = vmul.f32 %v3484, %v3583
  %v3664 = vmul.f32 %v3486, %v3584
  %v3665 = vmul.f32 %v3488, %v3585
  %v3666 = vmul.f32 %v3490, %v3586
  %v3667 = vadd.f32 %v3651, %v3659
  %v3668 = vadd.f32 %v3652, %v3660
  %v3669 = vadd.f32 %v3653, %v3661
  %v3670 = vadd.f32 %v3654, %v3662
  %v3671 = vadd.f32 %v3655, %v3663
  %v3672 = vadd.f32 %v3656, %v3664
  %v3673 = vadd.f32 %v3657, %v3665
  %v3674 = vadd.f32 %v3658, %v3666
  %v3675 = vtanh.pop %v3667
  %v3676 = vtanh.pop %v3668
  %v3677 = vtanh.pop %v3669
  %v3678 = vtanh.pop %v3670
  %v3679 = vtanh.pop %v3671
  %v3680 = vtanh.pop %v3672
  %v3681 = vtanh.pop %v3673
  %v3682 = vtanh.pop %v3674
  %v3683 = vmul.f32 %v3636, %v3675
  %v3684 = vmul.f32 %v3638, %v3676
  %v3685 = vmul.f32 %v3640, %v3677
  %v3686 = vmul.f32 %v3642, %v3678
  %v3687 = vmul.f32 %v3644, %v3679
  %v3688 = vmul.f32 %v3646, %v3680
  %v3689 = vmul.f32 %v3648, %v3681
  %v3690 = vmul.f32 %v3650, %v3682
  %3691 = vst [vmem:[%s2 + $0x5] sm:$0x1] %v3683
  %3692 = vst [vmem:[%s2 + $0xd] sm:$0x1] %v3684
  %3693 = vst [vmem:[%s2 + $0x15] sm:$0x1] %v3685
  %3694 = vst [vmem:[%s2 + $0x1d] sm:$0x1] %v3686
  %3695 = vst [vmem:[%s2 + $0x25] sm:$0x1] %v3687
  %3696 = vst [vmem:[%s2 + $0x2d] sm:$0x1] %v3688
  %3697 = vst [vmem:[%s2 + $0x35] sm:$0x1] %v3689
  %3698 = vst [vmem:[%s2 + $0x3d] sm:$0x1] %v3690
  %s3699 = scalar_lea.vmem %s0, 6
  %v3700 = vld [vmem:[%s3699] ss:$8 sm:$0xf]
  %s3701 = scalar_lea.vmem %s0, 38
  %v3702 = vld [vmem:[%s3701] ss:$8 sm:$0xf]
  %s3703 = scalar_lea.vmem %s0, 70
  %v3704 = vld [vmem:[%s3703] ss:$8 sm:$0xf]
  %s3705 = scalar_lea.vmem %s0, 102
  %v3706 = vld [vmem:[%s3705] ss:$8 sm:$0xf]
  %s3707 = scalar_lea.vmem %s0, 134
  %v3708 = vld [vmem:[%s3707] ss:$8 sm:$0xf]
  %s3709 = scalar_lea.vmem %s0, 166
  %v3710 = vld [vmem:[%s3709] ss:$8 sm:$0xf]
  %s3711 = scalar_lea.vmem %s0, 198
  %v3712 = vld [vmem:[%s3711] ss:$8 sm:$0xf]
  %s3713 = scalar_lea.vmem %s0, 230
  %v3714 = vld [vmem:[%s3713] ss:$8 sm:$0xf]
  %v3715 = vld [vmem:[%s1] sm:$0xff]
  %v3716 = vld [vmem:[%s1 + $0x8] sm:$0xff]
  %v3717 = vld [vmem:[%s1 + $0x10] sm:$0xff]
  %v3718 = vld [vmem:[%s1 + $0x18] sm:$0xff]
  %v3719 = vld [vmem:[%s1 + $0x20] sm:$0xff]
  %v3720 = vld [vmem:[%s1 + $0x28] sm:$0xff]
  %v3721 = vld [vmem:[%s1 + $0x30] sm:$0xff]
  %v3722 = vld [vmem:[%s1 + $0x38] sm:$0xff]
  %v3723 = vld [vmem:[%s1 + $0x40] sm:$0xff]
  %v3724 = vld [vmem:[%s1 + $0x48] sm:$0xff]
  %v3725 = vld [vmem:[%s1 + $0x50] sm:$0xff]
  %v3726 = vld [vmem:[%s1 + $0x58] sm:$0xff]
  %v3727 = vld [vmem:[%s1 + $0x60] sm:$0xff]
  %v3728 = vld [vmem:[%s1 + $0x68] sm:$0xff]
  %v3729 = vld [vmem:[%s1 + $0x70] sm:$0xff]
  %v3730 = vld [vmem:[%s1 + $0x78] sm:$0xff]
  %v3731 = vld [vmem:[%s1 + $0x80] sm:$0xff]
  %v3732 = vld [vmem:[%s1 + $0x88] sm:$0xff]
  %v3733 = vld [vmem:[%s1 + $0x90] sm:$0xff]
  %v3734 = vld [vmem:[%s1 + $0x98] sm:$0xff]
  %v3735 = vld [vmem:[%s1 + $0xa0] sm:$0xff]
  %v3736 = vld [vmem:[%s1 + $0xa8] sm:$0xff]
  %v3737 = vld [vmem:[%s1 + $0xb0] sm:$0xff]
  %v3738 = vld [vmem:[%s1 + $0xb8] sm:$0xff]
  %v3739 = vld [vmem:[%s1 + $0xc0] sm:$0xff]
  %v3740 = vld [vmem:[%s1 + $0xc8] sm:$0xff]
  %v3741 = vld [vmem:[%s1 + $0xd0] sm:$0xff]
  %v3742 = vld [vmem:[%s1 + $0xd8] sm:$0xff]
  %v3743 = vld [vmem:[%s1 + $0xe0] sm:$0xff]
  %v3744 = vld [vmem:[%s1 + $0xe8] sm:$0xff]
  %v3745 = vld [vmem:[%s1 + $0xf0] sm:$0xff]
  %v3746 = vld [vmem:[%s1 + $0xf8] sm:$0xff]
  %v3747 = vld [vmem:[%s1 + $0x100] sm:$0xff]
  %v3748 = vld [vmem:[%s1 + $0x108] sm:$0xff]
  %v3749 = vld [vmem:[%s1 + $0x110] sm:$0xff]
  %v3750 = vld [vmem:[%s1 + $0x118] sm:$0xff]
  %v3751 = vld [vmem:[%s1 + $0x120] sm:$0xff]
  %v3752 = vld [vmem:[%s1 + $0x128] sm:$0xff]
  %v3753 = vld [vmem:[%s1 + $0x130] sm:$0xff]
  %v3754 = vld [vmem:[%s1 + $0x138] sm:$0xff]
  %v3755 = vld [vmem:[%s1 + $0x140] sm:$0xff]
  %v3756 = vld [vmem:[%s1 + $0x148] sm:$0xff]
  %v3757 = vld [vmem:[%s1 + $0x150] sm:$0xff]
  %v3758 = vld [vmem:[%s1 + $0x158] sm:$0xff]
  %v3759 = vld [vmem:[%s1 + $0x160] sm:$0xff]
  %v3760 = vld [vmem:[%s1 + $0x168] sm:$0xff]
  %v3761 = vld [vmem:[%s1 + $0x170] sm:$0xff]
  %v3762 = vld [vmem:[%s1 + $0x178] sm:$0xff]
  %v3763 = vld [vmem:[%s1 + $0x180] sm:$0xff]
  %v3764 = vld [vmem:[%s1 + $0x188] sm:$0xff]
  %v3765 = vld [vmem:[%s1 + $0x190] sm:$0xff]
  %v3766 = vld [vmem:[%s1 + $0x198] sm:$0xff]
  %v3767 = vld [vmem:[%s1 + $0x1a0] sm:$0xff]
  %v3768 = vld [vmem:[%s1 + $0x1a8] sm:$0xff]
  %v3769 = vld [vmem:[%s1 + $0x1b0] sm:$0xff]
  %v3770 = vld [vmem:[%s1 + $0x1b8] sm:$0xff]
  %v3771 = vld [vmem:[%s1 + $0x1c0] sm:$0xff]
  %v3772 = vld [vmem:[%s1 + $0x1c8] sm:$0xff]
  %v3773 = vld [vmem:[%s1 + $0x1d0] sm:$0xff]
  %v3774 = vld [vmem:[%s1 + $0x1d8] sm:$0xff]
  %v3775 = vld [vmem:[%s1 + $0x1e0] sm:$0xff]
  %v3776 = vld [vmem:[%s1 + $0x1e8] sm:$0xff]
  %v3777 = vld [vmem:[%s1 + $0x1f0] sm:$0xff]
  %v3778 = vld [vmem:[%s1 + $0x1f8] sm:$0xff]
  %v3787 = vcombine.low %v3683, %v3684
  %v3788 = vcombine.low %v3685, %v3686
  %v3789 = vcombine.low %v3687, %v3688
  %v3790 = vcombine.low %v3689, %v3690
  %v3792 = vunpack.c.l.s4 1966171168
  %v3793 = vunpack.c.0.s8 %v3792
  %v3794 = vlaneseq
  %v3795 = vshrl.u32 %v3794, 7
  %v3796 = vsub.s32 %v3793, %v3795
  %v3797 = vrot.slane %v3787, %v3796
  %v3799 = vunpack.c.l.s4 1966171168
  %v3800 = vunpack.c.0.s8 %v3799
  %v3801 = vlaneseq
  %v3802 = vshrl.u32 %v3801, 7
  %v3803 = vsub.s32 %v3800, %v3802
  %v3804 = vrot.slane %v3788, %v3803
  %v3806 = vunpack.c.l.s4 1966171168
  %v3807 = vunpack.c.0.s8 %v3806
  %v3808 = vlaneseq
  %v3809 = vshrl.u32 %v3808, 7
  %v3810 = vsub.s32 %v3807, %v3809
  %v3811 = vrot.slane %v3789, %v3810
  %v3813 = vunpack.c.l.s4 1966171168
  %v3814 = vunpack.c.0.s8 %v3813
  %v3815 = vlaneseq
  %v3816 = vshrl.u32 %v3815, 7
  %v3817 = vsub.s32 %v3814, %v3816
  %v3818 = vrot.slane %v3790, %v3817
  %v3819 = vcombine.low %v3797, %v3804
  %v3820 = vcombine.low %v3811, %v3818
  %v3822 = vunpack.c.l.s4 1966171168
  %v3823 = vunpack.c.0.s8 %v3822
  %v3824 = vlaneseq
  %v3825 = vshrl.u32 %v3824, 7
  %v3826 = vsub.s32 %v3823, %v3825
  %v3827 = vrot.slane %v3819, %v3826
  %v3829 = vunpack.c.l.s4 1966171168
  %v3830 = vunpack.c.0.s8 %v3829
  %v3831 = vlaneseq
  %v3832 = vshrl.u32 %v3831, 7
  %v3833 = vsub.s32 %v3830, %v3832
  %v3834 = vrot.slane %v3820, %v3833
  %v3835 = vcombine.low %v3827, %v3834
  %3837 = vmatprep.subr.mxu0 %v3776
  %3838 = vmatpush1.msra.mxu0 %v3775
  %3839 = vmatprep.subr.mxu0 %v3772
  %3840 = vmatpush1.msra.mxu0 %v3771
  %3841 = vmatprep.subr.mxu0 %v3768
  %3842 = vmatpush1.msra.mxu0 %v3767
  %3843 = vmatprep.subr.mxu0 %v3764
  %3844 = vmatpush1.msra.mxu0 %v3763
  %3845 = vmatprep.subr.mxu0 %v3760
  %3846 = vmatpush1.msra.mxu0 %v3759
  %3847 = vmatprep.subr.mxu0 %v3756
  %3848 = vmatpush1.msra.mxu0 %v3755
  %3849 = vmatprep.subr.mxu0 %v3752
  %3850 = vmatpush1.msra.mxu0 %v3751
  %3851 = vmatprep.subr.mxu0 %v3748
  %3852 = vmatpush1.msra.mxu0 %v3747
  %3853 = vmatprep.subr.mxu0 %v3744
  %3854 = vmatpush1.msra.mxu0 %v3743
  %3855 = vmatprep.subr.mxu0 %v3740
  %3856 = vmatpush1.msra.mxu0 %v3739
  %3857 = vmatprep.subr.mxu0 %v3736
  %3858 = vmatpush1.msra.mxu0 %v3735
  %3859 = vmatprep.subr.mxu0 %v3732
  %3860 = vmatpush1.msra.mxu0 %v3731
  %3861 = vmatprep.subr.mxu0 %v3728
  %3862 = vmatpush1.msra.mxu0 %v3727
  %3863 = vmatprep.subr.mxu0 %v3724
  %3864 = vmatpush1.msra.mxu0 %v3723
  %3865 = vmatprep.subr.mxu0 %v3720
  %3866 = vmatpush1.msra.mxu0 %v3719
  %3867 = vmatprep.subr.mxu0 %v3716
  %3868 = vmatpush1.msra.mxu0 %v3715
  %3869 = vmatprep.subr.mxu0 0.0
  %3870 = vmatpush2.msra.mxu0 0.0
  %3871 = vmatprep.subr.mxu0 0.0
  %3872 = vmatpush2.msra.mxu0 0.0
  %3873 = vmatprep.subr.mxu0 0.0
  %3874 = vmatpush2.msra.mxu0 0.0
  %3875 = vmatprep.subr.mxu0 0.0
  %3876 = vmatpush2.msra.mxu0 0.0
  %3877 = vmatprep.subr.mxu0 0.0
  %3878 = vmatpush2.msra.mxu0 0.0
  %3879 = vmatprep.subr.mxu0 0.0
  %3880 = vmatpush2.msra.mxu0 0.0
  %3881 = vmatprep.subr.mxu0 0.0
  %3882 = vmatpush2.msra.mxu0 0.0
  %3883 = vmatprep.subr.mxu0 0.0
  %3884 = vmatpush2.msra.mxu0 0.0
  %3885 = vmatprep.subr.mxu0 0.0
  %3886 = vmatpush2.msra.mxu0 0.0
  %3887 = vmatprep.subr.mxu0 0.0
  %3888 = vmatpush2.msra.mxu0 0.0
  %3889 = vmatprep.subr.mxu0 0.0
  %3890 = vmatpush2.msra.mxu0 0.0
  %3891 = vmatprep.subr.mxu0 0.0
  %3892 = vmatpush2.msra.mxu0 0.0
  %3893 = vmatprep.subr.mxu0 0.0
  %3894 = vmatpush2.msra.mxu0 0.0
  %3895 = vmatprep.subr.mxu0 0.0
  %3896 = vmatpush2.msra.mxu0 0.0
  %3897 = vmatprep.subr.mxu0 0.0
  %3898 = vmatpush2.msra.mxu0 0.0
  %3899 = vmatprep.subr.mxu0 0.0
  %3900 = vmatpush2.msra.mxu0 0.0
  %3901 = vmatprep.mubr.f32.mxu0 0.0
  %3902 = vmatmul.mubr.f32.gmra.mxu0 %v3835
  %v3903 = vpop.f32.mrf.mxu0
  %v3904 = vadd.f32 0.0, %v3903
  %v3905 = vpop.f32.mrf.mxu0
  %v3906 = vadd.f32 0.0, %v3905
  %3907 = vdwg.mxu0
  %3908 = vmatprep.subr.mxu0 %v3778
  %3909 = vmatpush1.msra.mxu0 %v3777
  %3910 = vmatprep.subr.mxu0 %v3774
  %3911 = vmatpush1.msra.mxu0 %v3773
  %3912 = vmatprep.subr.mxu0 %v3770
  %3913 = vmatpush1.msra.mxu0 %v3769
  %3914 = vmatprep.subr.mxu0 %v3766
  %3915 = vmatpush1.msra.mxu0 %v3765
  %3916 = vmatprep.subr.mxu0 %v3762
  %3917 = vmatpush1.msra.mxu0 %v3761
  %3918 = vmatprep.subr.mxu0 %v3758
  %3919 = vmatpush1.msra.mxu0 %v3757
  %3920 = vmatprep.subr.mxu0 %v3754
  %3921 = vmatpush1.msra.mxu0 %v3753
  %3922 = vmatprep.subr.mxu0 %v3750
  %3923 = vmatpush1.msra.mxu0 %v3749
  %3924 = vmatprep.subr.mxu0 %v3746
  %3925 = vmatpush1.msra.mxu0 %v3745
  %3926 = vmatprep.subr.mxu0 %v3742
  %3927 = vmatpush1.msra.mxu0 %v3741
  %3928 = vmatprep.subr.mxu0 %v3738
  %3929 = vmatpush1.msra.mxu0 %v3737
  %3930 = vmatprep.subr.mxu0 %v3734
  %3931 = vmatpush1.msra.mxu0 %v3733
  %3932 = vmatprep.subr.mxu0 %v3730
  %3933 = vmatpush1.msra.mxu0 %v3729
  %3934 = vmatprep.subr.mxu0 %v3726
  %3935 = vmatpush1.msra.mxu0 %v3725
  %3936 = vmatprep.subr.mxu0 %v3722
  %3937 = vmatpush1.msra.mxu0 %v3721
  %3938 = vmatprep.subr.mxu0 %v3718
  %3939 = vmatpush1.msra.mxu0 %v3717
  %3940 = vmatprep.subr.mxu0 0.0
  %3941 = vmatpush2.msra.mxu0 0.0
  %3942 = vmatprep.subr.mxu0 0.0
  %3943 = vmatpush2.msra.mxu0 0.0
  %3944 = vmatprep.subr.mxu0 0.0
  %3945 = vmatpush2.msra.mxu0 0.0
  %3946 = vmatprep.subr.mxu0 0.0
  %3947 = vmatpush2.msra.mxu0 0.0
  %3948 = vmatprep.subr.mxu0 0.0
  %3949 = vmatpush2.msra.mxu0 0.0
  %3950 = vmatprep.subr.mxu0 0.0
  %3951 = vmatpush2.msra.mxu0 0.0
  %3952 = vmatprep.subr.mxu0 0.0
  %3953 = vmatpush2.msra.mxu0 0.0
  %3954 = vmatprep.subr.mxu0 0.0
  %3955 = vmatpush2.msra.mxu0 0.0
  %3956 = vmatprep.subr.mxu0 0.0
  %3957 = vmatpush2.msra.mxu0 0.0
  %3958 = vmatprep.subr.mxu0 0.0
  %3959 = vmatpush2.msra.mxu0 0.0
  %3960 = vmatprep.subr.mxu0 0.0
  %3961 = vmatpush2.msra.mxu0 0.0
  %3962 = vmatprep.subr.mxu0 0.0
  %3963 = vmatpush2.msra.mxu0 0.0
  %3964 = vmatprep.subr.mxu0 0.0
  %3965 = vmatpush2.msra.mxu0 0.0
  %3966 = vmatprep.subr.mxu0 0.0
  %3967 = vmatpush2.msra.mxu0 0.0
  %3968 = vmatprep.subr.mxu0 0.0
  %3969 = vmatpush2.msra.mxu0 0.0
  %3970 = vmatprep.subr.mxu0 0.0
  %3971 = vmatpush2.msra.mxu0 0.0
  %3972 = vmatprep.mubr.f32.mxu0 0.0
  %3973 = vmatmul.mubr.f32.gmra.mxu0 %v3835
  %v3974 = vpop.f32.mrf.mxu0
  %v3975 = vadd.f32 0.0, %v3974
  %v3976 = vpop.f32.mrf.mxu0
  %v3977 = vadd.f32 0.0, %v3976
  %3978 = vdwg.mxu0
  %v3983 = vcombine.low %v3904, %v3906
  %v3984 = vcombine.high %v3904, %v3906
  %v3985 = vcombine.low %v3975, %v3977
  %v3986 = vcombine.high %v3975, %v3977
  %v3988 = vunpack.c.l.s4 1966171168
  %v3989 = vunpack.c.0.s8 %v3988
  %v3990 = vlaneseq
  %v3991 = vshrl.u32 %v3990, 7
  %v3992 = vsub.s32 %v3989, %v3991
  %v3993 = vrot.slane %v3983, %v3992
  %v3995 = vunpack.c.l.s4 1966171168
  %v3996 = vunpack.c.0.s8 %v3995
  %v3997 = vlaneseq
  %v3998 = vshrl.u32 %v3997, 7
  %v3999 = vsub.s32 %v3996, %v3998
  %v4000 = vrot.slane %v3984, %v3999
  %v4002 = vunpack.c.l.s4 1966171168
  %v4003 = vunpack.c.0.s8 %v4002
  %v4004 = vlaneseq
  %v4005 = vshrl.u32 %v4004, 7
  %v4006 = vsub.s32 %v4003, %v4005
  %v4007 = vrot.slane %v3985, %v4006
  %v4009 = vunpack.c.l.s4 1966171168
  %v4010 = vunpack.c.0.s8 %v4009
  %v4011 = vlaneseq
  %v4012 = vshrl.u32 %v4011, 7
  %v4013 = vsub.s32 %v4010, %v4012
  %v4014 = vrot.slane %v3986, %v4013
  %v4015 = vcombine.low %v3993, %v4007
  %v4016 = vcombine.high %v3993, %v4007
  %v4017 = vcombine.low %v4000, %v4014
  %v4018 = vcombine.high %v4000, %v4014
  %v4020 = vunpack.c.l.s4 1966171168
  %v4021 = vunpack.c.0.s8 %v4020
  %v4022 = vlaneseq
  %v4023 = vshrl.u32 %v4022, 7
  %v4024 = vsub.s32 %v4021, %v4023
  %v4025 = vrot.slane %v4015, %v4024
  %v4027 = vunpack.c.l.s4 1966171168
  %v4028 = vunpack.c.0.s8 %v4027
  %v4029 = vlaneseq
  %v4030 = vshrl.u32 %v4029, 7
  %v4031 = vsub.s32 %v4028, %v4030
  %v4032 = vrot.slane %v4017, %v4031
  %v4034 = vunpack.c.l.s4 1966171168
  %v4035 = vunpack.c.0.s8 %v4034
  %v4036 = vlaneseq
  %v4037 = vshrl.u32 %v4036, 7
  %v4038 = vsub.s32 %v4035, %v4037
  %v4039 = vrot.slane %v4016, %v4038
  %v4041 = vunpack.c.l.s4 1966171168
  %v4042 = vunpack.c.0.s8 %v4041
  %v4043 = vlaneseq
  %v4044 = vshrl.u32 %v4043, 7
  %v4045 = vsub.s32 %v4042, %v4044
  %v4046 = vrot.slane %v4018, %v4045
  %v4047 = vcombine.high %v4025, %v4025
  %v4048 = vcombine.high %v4032, %v4032
  %v4049 = vcombine.high %v4039, %v4039
  %v4050 = vcombine.high %v4046, %v4046
  %v4059 = vadd.f32 %v3700, %v4025
  %v4060 = vadd.f32 %v3702, %v4039
  %v4061 = vadd.f32 %v3704, %v4047
  %v4062 = vadd.f32 %v3706, %v4049
  %v4063 = vadd.f32 %v3708, %v4032
  %v4064 = vadd.f32 %v3710, %v4046
  %v4065 = vadd.f32 %v3712, %v4048
  %v4066 = vadd.f32 %v3714, %v4050
  %v4067 = vxor.u32 %v4059, 2147483648
  %v4068 = vxor.u32 %v4060, 2147483648
  %v4069 = vxor.u32 %v4061, 2147483648
  %v4070 = vxor.u32 %v4062, 2147483648
  %v4071 = vxor.u32 %v4063, 2147483648
  %v4072 = vxor.u32 %v4064, 2147483648
  %v4073 = vxor.u32 %v4065, 2147483648
  %v4074 = vxor.u32 %v4066, 2147483648
  %v4075 = vmul.f32 %v4067, 1.442695
  %v4076 = vpow.pop %v4075
  %v4077 = vmul.f32 %v4068, 1.442695
  %v4078 = vpow.pop %v4077
  %v4079 = vmul.f32 %v4069, 1.442695
  %v4080 = vpow.pop %v4079
  %v4081 = vmul.f32 %v4070, 1.442695
  %v4082 = vpow.pop %v4081
  %v4083 = vmul.f32 %v4071, 1.442695
  %v4084 = vpow.pop %v4083
  %v4085 = vmul.f32 %v4072, 1.442695
  %v4086 = vpow.pop %v4085
  %v4087 = vmul.f32 %v4073, 1.442695
  %v4088 = vpow.pop %v4087
  %v4089 = vmul.f32 %v4074, 1.442695
  %v4090 = vpow.pop %v4089
  %v4091 = vadd.f32 %v4076, 1.0
  %v4092 = vadd.f32 %v4078, 1.0
  %v4093 = vadd.f32 %v4080, 1.0
  %v4094 = vadd.f32 %v4082, 1.0
  %v4095 = vadd.f32 %v4084, 1.0
  %v4096 = vadd.f32 %v4086, 1.0
  %v4097 = vadd.f32 %v4088, 1.0
  %v4098 = vadd.f32 %v4090, 1.0
  %v4099 = vrcp.pop %v4091
  %v4100 = vmul.f32 1.0, %v4099
  %v4101 = vrcp.pop %v4092
  %v4102 = vmul.f32 1.0, %v4101
  %v4103 = vrcp.pop %v4093
  %v4104 = vmul.f32 1.0, %v4103
  %v4105 = vrcp.pop %v4094
  %v4106 = vmul.f32 1.0, %v4105
  %v4107 = vrcp.pop %v4095
  %v4108 = vmul.f32 1.0, %v4107
  %v4109 = vrcp.pop %v4096
  %v4110 = vmul.f32 1.0, %v4109
  %v4111 = vrcp.pop %v4097
  %v4112 = vmul.f32 1.0, %v4111
  %v4113 = vrcp.pop %v4098
  %v4114 = vmul.f32 1.0, %v4113
  %v4123 = vrot.slane %v4059, 1
  %v4124 = vrot.slane %v4060, 1
  %v4125 = vrot.slane %v4061, 1
  %v4126 = vrot.slane %v4062, 1
  %v4127 = vrot.slane %v4063, 1
  %v4128 = vrot.slane %v4064, 1
  %v4129 = vrot.slane %v4065, 1
  %v4130 = vrot.slane %v4066, 1
  %v4139 = vxor.u32 %v4123, 2147483648
  %v4140 = vxor.u32 %v4124, 2147483648
  %v4141 = vxor.u32 %v4125, 2147483648
  %v4142 = vxor.u32 %v4126, 2147483648
  %v4143 = vxor.u32 %v4127, 2147483648
  %v4144 = vxor.u32 %v4128, 2147483648
  %v4145 = vxor.u32 %v4129, 2147483648
  %v4146 = vxor.u32 %v4130, 2147483648
  %v4147 = vmul.f32 %v4139, 1.442695
  %v4148 = vpow.pop %v4147
  %v4149 = vmul.f32 %v4140, 1.442695
  %v4150 = vpow.pop %v4149
  %v4151 = vmul.f32 %v4141, 1.442695
  %v4152 = vpow.pop %v4151
  %v4153 = vmul.f32 %v4142, 1.442695
  %v4154 = vpow.pop %v4153
  %v4155 = vmul.f32 %v4143, 1.442695
  %v4156 = vpow.pop %v4155
  %v4157 = vmul.f32 %v4144, 1.442695
  %v4158 = vpow.pop %v4157
  %v4159 = vmul.f32 %v4145, 1.442695
  %v4160 = vpow.pop %v4159
  %v4161 = vmul.f32 %v4146, 1.442695
  %v4162 = vpow.pop %v4161
  %v4163 = vadd.f32 %v4148, 1.0
  %v4164 = vadd.f32 %v4150, 1.0
  %v4165 = vadd.f32 %v4152, 1.0
  %v4166 = vadd.f32 %v4154, 1.0
  %v4167 = vadd.f32 %v4156, 1.0
  %v4168 = vadd.f32 %v4158, 1.0
  %v4169 = vadd.f32 %v4160, 1.0
  %v4170 = vadd.f32 %v4162, 1.0
  %v4171 = vrcp.pop %v4163
  %v4172 = vmul.f32 1.0, %v4171
  %v4173 = vrcp.pop %v4164
  %v4174 = vmul.f32 1.0, %v4173
  %v4175 = vrcp.pop %v4165
  %v4176 = vmul.f32 1.0, %v4175
  %v4177 = vrcp.pop %v4166
  %v4178 = vmul.f32 1.0, %v4177
  %v4179 = vrcp.pop %v4167
  %v4180 = vmul.f32 1.0, %v4179
  %v4181 = vrcp.pop %v4168
  %v4182 = vmul.f32 1.0, %v4181
  %v4183 = vrcp.pop %v4169
  %v4184 = vmul.f32 1.0, %v4183
  %v4185 = vrcp.pop %v4170
  %v4186 = vmul.f32 1.0, %v4185
  %v4187 = vrot.slane %v4059, 2
  %v4188 = vrot.slane %v4060, 2
  %v4189 = vrot.slane %v4061, 2
  %v4190 = vrot.slane %v4062, 2
  %v4191 = vrot.slane %v4063, 2
  %v4192 = vrot.slane %v4064, 2
  %v4193 = vrot.slane %v4065, 2
  %v4194 = vrot.slane %v4066, 2
  %v4203 = vtanh.pop %v4187
  %v4204 = vtanh.pop %v4188
  %v4205 = vtanh.pop %v4189
  %v4206 = vtanh.pop %v4190
  %v4207 = vtanh.pop %v4191
  %v4208 = vtanh.pop %v4192
  %v4209 = vtanh.pop %v4193
  %v4210 = vtanh.pop %v4194
  %v4211 = vrot.slane %v4059, 3
  %v4212 = vrot.slane %v4060, 3
  %v4213 = vrot.slane %v4061, 3
  %v4214 = vrot.slane %v4062, 3
  %v4215 = vrot.slane %v4063, 3
  %v4216 = vrot.slane %v4064, 3
  %v4217 = vrot.slane %v4065, 3
  %v4218 = vrot.slane %v4066, 3
  %v4227 = vxor.u32 %v4211, 2147483648
  %v4228 = vxor.u32 %v4212, 2147483648
  %v4229 = vxor.u32 %v4213, 2147483648
  %v4230 = vxor.u32 %v4214, 2147483648
  %v4231 = vxor.u32 %v4215, 2147483648
  %v4232 = vxor.u32 %v4216, 2147483648
  %v4233 = vxor.u32 %v4217, 2147483648
  %v4234 = vxor.u32 %v4218, 2147483648
  %v4235 = vmul.f32 %v4227, 1.442695
  %v4236 = vpow.pop %v4235
  %v4237 = vmul.f32 %v4228, 1.442695
  %v4238 = vpow.pop %v4237
  %v4239 = vmul.f32 %v4229, 1.442695
  %v4240 = vpow.pop %v4239
  %v4241 = vmul.f32 %v4230, 1.442695
  %v4242 = vpow.pop %v4241
  %v4243 = vmul.f32 %v4231, 1.442695
  %v4244 = vpow.pop %v4243
  %v4245 = vmul.f32 %v4232, 1.442695
  %v4246 = vpow.pop %v4245
  %v4247 = vmul.f32 %v4233, 1.442695
  %v4248 = vpow.pop %v4247
  %v4249 = vmul.f32 %v4234, 1.442695
  %v4250 = vpow.pop %v4249
  %v4251 = vadd.f32 %v4236, 1.0
  %v4252 = vadd.f32 %v4238, 1.0
  %v4253 = vadd.f32 %v4240, 1.0
  %v4254 = vadd.f32 %v4242, 1.0
  %v4255 = vadd.f32 %v4244, 1.0
  %v4256 = vadd.f32 %v4246, 1.0
  %v4257 = vadd.f32 %v4248, 1.0
  %v4258 = vadd.f32 %v4250, 1.0
  %v4259 = vrcp.pop %v4251
  %v4260 = vmul.f32 1.0, %v4259
  %v4261 = vrcp.pop %v4252
  %v4262 = vmul.f32 1.0, %v4261
  %v4263 = vrcp.pop %v4253
  %v4264 = vmul.f32 1.0, %v4263
  %v4265 = vrcp.pop %v4254
  %v4266 = vmul.f32 1.0, %v4265
  %v4267 = vrcp.pop %v4255
  %v4268 = vmul.f32 1.0, %v4267
  %v4269 = vrcp.pop %v4256
  %v4270 = vmul.f32 1.0, %v4269
  %v4271 = vrcp.pop %v4257
  %v4272 = vmul.f32 1.0, %v4271
  %v4273 = vrcp.pop %v4258
  %v4274 = vmul.f32 1.0, %v4273
  %v4275 = vmul.f32 %v4172, %v3667
  %v4276 = vmul.f32 %v4174, %v3668
  %v4277 = vmul.f32 %v4176, %v3669
  %v4278 = vmul.f32 %v4178, %v3670
  %v4279 = vmul.f32 %v4180, %v3671
  %v4280 = vmul.f32 %v4182, %v3672
  %v4281 = vmul.f32 %v4184, %v3673
  %v4282 = vmul.f32 %v4186, %v3674
  %v4283 = vmul.f32 %v4100, %v4203
  %v4284 = vmul.f32 %v4102, %v4204
  %v4285 = vmul.f32 %v4104, %v4205
  %v4286 = vmul.f32 %v4106, %v4206
  %v4287 = vmul.f32 %v4108, %v4207
  %v4288 = vmul.f32 %v4110, %v4208
  %v4289 = vmul.f32 %v4112, %v4209
  %v4290 = vmul.f32 %v4114, %v4210
  %v4291 = vadd.f32 %v4275, %v4283
  %v4292 = vadd.f32 %v4276, %v4284
  %v4293 = vadd.f32 %v4277, %v4285
  %v4294 = vadd.f32 %v4278, %v4286
  %v4295 = vadd.f32 %v4279, %v4287
  %v4296 = vadd.f32 %v4280, %v4288
  %v4297 = vadd.f32 %v4281, %v4289
  %v4298 = vadd.f32 %v4282, %v4290
  %v4299 = vtanh.pop %v4291
  %v4300 = vtanh.pop %v4292
  %v4301 = vtanh.pop %v4293
  %v4302 = vtanh.pop %v4294
  %v4303 = vtanh.pop %v4295
  %v4304 = vtanh.pop %v4296
  %v4305 = vtanh.pop %v4297
  %v4306 = vtanh.pop %v4298
  %v4307 = vmul.f32 %v4260, %v4299
  %v4308 = vmul.f32 %v4262, %v4300
  %v4309 = vmul.f32 %v4264, %v4301
  %v4310 = vmul.f32 %v4266, %v4302
  %v4311 = vmul.f32 %v4268, %v4303
  %v4312 = vmul.f32 %v4270, %v4304
  %v4313 = vmul.f32 %v4272, %v4305
  %v4314 = vmul.f32 %v4274, %v4306
  %4315 = vst [vmem:[%s2 + $0x6] sm:$0x1] %v4307
  %4316 = vst [vmem:[%s2 + $0xe] sm:$0x1] %v4308
  %4317 = vst [vmem:[%s2 + $0x16] sm:$0x1] %v4309
  %4318 = vst [vmem:[%s2 + $0x1e] sm:$0x1] %v4310
  %4319 = vst [vmem:[%s2 + $0x26] sm:$0x1] %v4311
  %4320 = vst [vmem:[%s2 + $0x2e] sm:$0x1] %v4312
  %4321 = vst [vmem:[%s2 + $0x36] sm:$0x1] %v4313
  %4322 = vst [vmem:[%s2 + $0x3e] sm:$0x1] %v4314
  %s4323 = scalar_lea.vmem %s0, 7
  %v4324 = vld [vmem:[%s4323] ss:$8 sm:$0xf]
  %s4325 = scalar_lea.vmem %s0, 39
  %v4326 = vld [vmem:[%s4325] ss:$8 sm:$0xf]
  %s4327 = scalar_lea.vmem %s0, 71
  %v4328 = vld [vmem:[%s4327] ss:$8 sm:$0xf]
  %s4329 = scalar_lea.vmem %s0, 103
  %v4330 = vld [vmem:[%s4329] ss:$8 sm:$0xf]
  %s4331 = scalar_lea.vmem %s0, 135
  %v4332 = vld [vmem:[%s4331] ss:$8 sm:$0xf]
  %s4333 = scalar_lea.vmem %s0, 167
  %v4334 = vld [vmem:[%s4333] ss:$8 sm:$0xf]
  %s4335 = scalar_lea.vmem %s0, 199
  %v4336 = vld [vmem:[%s4335] ss:$8 sm:$0xf]
  %s4337 = scalar_lea.vmem %s0, 231
  %v4338 = vld [vmem:[%s4337] ss:$8 sm:$0xf]
  %v4339 = vld [vmem:[%s1] sm:$0xff]
  %v4340 = vld [vmem:[%s1 + $0x8] sm:$0xff]
  %v4341 = vld [vmem:[%s1 + $0x10] sm:$0xff]
  %v4342 = vld [vmem:[%s1 + $0x18] sm:$0xff]
  %v4343 = vld [vmem:[%s1 + $0x20] sm:$0xff]
  %v4344 = vld [vmem:[%s1 + $0x28] sm:$0xff]
  %v4345 = vld [vmem:[%s1 + $0x30] sm:$0xff]
  %v4346 = vld [vmem:[%s1 + $0x38] sm:$0xff]
  %v4347 = vld [vmem:[%s1 + $0x40] sm:$0xff]
  %v4348 = vld [vmem:[%s1 + $0x48] sm:$0xff]
  %v4349 = vld [vmem:[%s1 + $0x50] sm:$0xff]
  %v4350 = vld [vmem:[%s1 + $0x58] sm:$0xff]
  %v4351 = vld [vmem:[%s1 + $0x60] sm:$0xff]
  %v4352 = vld [vmem:[%s1 + $0x68] sm:$0xff]
  %v4353 = vld [vmem:[%s1 + $0x70] sm:$0xff]
  %v4354 = vld [vmem:[%s1 + $0x78] sm:$0xff]
  %v4355 = vld [vmem:[%s1 + $0x80] sm:$0xff]
  %v4356 = vld [vmem:[%s1 + $0x88] sm:$0xff]
  %v4357 = vld [vmem:[%s1 + $0x90] sm:$0xff]
  %v4358 = vld [vmem:[%s1 + $0x98] sm:$0xff]
  %v4359 = vld [vmem:[%s1 + $0xa0] sm:$0xff]
  %v4360 = vld [vmem:[%s1 + $0xa8] sm:$0xff]
  %v4361 = vld [vmem:[%s1 + $0xb0] sm:$0xff]
  %v4362 = vld [vmem:[%s1 + $0xb8] sm:$0xff]
  %v4363 = vld [vmem:[%s1 + $0xc0] sm:$0xff]
  %v4364 = vld [vmem:[%s1 + $0xc8] sm:$0xff]
  %v4365 = vld [vmem:[%s1 + $0xd0] sm:$0xff]
  %v4366 = vld [vmem:[%s1 + $0xd8] sm:$0xff]
  %v4367 = vld [vmem:[%s1 + $0xe0] sm:$0xff]
  %v4368 = vld [vmem:[%s1 + $0xe8] sm:$0xff]
  %v4369 = vld [vmem:[%s1 + $0xf0] sm:$0xff]
  %v4370 = vld [vmem:[%s1 + $0xf8] sm:$0xff]
  %v4371 = vld [vmem:[%s1 + $0x100] sm:$0xff]
  %v4372 = vld [vmem:[%s1 + $0x108] sm:$0xff]
  %v4373 = vld [vmem:[%s1 + $0x110] sm:$0xff]
  %v4374 = vld [vmem:[%s1 + $0x118] sm:$0xff]
  %v4375 = vld [vmem:[%s1 + $0x120] sm:$0xff]
  %v4376 = vld [vmem:[%s1 + $0x128] sm:$0xff]
  %v4377 = vld [vmem:[%s1 + $0x130] sm:$0xff]
  %v4378 = vld [vmem:[%s1 + $0x138] sm:$0xff]
  %v4379 = vld [vmem:[%s1 + $0x140] sm:$0xff]
  %v4380 = vld [vmem:[%s1 + $0x148] sm:$0xff]
  %v4381 = vld [vmem:[%s1 + $0x150] sm:$0xff]
  %v4382 = vld [vmem:[%s1 + $0x158] sm:$0xff]
  %v4383 = vld [vmem:[%s1 + $0x160] sm:$0xff]
  %v4384 = vld [vmem:[%s1 + $0x168] sm:$0xff]
  %v4385 = vld [vmem:[%s1 + $0x170] sm:$0xff]
  %v4386 = vld [vmem:[%s1 + $0x178] sm:$0xff]
  %v4387 = vld [vmem:[%s1 + $0x180] sm:$0xff]
  %v4388 = vld [vmem:[%s1 + $0x188] sm:$0xff]
  %v4389 = vld [vmem:[%s1 + $0x190] sm:$0xff]
  %v4390 = vld [vmem:[%s1 + $0x198] sm:$0xff]
  %v4391 = vld [vmem:[%s1 + $0x1a0] sm:$0xff]
  %v4392 = vld [vmem:[%s1 + $0x1a8] sm:$0xff]
  %v4393 = vld [vmem:[%s1 + $0x1b0] sm:$0xff]
  %v4394 = vld [vmem:[%s1 + $0x1b8] sm:$0xff]
  %v4395 = vld [vmem:[%s1 + $0x1c0] sm:$0xff]
  %v4396 = vld [vmem:[%s1 + $0x1c8] sm:$0xff]
  %v4397 = vld [vmem:[%s1 + $0x1d0] sm:$0xff]
  %v4398 = vld [vmem:[%s1 + $0x1d8] sm:$0xff]
  %v4399 = vld [vmem:[%s1 + $0x1e0] sm:$0xff]
  %v4400 = vld [vmem:[%s1 + $0x1e8] sm:$0xff]
  %v4401 = vld [vmem:[%s1 + $0x1f0] sm:$0xff]
  %v4402 = vld [vmem:[%s1 + $0x1f8] sm:$0xff]
  %v4411 = vcombine.low %v4307, %v4308
  %v4412 = vcombine.low %v4309, %v4310
  %v4413 = vcombine.low %v4311, %v4312
  %v4414 = vcombine.low %v4313, %v4314
  %v4416 = vunpack.c.l.s4 1966171168
  %v4417 = vunpack.c.0.s8 %v4416
  %v4418 = vlaneseq
  %v4419 = vshrl.u32 %v4418, 7
  %v4420 = vsub.s32 %v4417, %v4419
  %v4421 = vrot.slane %v4411, %v4420
  %v4423 = vunpack.c.l.s4 1966171168
  %v4424 = vunpack.c.0.s8 %v4423
  %v4425 = vlaneseq
  %v4426 = vshrl.u32 %v4425, 7
  %v4427 = vsub.s32 %v4424, %v4426
  %v4428 = vrot.slane %v4412, %v4427
  %v4430 = vunpack.c.l.s4 1966171168
  %v4431 = vunpack.c.0.s8 %v4430
  %v4432 = vlaneseq
  %v4433 = vshrl.u32 %v4432, 7
  %v4434 = vsub.s32 %v4431, %v4433
  %v4435 = vrot.slane %v4413, %v4434
  %v4437 = vunpack.c.l.s4 1966171168
  %v4438 = vunpack.c.0.s8 %v4437
  %v4439 = vlaneseq
  %v4440 = vshrl.u32 %v4439, 7
  %v4441 = vsub.s32 %v4438, %v4440
  %v4442 = vrot.slane %v4414, %v4441
  %v4443 = vcombine.low %v4421, %v4428
  %v4444 = vcombine.low %v4435, %v4442
  %v4446 = vunpack.c.l.s4 1966171168
  %v4447 = vunpack.c.0.s8 %v4446
  %v4448 = vlaneseq
  %v4449 = vshrl.u32 %v4448, 7
  %v4450 = vsub.s32 %v4447, %v4449
  %v4451 = vrot.slane %v4443, %v4450
  %v4453 = vunpack.c.l.s4 1966171168
  %v4454 = vunpack.c.0.s8 %v4453
  %v4455 = vlaneseq
  %v4456 = vshrl.u32 %v4455, 7
  %v4457 = vsub.s32 %v4454, %v4456
  %v4458 = vrot.slane %v4444, %v4457
  %v4459 = vcombine.low %v4451, %v4458
  %4461 = vmatprep.subr.mxu0 %v4400
  %4462 = vmatpush1.msra.mxu0 %v4399
  %4463 = vmatprep.subr.mxu0 %v4396
  %4464 = vmatpush1.msra.mxu0 %v4395
  %4465 = vmatprep.subr.mxu0 %v4392
  %4466 = vmatpush1.msra.mxu0 %v4391
  %4467 = vmatprep.subr.mxu0 %v4388
  %4468 = vmatpush1.msra.mxu0 %v4387
  %4469 = vmatprep.subr.mxu0 %v4384
  %4470 = vmatpush1.msra.mxu0 %v4383
  %4471 = vmatprep.subr.mxu0 %v4380
  %4472 = vmatpush1.msra.mxu0 %v4379
  %4473 = vmatprep.subr.mxu0 %v4376
  %4474 = vmatpush1.msra.mxu0 %v4375
  %4475 = vmatprep.subr.mxu0 %v4372
  %4476 = vmatpush1.msra.mxu0 %v4371
  %4477 = vmatprep.subr.mxu0 %v4368
  %4478 = vmatpush1.msra.mxu0 %v4367
  %4479 = vmatprep.subr.mxu0 %v4364
  %4480 = vmatpush1.msra.mxu0 %v4363
  %4481 = vmatprep.subr.mxu0 %v4360
  %4482 = vmatpush1.msra.mxu0 %v4359
  %4483 = vmatprep.subr.mxu0 %v4356
  %4484 = vmatpush1.msra.mxu0 %v4355
  %4485 = vmatprep.subr.mxu0 %v4352
  %4486 = vmatpush1.msra.mxu0 %v4351
  %4487 = vmatprep.subr.mxu0 %v4348
  %4488 = vmatpush1.msra.mxu0 %v4347
  %4489 = vmatprep.subr.mxu0 %v4344
  %4490 = vmatpush1.msra.mxu0 %v4343
  %4491 = vmatprep.subr.mxu0 %v4340
  %4492 = vmatpush1.msra.mxu0 %v4339
  %4493 = vmatprep.subr.mxu0 0.0
  %4494 = vmatpush2.msra.mxu0 0.0
  %4495 = vmatprep.subr.mxu0 0.0
  %4496 = vmatpush2.msra.mxu0 0.0
  %4497 = vmatprep.subr.mxu0 0.0
  %4498 = vmatpush2.msra.mxu0 0.0
  %4499 = vmatprep.subr.mxu0 0.0
  %4500 = vmatpush2.msra.mxu0 0.0
  %4501 = vmatprep.subr.mxu0 0.0
  %4502 = vmatpush2.msra.mxu0 0.0
  %4503 = vmatprep.subr.mxu0 0.0
  %4504 = vmatpush2.msra.mxu0 0.0
  %4505 = vmatprep.subr.mxu0 0.0
  %4506 = vmatpush2.msra.mxu0 0.0
  %4507 = vmatprep.subr.mxu0 0.0
  %4508 = vmatpush2.msra.mxu0 0.0
  %4509 = vmatprep.subr.mxu0 0.0
  %4510 = vmatpush2.msra.mxu0 0.0
  %4511 = vmatprep.subr.mxu0 0.0
  %4512 = vmatpush2.msra.mxu0 0.0
  %4513 = vmatprep.subr.mxu0 0.0
  %4514 = vmatpush2.msra.mxu0 0.0
  %4515 = vmatprep.subr.mxu0 0.0
  %4516 = vmatpush2.msra.mxu0 0.0
  %4517 = vmatprep.subr.mxu0 0.0
  %4518 = vmatpush2.msra.mxu0 0.0
  %4519 = vmatprep.subr.mxu0 0.0
  %4520 = vmatpush2.msra.mxu0 0.0
  %4521 = vmatprep.subr.mxu0 0.0
  %4522 = vmatpush2.msra.mxu0 0.0
  %4523 = vmatprep.subr.mxu0 0.0
  %4524 = vmatpush2.msra.mxu0 0.0
  %4525 = vmatprep.mubr.f32.mxu0 0.0
  %4526 = vmatmul.mubr.f32.gmra.mxu0 %v4459
  %v4527 = vpop.f32.mrf.mxu0
  %v4528 = vadd.f32 0.0, %v4527
  %v4529 = vpop.f32.mrf.mxu0
  %v4530 = vadd.f32 0.0, %v4529
  %4531 = vdwg.mxu0
  %4532 = vmatprep.subr.mxu0 %v4402
  %4533 = vmatpush1.msra.mxu0 %v4401
  %4534 = vmatprep.subr.mxu0 %v4398
  %4535 = vmatpush1.msra.mxu0 %v4397
  %4536 = vmatprep.subr.mxu0 %v4394
  %4537 = vmatpush1.msra.mxu0 %v4393
  %4538 = vmatprep.subr.mxu0 %v4390
  %4539 = vmatpush1.msra.mxu0 %v4389
  %4540 = vmatprep.subr.mxu0 %v4386
  %4541 = vmatpush1.msra.mxu0 %v4385
  %4542 = vmatprep.subr.mxu0 %v4382
  %4543 = vmatpush1.msra.mxu0 %v4381
  %4544 = vmatprep.subr.mxu0 %v4378
  %4545 = vmatpush1.msra.mxu0 %v4377
  %4546 = vmatprep.subr.mxu0 %v4374
  %4547 = vmatpush1.msra.mxu0 %v4373
  %4548 = vmatprep.subr.mxu0 %v4370
  %4549 = vmatpush1.msra.mxu0 %v4369
  %4550 = vmatprep.subr.mxu0 %v4366
  %4551 = vmatpush1.msra.mxu0 %v4365
  %4552 = vmatprep.subr.mxu0 %v4362
  %4553 = vmatpush1.msra.mxu0 %v4361
  %4554 = vmatprep.subr.mxu0 %v4358
  %4555 = vmatpush1.msra.mxu0 %v4357
  %4556 = vmatprep.subr.mxu0 %v4354
  %4557 = vmatpush1.msra.mxu0 %v4353
  %4558 = vmatprep.subr.mxu0 %v4350
  %4559 = vmatpush1.msra.mxu0 %v4349
  %4560 = vmatprep.subr.mxu0 %v4346
  %4561 = vmatpush1.msra.mxu0 %v4345
  %4562 = vmatprep.subr.mxu0 %v4342
  %4563 = vmatpush1.msra.mxu0 %v4341
  %4564 = vmatprep.subr.mxu0 0.0
  %4565 = vmatpush2.msra.mxu0 0.0
  %4566 = vmatprep.subr.mxu0 0.0
  %4567 = vmatpush2.msra.mxu0 0.0
  %4568 = vmatprep.subr.mxu0 0.0
  %4569 = vmatpush2.msra.mxu0 0.0
  %4570 = vmatprep.subr.mxu0 0.0
  %4571 = vmatpush2.msra.mxu0 0.0
  %4572 = vmatprep.subr.mxu0 0.0
  %4573 = vmatpush2.msra.mxu0 0.0
  %4574 = vmatprep.subr.mxu0 0.0
  %4575 = vmatpush2.msra.mxu0 0.0
  %4576 = vmatprep.subr.mxu0 0.0
  %4577 = vmatpush2.msra.mxu0 0.0
  %4578 = vmatprep.subr.mxu0 0.0
  %4579 = vmatpush2.msra.mxu0 0.0
  %4580 = vmatprep.subr.mxu0 0.0
  %4581 = vmatpush2.msra.mxu0 0.0
  %4582 = vmatprep.subr.mxu0 0.0
  %4583 = vmatpush2.msra.mxu0 0.0
  %4584 = vmatprep.subr.mxu0 0.0
  %4585 = vmatpush2.msra.mxu0 0.0
  %4586 = vmatprep.subr.mxu0 0.0
  %4587 = vmatpush2.msra.mxu0 0.0
  %4588 = vmatprep.subr.mxu0 0.0
  %4589 = vmatpush2.msra.mxu0 0.0
  %4590 = vmatprep.subr.mxu0 0.0
  %4591 = vmatpush2.msra.mxu0 0.0
  %4592 = vmatprep.subr.mxu0 0.0
  %4593 = vmatpush2.msra.mxu0 0.0
  %4594 = vmatprep.subr.mxu0 0.0
  %4595 = vmatpush2.msra.mxu0 0.0
  %4596 = vmatprep.mubr.f32.mxu0 0.0
  %4597 = vmatmul.mubr.f32.gmra.mxu0 %v4459
  %v4598 = vpop.f32.mrf.mxu0
  %v4599 = vadd.f32 0.0, %v4598
  %v4600 = vpop.f32.mrf.mxu0
  %v4601 = vadd.f32 0.0, %v4600
  %4602 = vdwg.mxu0
  %v4607 = vcombine.low %v4528, %v4530
  %v4608 = vcombine.high %v4528, %v4530
  %v4609 = vcombine.low %v4599, %v4601
  %v4610 = vcombine.high %v4599, %v4601
  %v4612 = vunpack.c.l.s4 1966171168
  %v4613 = vunpack.c.0.s8 %v4612
  %v4614 = vlaneseq
  %v4615 = vshrl.u32 %v4614, 7
  %v4616 = vsub.s32 %v4613, %v4615
  %v4617 = vrot.slane %v4607, %v4616
  %v4619 = vunpack.c.l.s4 1966171168
  %v4620 = vunpack.c.0.s8 %v4619
  %v4621 = vlaneseq
  %v4622 = vshrl.u32 %v4621, 7
  %v4623 = vsub.s32 %v4620, %v4622
  %v4624 = vrot.slane %v4608, %v4623
  %v4626 = vunpack.c.l.s4 1966171168
  %v4627 = vunpack.c.0.s8 %v4626
  %v4628 = vlaneseq
  %v4629 = vshrl.u32 %v4628, 7
  %v4630 = vsub.s32 %v4627, %v4629
  %v4631 = vrot.slane %v4609, %v4630
  %v4633 = vunpack.c.l.s4 1966171168
  %v4634 = vunpack.c.0.s8 %v4633
  %v4635 = vlaneseq
  %v4636 = vshrl.u32 %v4635, 7
  %v4637 = vsub.s32 %v4634, %v4636
  %v4638 = vrot.slane %v4610, %v4637
  %v4639 = vcombine.low %v4617, %v4631
  %v4640 = vcombine.high %v4617, %v4631
  %v4641 = vcombine.low %v4624, %v4638
  %v4642 = vcombine.high %v4624, %v4638
  %v4644 = vunpack.c.l.s4 1966171168
  %v4645 = vunpack.c.0.s8 %v4644
  %v4646 = vlaneseq
  %v4647 = vshrl.u32 %v4646, 7
  %v4648 = vsub.s32 %v4645, %v4647
  %v4649 = vrot.slane %v4639, %v4648
  %v4651 = vunpack.c.l.s4 1966171168
  %v4652 = vunpack.c.0.s8 %v4651
  %v4653 = vlaneseq
  %v4654 = vshrl.u32 %v4653, 7
  %v4655 = vsub.s32 %v4652, %v4654
  %v4656 = vrot.slane %v4641, %v4655
  %v4658 = vunpack.c.l.s4 1966171168
  %v4659 = vunpack.c.0.s8 %v4658
  %v4660 = vlaneseq
  %v4661 = vshrl.u32 %v4660, 7
  %v4662 = vsub.s32 %v4659, %v4661
  %v4663 = vrot.slane %v4640, %v4662
  %v4665 = vunpack.c.l.s4 1966171168
  %v4666 = vunpack.c.0.s8 %v4665
  %v4667 = vlaneseq
  %v4668 = vshrl.u32 %v4667, 7
  %v4669 = vsub.s32 %v4666, %v4668
  %v4670 = vrot.slane %v4642, %v4669
  %v4671 = vcombine.high %v4649, %v4649
  %v4672 = vcombine.high %v4656, %v4656
  %v4673 = vcombine.high %v4663, %v4663
  %v4674 = vcombine.high %v4670, %v4670
  %v4683 = vadd.f32 %v4324, %v4649
  %v4684 = vadd.f32 %v4326, %v4663
  %v4685 = vadd.f32 %v4328, %v4671
  %v4686 = vadd.f32 %v4330, %v4673
  %v4687 = vadd.f32 %v4332, %v4656
  %v4688 = vadd.f32 %v4334, %v4670
  %v4689 = vadd.f32 %v4336, %v4672
  %v4690 = vadd.f32 %v4338, %v4674
  %v4691 = vxor.u32 %v4683, 2147483648
  %v4692 = vxor.u32 %v4684, 2147483648
  %v4693 = vxor.u32 %v4685, 2147483648
  %v4694 = vxor.u32 %v4686, 2147483648
  %v4695 = vxor.u32 %v4687, 2147483648
  %v4696 = vxor.u32 %v4688, 2147483648
  %v4697 = vxor.u32 %v4689, 2147483648
  %v4698 = vxor.u32 %v4690, 2147483648
  %v4699 = vmul.f32 %v4691, 1.442695
  %v4700 = vpow.pop %v4699
  %v4701 = vmul.f32 %v4692, 1.442695
  %v4702 = vpow.pop %v4701
  %v4703 = vmul.f32 %v4693, 1.442695
  %v4704 = vpow.pop %v4703
  %v4705 = vmul.f32 %v4694, 1.442695
  %v4706 = vpow.pop %v4705
  %v4707 = vmul.f32 %v4695, 1.442695
  %v4708 = vpow.pop %v4707
  %v4709 = vmul.f32 %v4696, 1.442695
  %v4710 = vpow.pop %v4709
  %v4711 = vmul.f32 %v4697, 1.442695
  %v4712 = vpow.pop %v4711
  %v4713 = vmul.f32 %v4698, 1.442695
  %v4714 = vpow.pop %v4713
  %v4715 = vadd.f32 %v4700, 1.0
  %v4716 = vadd.f32 %v4702, 1.0
  %v4717 = vadd.f32 %v4704, 1.0
  %v4718 = vadd.f32 %v4706, 1.0
  %v4719 = vadd.f32 %v4708, 1.0
  %v4720 = vadd.f32 %v4710, 1.0
  %v4721 = vadd.f32 %v4712, 1.0
  %v4722 = vadd.f32 %v4714, 1.0
  %v4723 = vrcp.pop %v4715
  %v4724 = vmul.f32 1.0, %v4723
  %v4725 = vrcp.pop %v4716
  %v4726 = vmul.f32 1.0, %v4725
  %v4727 = vrcp.pop %v4717
  %v4728 = vmul.f32 1.0, %v4727
  %v4729 = vrcp.pop %v4718
  %v4730 = vmul.f32 1.0, %v4729
  %v4731 = vrcp.pop %v4719
  %v4732 = vmul.f32 1.0, %v4731
  %v4733 = vrcp.pop %v4720
  %v4734 = vmul.f32 1.0, %v4733
  %v4735 = vrcp.pop %v4721
  %v4736 = vmul.f32 1.0, %v4735
  %v4737 = vrcp.pop %v4722
  %v4738 = vmul.f32 1.0, %v4737
  %v4747 = vrot.slane %v4683, 1
  %v4748 = vrot.slane %v4684, 1
  %v4749 = vrot.slane %v4685, 1
  %v4750 = vrot.slane %v4686, 1
  %v4751 = vrot.slane %v4687, 1
  %v4752 = vrot.slane %v4688, 1
  %v4753 = vrot.slane %v4689, 1
  %v4754 = vrot.slane %v4690, 1
  %v4763 = vxor.u32 %v4747, 2147483648
  %v4764 = vxor.u32 %v4748, 2147483648
  %v4765 = vxor.u32 %v4749, 2147483648
  %v4766 = vxor.u32 %v4750, 2147483648
  %v4767 = vxor.u32 %v4751, 2147483648
  %v4768 = vxor.u32 %v4752, 2147483648
  %v4769 = vxor.u32 %v4753, 2147483648
  %v4770 = vxor.u32 %v4754, 2147483648
  %v4771 = vmul.f32 %v4763, 1.442695
  %v4772 = vpow.pop %v4771
  %v4773 = vmul.f32 %v4764, 1.442695
  %v4774 = vpow.pop %v4773
  %v4775 = vmul.f32 %v4765, 1.442695
  %v4776 = vpow.pop %v4775
  %v4777 = vmul.f32 %v4766, 1.442695
  %v4778 = vpow.pop %v4777
  %v4779 = vmul.f32 %v4767, 1.442695
  %v4780 = vpow.pop %v4779
  %v4781 = vmul.f32 %v4768, 1.442695
  %v4782 = vpow.pop %v4781
  %v4783 = vmul.f32 %v4769, 1.442695
  %v4784 = vpow.pop %v4783
  %v4785 = vmul.f32 %v4770, 1.442695
  %v4786 = vpow.pop %v4785
  %v4787 = vadd.f32 %v4772, 1.0
  %v4788 = vadd.f32 %v4774, 1.0
  %v4789 = vadd.f32 %v4776, 1.0
  %v4790 = vadd.f32 %v4778, 1.0
  %v4791 = vadd.f32 %v4780, 1.0
  %v4792 = vadd.f32 %v4782, 1.0
  %v4793 = vadd.f32 %v4784, 1.0
  %v4794 = vadd.f32 %v4786, 1.0
  %v4795 = vrcp.pop %v4787
  %v4796 = vmul.f32 1.0, %v4795
  %v4797 = vrcp.pop %v4788
  %v4798 = vmul.f32 1.0, %v4797
  %v4799 = vrcp.pop %v4789
  %v4800 = vmul.f32 1.0, %v4799
  %v4801 = vrcp.pop %v4790
  %v4802 = vmul.f32 1.0, %v4801
  %v4803 = vrcp.pop %v4791
  %v4804 = vmul.f32 1.0, %v4803
  %v4805 = vrcp.pop %v4792
  %v4806 = vmul.f32 1.0, %v4805
  %v4807 = vrcp.pop %v4793
  %v4808 = vmul.f32 1.0, %v4807
  %v4809 = vrcp.pop %v4794
  %v4810 = vmul.f32 1.0, %v4809
  %v4811 = vrot.slane %v4683, 2
  %v4812 = vrot.slane %v4684, 2
  %v4813 = vrot.slane %v4685, 2
  %v4814 = vrot.slane %v4686, 2
  %v4815 = vrot.slane %v4687, 2
  %v4816 = vrot.slane %v4688, 2
  %v4817 = vrot.slane %v4689, 2
  %v4818 = vrot.slane %v4690, 2
  %v4827 = vtanh.pop %v4811
  %v4828 = vtanh.pop %v4812
  %v4829 = vtanh.pop %v4813
  %v4830 = vtanh.pop %v4814
  %v4831 = vtanh.pop %v4815
  %v4832 = vtanh.pop %v4816
  %v4833 = vtanh.pop %v4817
  %v4834 = vtanh.pop %v4818
  %v4835 = vrot.slane %v4683, 3
  %v4836 = vrot.slane %v4684, 3
  %v4837 = vrot.slane %v4685, 3
  %v4838 = vrot.slane %v4686, 3
  %v4839 = vrot.slane %v4687, 3
  %v4840 = vrot.slane %v4688, 3
  %v4841 = vrot.slane %v4689, 3
  %v4842 = vrot.slane %v4690, 3
  %v4851 = vxor.u32 %v4835, 2147483648
  %v4852 = vxor.u32 %v4836, 2147483648
  %v4853 = vxor.u32 %v4837, 2147483648
  %v4854 = vxor.u32 %v4838, 2147483648
  %v4855 = vxor.u32 %v4839, 2147483648
  %v4856 = vxor.u32 %v4840, 2147483648
  %v4857 = vxor.u32 %v4841, 2147483648
  %v4858 = vxor.u32 %v4842, 2147483648
  %v4859 = vmul.f32 %v4851, 1.442695
  %v4860 = vpow.pop %v4859
  %v4861 = vmul.f32 %v4852, 1.442695
  %v4862 = vpow.pop %v4861
  %v4863 = vmul.f32 %v4853, 1.442695
  %v4864 = vpow.pop %v4863
  %v4865 = vmul.f32 %v4854, 1.442695
  %v4866 = vpow.pop %v4865
  %v4867 = vmul.f32 %v4855, 1.442695
  %v4868 = vpow.pop %v4867
  %v4869 = vmul.f32 %v4856, 1.442695
  %v4870 = vpow.pop %v4869
  %v4871 = vmul.f32 %v4857, 1.442695
  %v4872 = vpow.pop %v4871
  %v4873 = vmul.f32 %v4858, 1.442695
  %v4874 = vpow.pop %v4873
  %v4875 = vadd.f32 %v4860, 1.0
  %v4876 = vadd.f32 %v4862, 1.0
  %v4877 = vadd.f32 %v4864, 1.0
  %v4878 = vadd.f32 %v4866, 1.0
  %v4879 = vadd.f32 %v4868, 1.0
  %v4880 = vadd.f32 %v4870, 1.0
  %v4881 = vadd.f32 %v4872, 1.0
  %v4882 = vadd.f32 %v4874, 1.0
  %v4883 = vrcp.pop %v4875
  %v4884 = vmul.f32 1.0, %v4883
  %v4885 = vrcp.pop %v4876
  %v4886 = vmul.f32 1.0, %v4885
  %v4887 = vrcp.pop %v4877
  %v4888 = vmul.f32 1.0, %v4887
  %v4889 = vrcp.pop %v4878
  %v4890 = vmul.f32 1.0, %v4889
  %v4891 = vrcp.pop %v4879
  %v4892 = vmul.f32 1.0, %v4891
  %v4893 = vrcp.pop %v4880
  %v4894 = vmul.f32 1.0, %v4893
  %v4895 = vrcp.pop %v4881
  %v4896 = vmul.f32 1.0, %v4895
  %v4897 = vrcp.pop %v4882
  %v4898 = vmul.f32 1.0, %v4897
  %v4899 = vmul.f32 %v4796, %v4291
  %v4900 = vmul.f32 %v4798, %v4292
  %v4901 = vmul.f32 %v4800, %v4293
  %v4902 = vmul.f32 %v4802, %v4294
  %v4903 = vmul.f32 %v4804, %v4295
  %v4904 = vmul.f32 %v4806, %v4296
  %v4905 = vmul.f32 %v4808, %v4297
  %v4906 = vmul.f32 %v4810, %v4298
  %v4907 = vmul.f32 %v4724, %v4827
  %v4908 = vmul.f32 %v4726, %v4828
  %v4909 = vmul.f32 %v4728, %v4829
  %v4910 = vmul.f32 %v4730, %v4830
  %v4911 = vmul.f32 %v4732, %v4831
  %v4912 = vmul.f32 %v4734, %v4832
  %v4913 = vmul.f32 %v4736, %v4833
  %v4914 = vmul.f32 %v4738, %v4834
  %v4915 = vadd.f32 %v4899, %v4907
  %v4916 = vadd.f32 %v4900, %v4908
  %v4917 = vadd.f32 %v4901, %v4909
  %v4918 = vadd.f32 %v4902, %v4910
  %v4919 = vadd.f32 %v4903, %v4911
  %v4920 = vadd.f32 %v4904, %v4912
  %v4921 = vadd.f32 %v4905, %v4913
  %v4922 = vadd.f32 %v4906, %v4914
  %v4923 = vtanh.pop %v4915
  %v4924 = vtanh.pop %v4916
  %v4925 = vtanh.pop %v4917
  %v4926 = vtanh.pop %v4918
  %v4927 = vtanh.pop %v4919
  %v4928 = vtanh.pop %v4920
  %v4929 = vtanh.pop %v4921
  %v4930 = vtanh.pop %v4922
  %v4931 = vmul.f32 %v4884, %v4923
  %v4932 = vmul.f32 %v4886, %v4924
  %v4933 = vmul.f32 %v4888, %v4925
  %v4934 = vmul.f32 %v4890, %v4926
  %v4935 = vmul.f32 %v4892, %v4927
  %v4936 = vmul.f32 %v4894, %v4928
  %v4937 = vmul.f32 %v4896, %v4929
  %v4938 = vmul.f32 %v4898, %v4930
  %4939 = vst [vmem:[%s2 + $0x7] sm:$0x1] %v4931
  %4940 = vst [vmem:[%s2 + $0xf] sm:$0x1] %v4932
  %4941 = vst [vmem:[%s2 + $0x17] sm:$0x1] %v4933
  %4942 = vst [vmem:[%s2 + $0x1f] sm:$0x1] %v4934
  %4943 = vst [vmem:[%s2 + $0x27] sm:$0x1] %v4935
  %4944 = vst [vmem:[%s2 + $0x2f] sm:$0x1] %v4936
  %4945 = vst [vmem:[%s2 + $0x37] sm:$0x1] %v4937
  %4946 = vst [vmem:[%s2 + $0x3f] sm:$0x1] %v4938
  %v4955 = vcombine.low %v4931, %v4932
  %v4956 = vcombine.low %v4933, %v4934
  %v4957 = vcombine.low %v4935, %v4936
  %v4958 = vcombine.low %v4937, %v4938
  %v4960 = vunpack.c.l.s4 1966171168
  %v4961 = vunpack.c.0.s8 %v4960
  %v4962 = vlaneseq
  %v4963 = vshrl.u32 %v4962, 7
  %v4964 = vsub.s32 %v4961, %v4963
  %v4965 = vrot.slane %v4955, %v4964
  %v4967 = vunpack.c.l.s4 1966171168
  %v4968 = vunpack.c.0.s8 %v4967
  %v4969 = vlaneseq
  %v4970 = vshrl.u32 %v4969, 7
  %v4971 = vsub.s32 %v4968, %v4970
  %v4972 = vrot.slane %v4956, %v4971
  %v4974 = vunpack.c.l.s4 1966171168
  %v4975 = vunpack.c.0.s8 %v4974
  %v4976 = vlaneseq
  %v4977 = vshrl.u32 %v4976, 7
  %v4978 = vsub.s32 %v4975, %v4977
  %v4979 = vrot.slane %v4957, %v4978
  %v4981 = vunpack.c.l.s4 1966171168
  %v4982 = vunpack.c.0.s8 %v4981
  %v4983 = vlaneseq
  %v4984 = vshrl.u32 %v4983, 7
  %v4985 = vsub.s32 %v4982, %v4984
  %v4986 = vrot.slane %v4958, %v4985
  %v4987 = vcombine.low %v4965, %v4972
  %v4988 = vcombine.low %v4979, %v4986
  %v4990 = vunpack.c.l.s4 1966171168
  %v4991 = vunpack.c.0.s8 %v4990
  %v4992 = vlaneseq
  %v4993 = vshrl.u32 %v4992, 7
  %v4994 = vsub.s32 %v4991, %v4993
  %v4995 = vrot.slane %v4987, %v4994
  %v4997 = vunpack.c.l.s4 1966171168
  %v4998 = vunpack.c.0.s8 %v4997
  %v4999 = vlaneseq
  %v5000 = vshrl.u32 %v4999, 7
  %v5001 = vsub.s32 %v4998, %v5000
  %v5002 = vrot.slane %v4988, %v5001
  %v5003 = vcombine.low %v4995, %v5002
  %5005 = vst [vmem:[%s3] sm:$0xff] %v5003
  %v5014 = vcombine.low %v4915, %v4916
  %v5015 = vcombine.low %v4917, %v4918
  %v5016 = vcombine.low %v4919, %v4920
  %v5017 = vcombine.low %v4921, %v4922
  %v5019 = vunpack.c.l.s4 1966171168
  %v5020 = vunpack.c.0.s8 %v5019
  %v5021 = vlaneseq
  %v5022 = vshrl.u32 %v5021, 7
  %v5023 = vsub.s32 %v5020, %v5022
  %v5024 = vrot.slane %v5014, %v5023
  %v5026 = vunpack.c.l.s4 1966171168
  %v5027 = vunpack.c.0.s8 %v5026
  %v5028 = vlaneseq
  %v5029 = vshrl.u32 %v5028, 7
  %v5030 = vsub.s32 %v5027, %v5029
  %v5031 = vrot.slane %v5015, %v5030
  %v5033 = vunpack.c.l.s4 1966171168
  %v5034 = vunpack.c.0.s8 %v5033
  %v5035 = vlaneseq
  %v5036 = vshrl.u32 %v5035, 7
  %v5037 = vsub.s32 %v5034, %v5036
  %v5038 = vrot.slane %v5016, %v5037
  %v5040 = vunpack.c.l.s4 1966171168
  %v5041 = vunpack.c.0.s8 %v5040
  %v5042 = vlaneseq
  %v5043 = vshrl.u32 %v5042, 7
  %v5044 = vsub.s32 %v5041, %v5043
  %v5045 = vrot.slane %v5017, %v5044
  %v5046 = vcombine.low %v5024, %v5031
  %v5047 = vcombine.low %v5038, %v5045
  %v5049 = vunpack.c.l.s4 1966171168
  %v5050 = vunpack.c.0.s8 %v5049
  %v5051 = vlaneseq
  %v5052 = vshrl.u32 %v5051, 7
  %v5053 = vsub.s32 %v5050, %v5052
  %v5054 = vrot.slane %v5046, %v5053
  %v5056 = vunpack.c.l.s4 1966171168
  %v5057 = vunpack.c.0.s8 %v5056
  %v5058 = vlaneseq
  %v5059 = vshrl.u32 %v5058, 7
  %v5060 = vsub.s32 %v5057, %v5059
  %v5061 = vrot.slane %v5047, %v5060
  %v5062 = vcombine.low %v5054, %v5061
  %5064 = vst [vmem:[%s4] sm:$0xff] %v5062
  // Predicated region
  $region10: #{lstm_encoder.3} parent=0 // pred_check
    _
  $region11: #{lstm_encoder.3} parent=0 // pred_check_branch
    %5066 = sbr.rel (0) target = $region13
  $region12: #{lstm_encoder.3} parent=0 // pred_region
    _
  $region13: #{lstm_encoder.3} parent=0 // pred_fallthru
    _
  // Predicated region
  $region14: #{lstm_encoder.3} parent=0 // pred_check
    _
  $region15: #{lstm_encoder.3} parent=0 // pred_check_branch
    %5068 = sbr.rel (0) target = $region17
  $region16: #{lstm_encoder.3} parent=0 // pred_region
    _
  $region17: #{lstm_encoder.3} parent=0 // pred_fallthru
    _
  // Predicated region
  $region18: #{lstm_encoder.3} parent=0 // pred_check
    _
  $region19: #{lstm_encoder.3} parent=0 // pred_check_branch
    %5070 = sbr.rel (0) target = $region21
  $region20: #{lstm_encoder.3} parent=0 // pred_region
    _
  $region21: #{lstm_encoder.3} parent=0 // pred_fallthru
    _
  // Predicated region
  $region22: #{lstm_encoder.3} parent=0 // pred_check
    _
  $region23: #{lstm_encoder.3} parent=0 // pred_check_branch
    %5072 = sbr.rel (0) target = $region25
  $region24: #{lstm_encoder.3} parent=0 // pred_region
    _
  $region25: #{lstm_encoder.3} parent=0 // pred_fallthru
    _
  // Predicated region
  $region26: #{lstm_encoder.3} parent=0 // pred_check
    _
  $region27: #{lstm_encoder.3} parent=0 // pred_check_branch
    %5074 = sbr.rel (0) target = $region29
  $region28: #{lstm_encoder.3} parent=0 // pred_region
    _
  $region29: #{lstm_encoder.3} parent=0 // pred_fallthru
    _
  // Predicated region
  $region30: #{lstm_encoder.3} parent=0 // pred_check
    _
  $region31: #{lstm_encoder.3} parent=0 // pred_check_branch
    %5076 = sbr.rel (0) target = $region33
  $region32: #{lstm_encoder.3} parent=0 // pred_region
    _
  $region33: #{lstm_encoder.3} parent=0 // pred_fallthru
    _

</llo_original>
